<compile_context>
chip_gen: v6e
topology: v6e:2x2x1
jax: 0.10.0
libtpu: 0.0.40
codegen_flags: <defaults>
</compile_context>

<pallas_src>
import jax
import jax.numpy as jnp
from jax.experimental import pallas as pl
from jax.experimental.pallas import tpu as pltpu

C_IN = 640
C1 = 230     # brc1 / brc3 output channels (logical)
C2 = 160     # brc2 output channels (logical)
C1P = 256    # lane-dense padded output channels
C2P = 256    # lane-dense padded hidden channels
EPS = 1e-5


def _round_up(x, m):
    return (x + m - 1) // m * m


def samm_kernel(x_ref,
                s1_ref, b1_ref, s2_ref, b2_ref, s3_ref, b3_ref,
                w1_ref, wb1_ref, w2_ref, wb2_ref, w3_ref, wb3_ref,
                o_ref):
    """One channels-major tile: x is [C_IN, TN] (pixels on the lane axis)."""
    x = x_ref[0]                                                  # [640, TN] f32

    # --- brc2: BN -> ReLU -> 1x1 conv (640 -> 256pad), bf16 MXU / f32 acc ---
    h2 = jnp.maximum(x * s2_ref[...] + b2_ref[...], 0.0).astype(jnp.bfloat16)
    y2 = jnp.dot(w2_ref[...], h2,
                 preferred_element_type=jnp.float32) + wb2_ref[...]   # [256, TN]

    # --- brc3: BN -> ReLU -> 1x1 conv (256pad -> 256pad) ---
    h3 = jnp.maximum(y2 * s3_ref[...] + b3_ref[...], 0.0).astype(jnp.bfloat16)
    y3 = jnp.dot(w3_ref[...], h3,
                 preferred_element_type=jnp.float32) + wb3_ref[...]   # [256, TN]
    gate = jax.nn.sigmoid(y3)

    # --- brc1 last (shortest live range for its [256, TN] result) ---
    h1 = jnp.maximum(x * s1_ref[...] + b1_ref[...], 0.0).astype(jnp.bfloat16)
    y1 = jnp.dot(w1_ref[...], h1,
                 preferred_element_type=jnp.float32) + wb1_ref[...]   # [256, TN]

    o_ref[0] = (gate * y1).astype(o_ref.dtype)


def samm_pallas(x_nchw, kparams, *, tn=512):
    """x_nchw: [B, 640, H, W] f32 -> [B, 230, H, W] f32. No layout transposes."""
    B, C, H, W = x_nchw.shape
    assert C == C_IN
    HW = H * W
    x3d = x_nchw.reshape(B, C_IN, HW)

    # Pixel tile: multiple of 128 lanes, clamped for small inputs.
    tn = max(128, min(_round_up(tn, 128), _round_up(HW, 128)))
    HWp = _round_up(HW, tn)
    if HWp != HW:
        x3d = jnp.pad(x3d, ((0, 0), (0, 0), (0, HWp - HW)))
    n_tiles = HWp // tn

    (s1, b1, s2, b2, s3, b3, w1, wb1, w2, wb2, w3, wb3) = kparams

    def const_spec(shape):
        return pl.BlockSpec(shape, lambda bi, j: (0,) * len(shape))

    n_pix = B * HWp
    flops = 2 * n_pix * (C_IN * C1P + C_IN * C2P + C2P * C1P)
    bytes_accessed = (x3d.size * 4 + B * C1P * HWp * 4
                      + (w1.size + w2.size + w3.size) * 2
                      + (s1.size + b1.size + s2.size + b2.size + s3.size
                         + b3.size + wb1.size + wb2.size + wb3.size) * 4)
    cost = pl.CostEstimate(flops=flops,
                           transcendentals=n_pix * C1P,
                           bytes_accessed=bytes_accessed)

    out = pl.pallas_call(
        samm_kernel,
        out_shape=jax.ShapeDtypeStruct((B, C1P, HWp), jnp.float32),
        grid_spec=pltpu.PrefetchScalarGridSpec(
            num_scalar_prefetch=0,
            grid=(B, n_tiles),
            in_specs=[
                pl.BlockSpec((1, C_IN, tn), lambda bi, j: (bi, 0, j)),  # x tile
                const_spec((C_IN, 1)), const_spec((C_IN, 1)),           # bn1 s/b
                const_spec((C_IN, 1)), const_spec((C_IN, 1)),           # bn2 s/b
                const_spec((C2P, 1)), const_spec((C2P, 1)),             # bn3 s/b
                const_spec((C1P, C_IN)), const_spec((C1P, 1)),          # conv1 W,b
                const_spec((C2P, C_IN)), const_spec((C2P, 1)),          # conv2 W,b
                const_spec((C1P, C2P)), const_spec((C1P, 1)),           # conv3 W,b
            ],
            out_specs=pl.BlockSpec((1, C1P, tn), lambda bi, j: (bi, 0, j)),
        ),
        compiler_params=pltpu.CompilerParams(
            dimension_semantics=("parallel", "parallel"),
            vmem_limit_bytes=64 * 1024 * 1024),
        cost_estimate=cost,
    )(x3d, s1, b1, s2, b2, s3, b3, w1, wb1, w2, wb2, w3, wb3)

    # Drop the zero-padded channels / pixels (no transpose needed).
    return out[:, :C1, :HW].reshape(B, C1, H, W)


def make_params(key):
    """Deterministic synthetic parameters matching samm.__init__ shapes.

    BatchNorm (inference form) folded into per-channel (scale, shift).
    Conv2d 1x1 weights stored PyTorch-style as [out, in].
    """
    keys = jax.random.split(key, 12)

    def bn_fold(kg, kb, km, kv, c):
        gamma = 1.0 + 0.1 * jax.random.normal(kg, (c,), jnp.float32)
        beta = 0.1 * jax.random.normal(kb, (c,), jnp.float32)
        mean = 0.1 * jax.random.normal(km, (c,), jnp.float32)
        var = jnp.abs(1.0 + 0.1 * jax.random.normal(kv, (c,), jnp.float32))
        scale = gamma / jnp.sqrt(var + EPS)
        shift = beta - mean * scale
        return scale, shift

    s1, b1 = bn_fold(keys[0], keys[1], keys[2], keys[3], C_IN)
    s2, b2 = bn_fold(keys[4], keys[5], keys[6], keys[7], C_IN)
    s3, b3 = bn_fold(keys[8], keys[9], keys[10], keys[11], C2)

    wkeys = jax.random.split(jax.random.fold_in(key, 99), 6)

    def conv_1x1(kw, kb, cin, cout):
        w = (jax.random.normal(kw, (cout, cin), jnp.float32)
             / jnp.sqrt(jnp.float32(cin)))
        b = 0.1 * jax.random.normal(kb, (cout,), jnp.float32)
        return w, b

    w1, wb1 = conv_1x1(wkeys[0], wkeys[1], C_IN, C1)
    w2, wb2 = conv_1x1(wkeys[2], wkeys[3], C_IN, C2)
    w3, wb3 = conv_1x1(wkeys[4], wkeys[5], C2, C1)

    return (s1, b1, s2, b2, s3, b3, w1, wb1, w2, wb2, w3, wb3)


def prepare_kernel_params(params):
    """Pad channels to 256, reshape BN/bias to [C,1] columns, cast W to bf16."""
    (s1, b1, s2, b2, s3, b3, w1, wb1, w2, wb2, w3, wb3) = params

    def col(v, cpad):
        return jnp.pad(v, (0, cpad - v.shape[0])).reshape(cpad, 1).astype(jnp.float32)

    def padw(w, rpad, cpad):
        r, c = w.shape
        return jnp.pad(w, ((0, rpad - r), (0, cpad - c))).astype(jnp.bfloat16)

    return (
        col(s1, C_IN), col(b1, C_IN),
        col(s2, C_IN), col(b2, C_IN),
        col(s3, C2P), col(b3, C2P),
        padw(w1, C1P, C_IN), col(wb1, C1P),
        padw(w2, C2P, C_IN), col(wb2, C2P),
        padw(w3, C1P, C2P), col(wb3, C1P),
    )


def samm_ref(x_nchw, params):
    """Pure-JAX f32 reference (same math, NCHW in/out, unpadded params)."""
    (s1, b1, s2, b2, s3, b3, w1, wb1, w2, wb2, w3, wb3) = params
    B, C, H, W = x_nchw.shape
    x = x_nchw.reshape(B, C, H * W)

    def brc(h, s, sh, w, wb):
        h = jnp.maximum(h * s[None, :, None] + sh[None, :, None], 0.0)
        return jnp.einsum('oc,bcn->bon', w, h) + wb[None, :, None]

    y1 = brc(x, s1, b1, w1, wb1)
    y2 = brc(x, s2, b2, w2, wb2)
    y3 = brc(y2, s3, b3, w3, wb3)
    out = jax.nn.sigmoid(y3) * y1
    return out.reshape(B, C1, H, W)


if __name__ == "__main__":
    key = jax.random.PRNGKey(0)
    kx, kp = jax.random.split(key)

    # Small but consistent with the module: 640 input channels are fixed.
    B, H, W = 2, 8, 8
    x = jax.random.normal(kx, (B, C_IN, H, W), jnp.float32)

    params = make_params(kp)
    kparams = prepare_kernel_params(params)

    out = jax.block_until_ready(samm_pallas(x, kparams))
    ref = jax.block_until_ready(samm_ref(x, params))

    assert out.shape == (B, C1, H, W), out.shape
    err = float(jnp.max(jnp.abs(out - ref)))
    # bf16 matmul inputs with f32 accumulation over K<=640: ~1e-2 error budget.
    assert err < 5e-2, err

    print("KERNEL_OK")
</pallas_src>

<mosaic_0001>
module attributes {stable_mosaic.version = 11 : i64} {
  func.func @samm_kernel(%arg0: i32, %arg1: i32, %arg2: memref<1x640x128xf32, #tpu.memory_space<vmem>>, %arg3: memref<640x1xf32, #tpu.memory_space<vmem>>, %arg4: memref<640x1xf32, #tpu.memory_space<vmem>>, %arg5: memref<640x1xf32, #tpu.memory_space<vmem>>, %arg6: memref<640x1xf32, #tpu.memory_space<vmem>>, %arg7: memref<256x1xf32, #tpu.memory_space<vmem>>, %arg8: memref<256x1xf32, #tpu.memory_space<vmem>>, %arg9: memref<256x640xbf16, #tpu.memory_space<vmem>>, %arg10: memref<256x1xf32, #tpu.memory_space<vmem>>, %arg11: memref<256x640xbf16, #tpu.memory_space<vmem>>, %arg12: memref<256x1xf32, #tpu.memory_space<vmem>>, %arg13: memref<256x256xbf16, #tpu.memory_space<vmem>>, %arg14: memref<256x1xf32, #tpu.memory_space<vmem>>, %arg15: memref<1x256x128xf32, #tpu.memory_space<vmem>>) attributes {dimension_semantics = [#tpu.dimension_semantics<parallel>, #tpu.dimension_semantics<parallel>], iteration_bounds = array<i64: 2, 1>, scalar_prefetch = 0 : i64, scratch_operands = 0 : i64, tpu.core_type = #tpu.core_type<tc>, window_params = [{transform_indices = @transform_0, window_bounds = array<i64: 1, 640, 128>}, {pipeline_mode = #tpu.pipeline_mode<synchronous>, transform_indices = @transform_1, window_bounds = array<i64: 640, 1>}, {pipeline_mode = #tpu.pipeline_mode<synchronous>, transform_indices = @transform_2, window_bounds = array<i64: 640, 1>}, {pipeline_mode = #tpu.pipeline_mode<synchronous>, transform_indices = @transform_3, window_bounds = array<i64: 640, 1>}, {pipeline_mode = #tpu.pipeline_mode<synchronous>, transform_indices = @transform_4, window_bounds = array<i64: 640, 1>}, {pipeline_mode = #tpu.pipeline_mode<synchronous>, transform_indices = @transform_5, window_bounds = array<i64: 256, 1>}, {pipeline_mode = #tpu.pipeline_mode<synchronous>, transform_indices = @transform_6, window_bounds = array<i64: 256, 1>}, {pipeline_mode = #tpu.pipeline_mode<synchronous>, transform_indices = @transform_7, window_bounds = array<i64: 256, 640>}, {pipeline_mode = #tpu.pipeline_mode<synchronous>, transform_indices = @transform_8, window_bounds = array<i64: 256, 1>}, {pipeline_mode = #tpu.pipeline_mode<synchronous>, transform_indices = @transform_9, window_bounds = array<i64: 256, 640>}, {pipeline_mode = #tpu.pipeline_mode<synchronous>, transform_indices = @transform_10, window_bounds = array<i64: 256, 1>}, {pipeline_mode = #tpu.pipeline_mode<synchronous>, transform_indices = @transform_11, window_bounds = array<i64: 256, 256>}, {pipeline_mode = #tpu.pipeline_mode<synchronous>, transform_indices = @transform_12, window_bounds = array<i64: 256, 1>}, {transform_indices = @transform_13, window_bounds = array<i64: 1, 256, 128>}]} {
    %c0 = arith.constant 0 : index
    %c0_0 = arith.constant 0 : index
    %c0_1 = arith.constant 0 : index
    %0 = vector.load %arg2[%c0, %c0_0, %c0_1] : memref<1x640x128xf32, #tpu.memory_space<vmem>>, vector<1x640x128xf32>
    %1 = vector.shape_cast %0 : vector<1x640x128xf32> to vector<640x128xf32>
    %c0_2 = arith.constant 0 : index
    %c0_3 = arith.constant 0 : index
    %2 = vector.load %arg5[%c0_2, %c0_3] : memref<640x1xf32, #tpu.memory_space<vmem>>, vector<640x1xf32>
    %3 = vector.broadcast %2 : vector<640x1xf32> to vector<640x128xf32>
    %4 = arith.mulf %1, %3 : vector<640x128xf32>
    %c0_4 = arith.constant 0 : index
    %c0_5 = arith.constant 0 : index
    %5 = vector.load %arg6[%c0_4, %c0_5] : memref<640x1xf32, #tpu.memory_space<vmem>>, vector<640x1xf32>
    %6 = vector.broadcast %5 : vector<640x1xf32> to vector<640x128xf32>
    %7 = arith.addf %4, %6 : vector<640x128xf32>
    %cst = arith.constant 0.000000e+00 : f32
    %8 = vector.broadcast %cst : f32 to vector<640x128xf32>
    %9 = arith.maximumf %7, %8 : vector<640x128xf32>
    %10 = arith.truncf %9 : vector<640x128xf32> to vector<640x128xbf16>
    %c0_6 = arith.constant 0 : index
    %c0_7 = arith.constant 0 : index
    %11 = vector.load %arg11[%c0_6, %c0_7] : memref<256x640xbf16, #tpu.memory_space<vmem>>, vector<256x640xbf16>
    %cst_8 = arith.constant dense<0.000000e+00> : vector<256x128xf32>
    %12 = tpu.matmul %11, %10, %cst_8 {dimension_numbers = #tpu.dot_dimension_numbers<[1], [0], [0], [1], [0, 0, 1, 1], [], []>} : vector<256x640xbf16>, vector<640x128xbf16>, vector<256x128xf32> -> vector<256x128xf32>
    %c0_9 = arith.constant 0 : index
    %c0_10 = arith.constant 0 : index
    %13 = vector.load %arg12[%c0_9, %c0_10] : memref<256x1xf32, #tpu.memory_space<vmem>>, vector<256x1xf32>
    %14 = vector.broadcast %13 : vector<256x1xf32> to vector<256x128xf32>
    %15 = arith.addf %12, %14 : vector<256x128xf32>
    %c0_11 = arith.constant 0 : index
    %c0_12 = arith.constant 0 : index
    %16 = vector.load %arg7[%c0_11, %c0_12] : memref<256x1xf32, #tpu.memory_space<vmem>>, vector<256x1xf32>
    %17 = vector.broadcast %16 : vector<256x1xf32> to vector<256x128xf32>
    %18 = arith.mulf %15, %17 : vector<256x128xf32>
    %c0_13 = arith.constant 0 : index
    %c0_14 = arith.constant 0 : index
    %19 = vector.load %arg8[%c0_13, %c0_14] : memref<256x1xf32, #tpu.memory_space<vmem>>, vector<256x1xf32>
    %20 = vector.broadcast %19 : vector<256x1xf32> to vector<256x128xf32>
    %21 = arith.addf %18, %20 : vector<256x128xf32>
    %cst_15 = arith.constant 0.000000e+00 : f32
    %22 = vector.broadcast %cst_15 : f32 to vector<256x128xf32>
    %23 = arith.maximumf %21, %22 : vector<256x128xf32>
    %24 = arith.truncf %23 : vector<256x128xf32> to vector<256x128xbf16>
    %c0_16 = arith.constant 0 : index
    %c0_17 = arith.constant 0 : index
    %25 = vector.load %arg13[%c0_16, %c0_17] : memref<256x256xbf16, #tpu.memory_space<vmem>>, vector<256x256xbf16>
    %cst_18 = arith.constant dense<0.000000e+00> : vector<256x128xf32>
    %26 = tpu.matmul %25, %24, %cst_18 {dimension_numbers = #tpu.dot_dimension_numbers<[1], [0], [0], [1], [0, 0, 1, 1], [], []>} : vector<256x256xbf16>, vector<256x128xbf16>, vector<256x128xf32> -> vector<256x128xf32>
    %c0_19 = arith.constant 0 : index
    %c0_20 = arith.constant 0 : index
    %27 = vector.load %arg14[%c0_19, %c0_20] : memref<256x1xf32, #tpu.memory_space<vmem>>, vector<256x1xf32>
    %28 = vector.broadcast %27 : vector<256x1xf32> to vector<256x128xf32>
    %29 = arith.addf %26, %28 : vector<256x128xf32>
    %30 = arith.negf %29 : vector<256x128xf32>
    %31 = math.exp %30 : vector<256x128xf32>
    %cst_21 = arith.constant 1.000000e+00 : f32
    %32 = vector.broadcast %cst_21 : f32 to vector<256x128xf32>
    %33 = arith.addf %32, %31 : vector<256x128xf32>
    %34 = arith.divf %32, %33 : vector<256x128xf32>
    %c0_22 = arith.constant 0 : index
    %c0_23 = arith.constant 0 : index
    %35 = vector.load %arg3[%c0_22, %c0_23] : memref<640x1xf32, #tpu.memory_space<vmem>>, vector<640x1xf32>
    %36 = vector.broadcast %35 : vector<640x1xf32> to vector<640x128xf32>
    %37 = arith.mulf %1, %36 : vector<640x128xf32>
    %c0_24 = arith.constant 0 : index
    %c0_25 = arith.constant 0 : index
    %38 = vector.load %arg4[%c0_24, %c0_25] : memref<640x1xf32, #tpu.memory_space<vmem>>, vector<640x1xf32>
    %39 = vector.broadcast %38 : vector<640x1xf32> to vector<640x128xf32>
    %40 = arith.addf %37, %39 : vector<640x128xf32>
    %cst_26 = arith.constant 0.000000e+00 : f32
    %41 = vector.broadcast %cst_26 : f32 to vector<640x128xf32>
    %42 = arith.maximumf %40, %41 : vector<640x128xf32>
    %43 = arith.truncf %42 : vector<640x128xf32> to vector<640x128xbf16>
    %c0_27 = arith.constant 0 : index
    %c0_28 = arith.constant 0 : index
    %44 = vector.load %arg9[%c0_27, %c0_28] : memref<256x640xbf16, #tpu.memory_space<vmem>>, vector<256x640xbf16>
    %cst_29 = arith.constant dense<0.000000e+00> : vector<256x128xf32>
    %45 = tpu.matmul %44, %43, %cst_29 {dimension_numbers = #tpu.dot_dimension_numbers<[1], [0], [0], [1], [0, 0, 1, 1], [], []>} : vector<256x640xbf16>, vector<640x128xbf16>, vector<256x128xf32> -> vector<256x128xf32>
    %c0_30 = arith.constant 0 : index
    %c0_31 = arith.constant 0 : index
    %46 = vector.load %arg10[%c0_30, %c0_31] : memref<256x1xf32, #tpu.memory_space<vmem>>, vector<256x1xf32>
    %47 = vector.broadcast %46 : vector<256x1xf32> to vector<256x128xf32>
    %48 = arith.addf %45, %47 : vector<256x128xf32>
    %49 = arith.mulf %34, %48 : vector<256x128xf32>
    %c0_32 = arith.constant 0 : index
    %c0_33 = arith.constant 0 : index
    %c0_34 = arith.constant 0 : index
    %50 = vector.load %arg15[%c0_32, %c0_33, %c0_34] : memref<1x256x128xf32, #tpu.memory_space<vmem>>, vector<1x256x128xf32>
    %51 = vector.shape_cast %50 : vector<1x256x128xf32> to vector<256x128xf32>
    %52 = vector.shape_cast %49 : vector<256x128xf32> to vector<1x256x128xf32>
    tpu.vector_store %arg15[%c0_32, %c0_33, %c0_34], %52 {strides = array<i32>} : memref<1x256x128xf32, #tpu.memory_space<vmem>>, vector<1x256x128xf32>,
    return
  }
  func.func @transform_0(%arg0: i32, %arg1: i32) -> (i32, i32, i32) {
    %c0_i32 = arith.constant 0 : i32
    %c0_i32_0 = arith.constant 0 : i32
    return %arg0, %c0_i32, %arg1 : i32, i32, i32
  }
  func.func @transform_1(%arg0: i32, %arg1: i32) -> (i32, i32) {
    %c0_i32 = arith.constant 0 : i32
    %c0_i32_0 = arith.constant 0 : i32
    %c0_i32_1 = arith.constant 0 : i32
    return %c0_i32, %c0_i32_0 : i32, i32
  }
  func.func @transform_2(%arg0: i32, %arg1: i32) -> (i32, i32) {
    %c0_i32 = arith.constant 0 : i32
    %c0_i32_0 = arith.constant 0 : i32
    %c0_i32_1 = arith.constant 0 : i32
    return %c0_i32, %c0_i32_0 : i32, i32
  }
  func.func @transform_3(%arg0: i32, %arg1: i32) -> (i32, i32) {
    %c0_i32 = arith.constant 0 : i32
    %c0_i32_0 = arith.constant 0 : i32
    %c0_i32_1 = arith.constant 0 : i32
    return %c0_i32, %c0_i32_0 : i32, i32
  }
  func.func @transform_4(%arg0: i32, %arg1: i32) -> (i32, i32) {
    %c0_i32 = arith.constant 0 : i32
    %c0_i32_0 = arith.constant 0 : i32
    %c0_i32_1 = arith.constant 0 : i32
    return %c0_i32, %c0_i32_0 : i32, i32
  }
  func.func @transform_5(%arg0: i32, %arg1: i32) -> (i32, i32) {
    %c0_i32 = arith.constant 0 : i32
    %c0_i32_0 = arith.constant 0 : i32
    %c0_i32_1 = arith.constant 0 : i32
    return %c0_i32, %c0_i32_0 : i32, i32
  }
  func.func @transform_6(%arg0: i32, %arg1: i32) -> (i32, i32) {
    %c0_i32 = arith.constant 0 : i32
    %c0_i32_0 = arith.constant 0 : i32
    %c0_i32_1 = arith.constant 0 : i32
    return %c0_i32, %c0_i32_0 : i32, i32
  }
  func.func @transform_7(%arg0: i32, %arg1: i32) -> (i32, i32) {
    %c0_i32 = arith.constant 0 : i32
    %c0_i32_0 = arith.constant 0 : i32
    %c0_i32_1 = arith.constant 0 : i32
    return %c0_i32, %c0_i32_0 : i32, i32
  }
  func.func @transform_8(%arg0: i32, %arg1: i32) -> (i32, i32) {
    %c0_i32 = arith.constant 0 : i32
    %c0_i32_0 = arith.constant 0 : i32
    %c0_i32_1 = arith.constant 0 : i32
    return %c0_i32, %c0_i32_0 : i32, i32
  }
  func.func @transform_9(%arg0: i32, %arg1: i32) -> (i32, i32) {
    %c0_i32 = arith.constant 0 : i32
    %c0_i32_0 = arith.constant 0 : i32
    %c0_i32_1 = arith.constant 0 : i32
    return %c0_i32, %c0_i32_0 : i32, i32
  }
  func.func @transform_10(%arg0: i32, %arg1: i32) -> (i32, i32) {
    %c0_i32 = arith.constant 0 : i32
    %c0_i32_0 = arith.constant 0 : i32
    %c0_i32_1 = arith.constant 0 : i32
    return %c0_i32, %c0_i32_0 : i32, i32
  }
  func.func @transform_11(%arg0: i32, %arg1: i32) -> (i32, i32) {
    %c0_i32 = arith.constant 0 : i32
    %c0_i32_0 = arith.constant 0 : i32
    %c0_i32_1 = arith.constant 0 : i32
    return %c0_i32, %c0_i32_0 : i32, i32
  }
  func.func @transform_12(%arg0: i32, %arg1: i32) -> (i32, i32) {
    %c0_i32 = arith.constant 0 : i32
    %c0_i32_0 = arith.constant 0 : i32
    %c0_i32_1 = arith.constant 0 : i32
    return %c0_i32, %c0_i32_0 : i32, i32
  }
  func.func @transform_13(%arg0: i32, %arg1: i32) -> (i32, i32, i32) {
    %c0_i32 = arith.constant 0 : i32
    %c0_i32_0 = arith.constant 0 : i32
    return %arg0, %c0_i32, %arg1 : i32, i32, i32
  }
}

</mosaic_0001>

<llo_original>
// kernel: tpu_custom_call.1
$region0: #{tpu_custom_call.1}
  #allocation0 [shape = 'u32[]', space=smem, size = 0x4, offset = 0x4, fixed_abs, tag = 'smem constant byte address 0x4 - core index']
  #allocation1 [shape = 'u32[144,128]{1,0:T(1,128)}', space=vmem, size = 0x12000, scoped, tag = 'internal scratch']
  %s0 = inlined_call_operand.vmem [shape: f32[2,640,128], index: 0, kind: input, shape index: {}]
  %s1 = inlined_call_operand.vmem [shape: f32[640,1], index: 1, kind: input, shape index: {}]
  %s2 = inlined_call_operand.vmem [shape: f32[640,1], index: 2, kind: input, shape index: {}]
  %s3 = inlined_call_operand.vmem [shape: f32[640,1], index: 3, kind: input, shape index: {}]
  %s4 = inlined_call_operand.vmem [shape: f32[640,1], index: 4, kind: input, shape index: {}]
  %s5 = inlined_call_operand.vmem [shape: f32[256,1], index: 5, kind: input, shape index: {}]
  %s6 = inlined_call_operand.vmem [shape: f32[256,1], index: 6, kind: input, shape index: {}]
  %s7 = inlined_call_operand.vmem [shape: bf16[256,640], index: 7, kind: input, shape index: {}]
  %s8 = inlined_call_operand.vmem [shape: f32[256,1], index: 8, kind: input, shape index: {}]
  %s9 = inlined_call_operand.vmem [shape: bf16[256,640], index: 9, kind: input, shape index: {}]
  %s10 = inlined_call_operand.vmem [shape: f32[256,1], index: 10, kind: input, shape index: {}]
  %s11 = inlined_call_operand.vmem [shape: bf16[256,256], index: 11, kind: input, shape index: {}]
  %s12 = inlined_call_operand.vmem [shape: f32[256,1], index: 12, kind: input, shape index: {}]
  %s13 = inlined_call_operand.hbm [shape: f32[2,256,128], index: 13, kind: output, shape index: {}]
  %s14 = sld [smem:[#allocation0]]
  $region85: #{tpu_custom_call.1} parent=0
    _
  %s16 = ssub.s32 1, %s14
  %s17 = scalar_select 0, %s16, %s14
  $region1: #{tpu_custom_call.1} parent=0
    #allocation2 [shape = 'u8[262144]{0}', space=vmem, size = 0x40000, scoped, tag = 'output window, operand 0']
    #allocation3 [shape = 's32[2]{0}', space=sflag, size = 0x8, scoped, tag = 'scoped memory for tpu_custom_call.1']
    %18 = vsyncpa [#allocation3], 0
    %s19 = scalar_lea.sflag [#allocation3], 1
    %20 = vsyncpa %s19, 0
    loop: start=0, step=1, limit=4
    $region2: #{tpu_custom_call.1} parent=1 // loop_pre_header
      _
    $region3: #{tpu_custom_call.1} parent=1 // loop_header
      %s22 = sphi 0, %s26
      %p23 = scmp.ge.s32.totalorder %s22, 4
      %s29 = sphi 0, %s41
      %s30 = sphi 0, %s37
      %s31 = sphi 0, %s29
      %s32 = sphi 0, %s30
      %s33 = sphi 0, %s31
      %s34 = sphi 0, %s32
      %s46 = sphi 0, %s48
      %s49 = sphi 0, %s46
      %s50 = sphi 0, %s49
      %s66 = sphi 0, %s50
      %s70 = sphi 0, %s70
      %s72 = sphi 0, %s70
      %s73 = sphi 0, %s72
      %s87 = sphi 0, %s73
      %s91 = sphi 0, %s91
      %s93 = sphi 0, %s91
      %s94 = sphi 0, %s93
      %s108 = sphi 0, %s94
      %s112 = sphi 0, %s112
      %s114 = sphi 0, %s112
      %s115 = sphi 0, %s114
      %s129 = sphi 0, %s115
      %s133 = sphi 0, %s133
      %s135 = sphi 0, %s133
      %s136 = sphi 0, %s135
      %s150 = sphi 0, %s136
      %s154 = sphi 0, %s154
      %s156 = sphi 0, %s154
      %s157 = sphi 0, %s156
      %s171 = sphi 0, %s157
      %s175 = sphi 0, %s175
      %s177 = sphi 0, %s175
      %s178 = sphi 0, %s177
      %s192 = sphi 0, %s178
      %s196 = sphi 0, %s196
      %s198 = sphi 0, %s196
      %s199 = sphi 0, %s198
      %s213 = sphi 0, %s199
      %s217 = sphi 0, %s217
      %s219 = sphi 0, %s217
      %s220 = sphi 0, %s219
      %s234 = sphi 0, %s220
      %s238 = sphi 0, %s238
      %s240 = sphi 0, %s238
      %s241 = sphi 0, %s240
      %s255 = sphi 0, %s241
      %s259 = sphi 0, %s259
      %s261 = sphi 0, %s259
      %s262 = sphi 0, %s261
      %s276 = sphi 0, %s262
      %s280 = sphi 0, %s280
      %s282 = sphi 0, %s280
      %s283 = sphi 0, %s282
      %s297 = sphi 0, %s283
      %s301 = sphi 0, %s301
      %s303 = sphi 0, %s301
      %s304 = sphi 0, %s303
      %s318 = sphi 0, %s304
      %s326 = sphi 0, %s328
      %s329 = sphi 0, %s326
      %s330 = sphi 0, %s329
      %s346 = sphi 0, %s330
    $region4: #{tpu_custom_call.1} parent=1 // loop_header_branch
      %25 = sbr.rel (%p23) target = $region8
    $region5: #{tpu_custom_call.1} parent=1 // loop_body
      %s27 = ssub.s32 %s22, 1
      %s28 = ssub.s32 %s22, 2
      %s35 = sadd.s32 1, %s30
      %p36 = scmp.ge.s32.totalorder %s35, 1
      %s37 = scalar_select %p36, 0, %s35
      %s38 = sadd.s32 1, %s29
      %s39 = scalar_select %p36, %s38, %s29
      %p40 = scmp.ge.s32.totalorder %s39, 2
      %s41 = scalar_select %p40, 0, %s39
      %s42 = ssub.s32 %s29, %s41
      %s43 = ssub.s32 %s30, %s37
      %s44 = sor.u32 %s42, %s43
      %p45 = scmp.eq.s32.totalorder %s44, 0
      %s47 = sadd.s32 %s46, 1
      %s48 = scalar_select %p45, %s46, %s47
      %p51 = pneg %p45
      %p52 = scmp.eq.s32.totalorder %s22, 1
      %p53 = por %p51, %p52
      %p54 = scmp.ne.s32.totalorder %s46, %s49
      %p55 = scmp.eq.s32.totalorder %s22, 0
      %p56 = por %p54, %p55
      %p57 = scmp.ne.s32.totalorder %s46, %s49
      %p58 = scmp.eq.s32.totalorder %s27, 1
      %p59 = por %p57, %p58
      %p60 = scmp.ne.s32.totalorder %s49, %s50
      %p61 = scmp.eq.s32.totalorder %s27, 0
      %p62 = por %p60, %p61
      %p63 = scmp.ne.s32.totalorder %s49, %s50
      %p64 = scmp.eq.s32.totalorder %s28, 1
      %p65 = por %p63, %p64
      %p67 = scmp.ne.s32.totalorder %s50, %s66
      %p68 = scmp.eq.s32.totalorder %s28, 0
      %p69 = por %p67, %p68
      %s71 = sadd.s32 %s70, 1
      %p74 = scmp.eq.s32.totalorder %s22, 1
      %p75 = scmp.ne.s32.totalorder %s70, %s72
      %p76 = scmp.eq.s32.totalorder %s22, 0
      %p77 = por %p75, %p76
      %p78 = scmp.ne.s32.totalorder %s70, %s72
      %p79 = scmp.eq.s32.totalorder %s27, 1
      %p80 = por %p78, %p79
      %p81 = scmp.ne.s32.totalorder %s72, %s73
      %p82 = scmp.eq.s32.totalorder %s27, 0
      %p83 = por %p81, %p82
      %p84 = scmp.ne.s32.totalorder %s72, %s73
      %p85 = scmp.eq.s32.totalorder %s28, 1
      %p86 = por %p84, %p85
      %p88 = scmp.ne.s32.totalorder %s73, %s87
      %p89 = scmp.eq.s32.totalorder %s28, 0
      %p90 = por %p88, %p89
      %s92 = sadd.s32 %s91, 1
      %p95 = scmp.eq.s32.totalorder %s22, 1
      %p96 = scmp.ne.s32.totalorder %s91, %s93
      %p97 = scmp.eq.s32.totalorder %s22, 0
      %p98 = por %p96, %p97
      %p99 = scmp.ne.s32.totalorder %s91, %s93
      %p100 = scmp.eq.s32.totalorder %s27, 1
      %p101 = por %p99, %p100
      %p102 = scmp.ne.s32.totalorder %s93, %s94
      %p103 = scmp.eq.s32.totalorder %s27, 0
      %p104 = por %p102, %p103
      %p105 = scmp.ne.s32.totalorder %s93, %s94
      %p106 = scmp.eq.s32.totalorder %s28, 1
      %p107 = por %p105, %p106
      %p109 = scmp.ne.s32.totalorder %s94, %s108
      %p110 = scmp.eq.s32.totalorder %s28, 0
      %p111 = por %p109, %p110
      %s113 = sadd.s32 %s112, 1
      %p116 = scmp.eq.s32.totalorder %s22, 1
      %p117 = scmp.ne.s32.totalorder %s112, %s114
      %p118 = scmp.eq.s32.totalorder %s22, 0
      %p119 = por %p117, %p118
      %p120 = scmp.ne.s32.totalorder %s112, %s114
      %p121 = scmp.eq.s32.totalorder %s27, 1
      %p122 = por %p120, %p121
      %p123 = scmp.ne.s32.totalorder %s114, %s115
      %p124 = scmp.eq.s32.totalorder %s27, 0
      %p125 = por %p123, %p124
      %p126 = scmp.ne.s32.totalorder %s114, %s115
      %p127 = scmp.eq.s32.totalorder %s28, 1
      %p128 = por %p126, %p127
      %p130 = scmp.ne.s32.totalorder %s115, %s129
      %p131 = scmp.eq.s32.totalorder %s28, 0
      %p132 = por %p130, %p131
      %s134 = sadd.s32 %s133, 1
      %p137 = scmp.eq.s32.totalorder %s22, 1
      %p138 = scmp.ne.s32.totalorder %s133, %s135
      %p139 = scmp.eq.s32.totalorder %s22, 0
      %p140 = por %p138, %p139
      %p141 = scmp.ne.s32.totalorder %s133, %s135
      %p142 = scmp.eq.s32.totalorder %s27, 1
      %p143 = por %p141, %p142
      %p144 = scmp.ne.s32.totalorder %s135, %s136
      %p145 = scmp.eq.s32.totalorder %s27, 0
      %p146 = por %p144, %p145
      %p147 = scmp.ne.s32.totalorder %s135, %s136
      %p148 = scmp.eq.s32.totalorder %s28, 1
      %p149 = por %p147, %p148
      %p151 = scmp.ne.s32.totalorder %s136, %s150
      %p152 = scmp.eq.s32.totalorder %s28, 0
      %p153 = por %p151, %p152
      %s155 = sadd.s32 %s154, 1
      %p158 = scmp.eq.s32.totalorder %s22, 1
      %p159 = scmp.ne.s32.totalorder %s154, %s156
      %p160 = scmp.eq.s32.totalorder %s22, 0
      %p161 = por %p159, %p160
      %p162 = scmp.ne.s32.totalorder %s154, %s156
      %p163 = scmp.eq.s32.totalorder %s27, 1
      %p164 = por %p162, %p163
      %p165 = scmp.ne.s32.totalorder %s156, %s157
      %p166 = scmp.eq.s32.totalorder %s27, 0
      %p167 = por %p165, %p166
      %p168 = scmp.ne.s32.totalorder %s156, %s157
      %p169 = scmp.eq.s32.totalorder %s28, 1
      %p170 = por %p168, %p169
      %p172 = scmp.ne.s32.totalorder %s157, %s171
      %p173 = scmp.eq.s32.totalorder %s28, 0
      %p174 = por %p172, %p173
      %s176 = sadd.s32 %s175, 1
      %p179 = scmp.eq.s32.totalorder %s22, 1
      %p180 = scmp.ne.s32.totalorder %s175, %s177
      %p181 = scmp.eq.s32.totalorder %s22, 0
      %p182 = por %p180, %p181
      %p183 = scmp.ne.s32.totalorder %s175, %s177
      %p184 = scmp.eq.s32.totalorder %s27, 1
      %p185 = por %p183, %p184
      %p186 = scmp.ne.s32.totalorder %s177, %s178
      %p187 = scmp.eq.s32.totalorder %s27, 0
      %p188 = por %p186, %p187
      %p189 = scmp.ne.s32.totalorder %s177, %s178
      %p190 = scmp.eq.s32.totalorder %s28, 1
      %p191 = por %p189, %p190
      %p193 = scmp.ne.s32.totalorder %s178, %s192
      %p194 = scmp.eq.s32.totalorder %s28, 0
      %p195 = por %p193, %p194
      %s197 = sadd.s32 %s196, 1
      %p200 = scmp.eq.s32.totalorder %s22, 1
      %p201 = scmp.ne.s32.totalorder %s196, %s198
      %p202 = scmp.eq.s32.totalorder %s22, 0
      %p203 = por %p201, %p202
      %p204 = scmp.ne.s32.totalorder %s196, %s198
      %p205 = scmp.eq.s32.totalorder %s27, 1
      %p206 = por %p204, %p205
      %p207 = scmp.ne.s32.totalorder %s198, %s199
      %p208 = scmp.eq.s32.totalorder %s27, 0
      %p209 = por %p207, %p208
      %p210 = scmp.ne.s32.totalorder %s198, %s199
      %p211 = scmp.eq.s32.totalorder %s28, 1
      %p212 = por %p210, %p211
      %p214 = scmp.ne.s32.totalorder %s199, %s213
      %p215 = scmp.eq.s32.totalorder %s28, 0
      %p216 = por %p214, %p215
      %s218 = sadd.s32 %s217, 1
      %p221 = scmp.eq.s32.totalorder %s22, 1
      %p222 = scmp.ne.s32.totalorder %s217, %s219
      %p223 = scmp.eq.s32.totalorder %s22, 0
      %p224 = por %p222, %p223
      %p225 = scmp.ne.s32.totalorder %s217, %s219
      %p226 = scmp.eq.s32.totalorder %s27, 1
      %p227 = por %p225, %p226
      %p228 = scmp.ne.s32.totalorder %s219, %s220
      %p229 = scmp.eq.s32.totalorder %s27, 0
      %p230 = por %p228, %p229
      %p231 = scmp.ne.s32.totalorder %s219, %s220
      %p232 = scmp.eq.s32.totalorder %s28, 1
      %p233 = por %p231, %p232
      %p235 = scmp.ne.s32.totalorder %s220, %s234
      %p236 = scmp.eq.s32.totalorder %s28, 0
      %p237 = por %p235, %p236
      %s239 = sadd.s32 %s238, 1
      %p242 = scmp.eq.s32.totalorder %s22, 1
      %p243 = scmp.ne.s32.totalorder %s238, %s240
      %p244 = scmp.eq.s32.totalorder %s22, 0
      %p245 = por %p243, %p244
      %p246 = scmp.ne.s32.totalorder %s238, %s240
      %p247 = scmp.eq.s32.totalorder %s27, 1
      %p248 = por %p246, %p247
      %p249 = scmp.ne.s32.totalorder %s240, %s241
      %p250 = scmp.eq.s32.totalorder %s27, 0
      %p251 = por %p249, %p250
      %p252 = scmp.ne.s32.totalorder %s240, %s241
      %p253 = scmp.eq.s32.totalorder %s28, 1
      %p254 = por %p252, %p253
      %p256 = scmp.ne.s32.totalorder %s241, %s255
      %p257 = scmp.eq.s32.totalorder %s28, 0
      %p258 = por %p256, %p257
      %s260 = sadd.s32 %s259, 1
      %p263 = scmp.eq.s32.totalorder %s22, 1
      %p264 = scmp.ne.s32.totalorder %s259, %s261
      %p265 = scmp.eq.s32.totalorder %s22, 0
      %p266 = por %p264, %p265
      %p267 = scmp.ne.s32.totalorder %s259, %s261
      %p268 = scmp.eq.s32.totalorder %s27, 1
      %p269 = por %p267, %p268
      %p270 = scmp.ne.s32.totalorder %s261, %s262
      %p271 = scmp.eq.s32.totalorder %s27, 0
      %p272 = por %p270, %p271
      %p273 = scmp.ne.s32.totalorder %s261, %s262
      %p274 = scmp.eq.s32.totalorder %s28, 1
      %p275 = por %p273, %p274
      %p277 = scmp.ne.s32.totalorder %s262, %s276
      %p278 = scmp.eq.s32.totalorder %s28, 0
      %p279 = por %p277, %p278
      %s281 = sadd.s32 %s280, 1
      %p284 = scmp.eq.s32.totalorder %s22, 1
      %p285 = scmp.ne.s32.totalorder %s280, %s282
      %p286 = scmp.eq.s32.totalorder %s22, 0
      %p287 = por %p285, %p286
      %p288 = scmp.ne.s32.totalorder %s280, %s282
      %p289 = scmp.eq.s32.totalorder %s27, 1
      %p290 = por %p288, %p289
      %p291 = scmp.ne.s32.totalorder %s282, %s283
      %p292 = scmp.eq.s32.totalorder %s27, 0
      %p293 = por %p291, %p292
      %p294 = scmp.ne.s32.totalorder %s282, %s283
      %p295 = scmp.eq.s32.totalorder %s28, 1
      %p296 = por %p294, %p295
      %p298 = scmp.ne.s32.totalorder %s283, %s297
      %p299 = scmp.eq.s32.totalorder %s28, 0
      %p300 = por %p298, %p299
      %s302 = sadd.s32 %s301, 1
      %p305 = scmp.eq.s32.totalorder %s22, 1
      %p306 = scmp.ne.s32.totalorder %s301, %s303
      %p307 = scmp.eq.s32.totalorder %s22, 0
      %p308 = por %p306, %p307
      %p309 = scmp.ne.s32.totalorder %s301, %s303
      %p310 = scmp.eq.s32.totalorder %s27, 1
      %p311 = por %p309, %p310
      %p312 = scmp.ne.s32.totalorder %s303, %s304
      %p313 = scmp.eq.s32.totalorder %s27, 0
      %p314 = por %p312, %p313
      %p315 = scmp.ne.s32.totalorder %s303, %s304
      %p316 = scmp.eq.s32.totalorder %s28, 1
      %p317 = por %p315, %p316
      %p319 = scmp.ne.s32.totalorder %s304, %s318
      %p320 = scmp.eq.s32.totalorder %s28, 0
      %p321 = por %p319, %p320
      %s322 = ssub.s32 %s29, %s41
      %s323 = ssub.s32 %s30, %s37
      %s324 = sor.u32 %s322, %s323
      %p325 = scmp.eq.s32.totalorder %s324, 0
      %s327 = sadd.s32 %s326, 1
      %s328 = scalar_select %p325, %s326, %s327
      %p331 = pneg %p325
      %p332 = scmp.eq.s32.totalorder %s22, 1
      %p333 = por %p331, %p332
      %p334 = scmp.ne.s32.totalorder %s326, %s329
      %p335 = scmp.eq.s32.totalorder %s22, 0
      %p336 = por %p334, %p335
      %p337 = scmp.ne.s32.totalorder %s326, %s329
      %p338 = scmp.eq.s32.totalorder %s27, 1
      %p339 = por %p337, %p338
      %p340 = scmp.ne.s32.totalorder %s329, %s330
      %p341 = scmp.eq.s32.totalorder %s27, 0
      %p342 = por %p340, %p341
      %p343 = scmp.ne.s32.totalorder %s329, %s330
      %p344 = scmp.eq.s32.totalorder %s28, 1
      %p345 = por %p343, %p344
      %p347 = scmp.ne.s32.totalorder %s330, %s346
      %p348 = scmp.eq.s32.totalorder %s28, 0
      %p349 = por %p347, %p348
      %p350 = scmp.le.s32.totalorder 1, %s22
      %p351 = scmp.lt.s32.totalorder %s22, 3
      %p352 = pnand %p350, %p351
      %p353 = pneg %p352
      // Predicated region
      $region9: #{tpu_custom_call.1} parent=5 // pred_check
        _
      $region10: #{tpu_custom_call.1} parent=5 // pred_check_branch
        %355 = sbr.rel (%p352) target = $region12
      $region11: #{tpu_custom_call.1} parent=5 // pred_region
        %s356 = ssub.s32 %s22, 1
        // Predicated region
        $region13: #{tpu_custom_call.1} parent=11 // pred_check
          %p357 = pneg %p83
        $region14: #{tpu_custom_call.1} parent=11 // pred_check_branch
          %359 = sbr.rel (%p357) target = $region16
        $region15: #{tpu_custom_call.1} parent=11 // pred_region
          _
        $region16: #{tpu_custom_call.1} parent=11 // pred_fallthru
          _
        // Predicated region
        $region17: #{tpu_custom_call.1} parent=11 // pred_check
          %p360 = pneg %p104
        $region18: #{tpu_custom_call.1} parent=11 // pred_check_branch
          %362 = sbr.rel (%p360) target = $region20
        $region19: #{tpu_custom_call.1} parent=11 // pred_region
          _
        $region20: #{tpu_custom_call.1} parent=11 // pred_fallthru
          _
        // Predicated region
        $region21: #{tpu_custom_call.1} parent=11 // pred_check
          %p363 = pneg %p125
        $region22: #{tpu_custom_call.1} parent=11 // pred_check_branch
          %365 = sbr.rel (%p363) target = $region24
        $region23: #{tpu_custom_call.1} parent=11 // pred_region
          _
        $region24: #{tpu_custom_call.1} parent=11 // pred_fallthru
          _
        // Predicated region
        $region25: #{tpu_custom_call.1} parent=11 // pred_check
          %p366 = pneg %p146
        $region26: #{tpu_custom_call.1} parent=11 // pred_check_branch
          %368 = sbr.rel (%p366) target = $region28
        $region27: #{tpu_custom_call.1} parent=11 // pred_region
          _
        $region28: #{tpu_custom_call.1} parent=11 // pred_fallthru
          _
        // Predicated region
        $region29: #{tpu_custom_call.1} parent=11 // pred_check
          %p369 = pneg %p167
        $region30: #{tpu_custom_call.1} parent=11 // pred_check_branch
          %371 = sbr.rel (%p369) target = $region32
        $region31: #{tpu_custom_call.1} parent=11 // pred_region
          _
        $region32: #{tpu_custom_call.1} parent=11 // pred_fallthru
          _
        // Predicated region
        $region33: #{tpu_custom_call.1} parent=11 // pred_check
          %p372 = pneg %p188
        $region34: #{tpu_custom_call.1} parent=11 // pred_check_branch
          %374 = sbr.rel (%p372) target = $region36
        $region35: #{tpu_custom_call.1} parent=11 // pred_region
          _
        $region36: #{tpu_custom_call.1} parent=11 // pred_fallthru
          _
        // Predicated region
        $region37: #{tpu_custom_call.1} parent=11 // pred_check
          %p375 = pneg %p209
        $region38: #{tpu_custom_call.1} parent=11 // pred_check_branch
          %377 = sbr.rel (%p375) target = $region40
        $region39: #{tpu_custom_call.1} parent=11 // pred_region
          _
        $region40: #{tpu_custom_call.1} parent=11 // pred_fallthru
          _
        // Predicated region
        $region41: #{tpu_custom_call.1} parent=11 // pred_check
          %p378 = pneg %p230
        $region42: #{tpu_custom_call.1} parent=11 // pred_check_branch
          %380 = sbr.rel (%p378) target = $region44
        $region43: #{tpu_custom_call.1} parent=11 // pred_region
          _
        $region44: #{tpu_custom_call.1} parent=11 // pred_fallthru
          _
        // Predicated region
        $region45: #{tpu_custom_call.1} parent=11 // pred_check
          %p381 = pneg %p251
        $region46: #{tpu_custom_call.1} parent=11 // pred_check_branch
          %383 = sbr.rel (%p381) target = $region48
        $region47: #{tpu_custom_call.1} parent=11 // pred_region
          _
        $region48: #{tpu_custom_call.1} parent=11 // pred_fallthru
          _
        // Predicated region
        $region49: #{tpu_custom_call.1} parent=11 // pred_check
          %p384 = pneg %p272
        $region50: #{tpu_custom_call.1} parent=11 // pred_check_branch
          %386 = sbr.rel (%p384) target = $region52
        $region51: #{tpu_custom_call.1} parent=11 // pred_region
          _
        $region52: #{tpu_custom_call.1} parent=11 // pred_fallthru
          _
        // Predicated region
        $region53: #{tpu_custom_call.1} parent=11 // pred_check
          %p387 = pneg %p293
        $region54: #{tpu_custom_call.1} parent=11 // pred_check_branch
          %389 = sbr.rel (%p387) target = $region56
        $region55: #{tpu_custom_call.1} parent=11 // pred_region
          _
        $region56: #{tpu_custom_call.1} parent=11 // pred_fallthru
          _
        // Predicated region
        $region57: #{tpu_custom_call.1} parent=11 // pred_check
          %p390 = pneg %p314
        $region58: #{tpu_custom_call.1} parent=11 // pred_check_branch
          %392 = sbr.rel (%p390) target = $region60
        $region59: #{tpu_custom_call.1} parent=11 // pred_region
          _
        $region60: #{tpu_custom_call.1} parent=11 // pred_fallthru
          _
      $region12: #{tpu_custom_call.1} parent=5 // pred_fallthru
        _
      %p393 = scmp.lt.s32.totalorder %s22, 2
      // Predicated region
      $region61: #{tpu_custom_call.1} parent=5 // pred_check
        %p394 = pneg %p393
      $region62: #{tpu_custom_call.1} parent=5 // pred_check_branch
        %396 = sbr.rel (%p394) target = $region64
      $region63: #{tpu_custom_call.1} parent=5 // pred_region
        // Predicated region
        $region65: #{tpu_custom_call.1} parent=63 // pred_check
          %p397 = pneg %p56
        $region66: #{tpu_custom_call.1} parent=63 // pred_check_branch
          %399 = sbr.rel (%p397) target = $region68
        $region67: #{tpu_custom_call.1} parent=63 // pred_region
          %p400 = scmp.lt.s32.totalorder %s29, 1
          %s401 = scalar_select %p400, %s29, 1
          %p402 = scmp.lt.s32.totalorder %s30, 0
          %s403 = scalar_select %p402, %s30, 0
          %s404 = smul.addr %s401, 80
          %s405 = sadd.s32 %s403, %s404
          %s406 = smul.addr %s405, 8
          %s407 = scalar_lea.vmem %s0, %s406
        $region68: #{tpu_custom_call.1} parent=63 // pred_fallthru
          _
      $region64: #{tpu_custom_call.1} parent=5 // pred_fallthru
        _
      %p408 = scmp.le.s32.totalorder 1, %s22
      %p409 = scmp.lt.s32.totalorder %s22, 3
      %p410 = pnand %p408, %p409
      %p411 = pneg %p410
      // Predicated region
      $region69: #{tpu_custom_call.1} parent=5 // pred_check
        _
      $region70: #{tpu_custom_call.1} parent=5 // pred_check_branch
        %413 = sbr.rel (%p410) target = $region72
      $region71: #{tpu_custom_call.1} parent=5 // pred_region
        %s414 = ssub.s32 %s22, 1
        %p415 = scmp.lt.s32.totalorder %s31, 1
        %s416 = scalar_select %p415, %s31, 1
        %p417 = scmp.lt.s32.totalorder %s32, 0
        %s418 = scalar_select %p417, %s32, 0
        %s419 = smul.addr %s416, 80
        %s420 = sadd.s32 %s418, %s419
        %s421 = smul.addr %s420, 8
        %s422 = scalar_lea.vmem %s0, %s421
        %p423 = pneg %p62
        %p424 = pneg %p59
        %p425 = pneg %p83
        %p426 = pneg %p80
        %p427 = pneg %p104
        %p428 = pneg %p101
        %p429 = pneg %p125
        %p430 = pneg %p122
        %p431 = pneg %p146
        %p432 = pneg %p143
        %p433 = pneg %p167
        %p434 = pneg %p164
        %p435 = pneg %p188
        %p436 = pneg %p185
        %p437 = pneg %p209
        %p438 = pneg %p206
        %p439 = pneg %p230
        %p440 = pneg %p227
        %p441 = pneg %p251
        %p442 = pneg %p248
        %p443 = pneg %p272
        %p444 = pneg %p269
        %p445 = pneg %p293
        %p446 = pneg %p290
        %p447 = pneg %p314
        %p448 = pneg %p311
        %p449 = pneg %p342
        %p450 = pneg %p339
        %s451 = sand.u32 %s329, 1
        %s452 = scalar_lea.sflag [#allocation3], %s451
        %s453 = sand.u32 %s329, 1
        %s454 = smul.addr %s453, 256
        %s455 = scalar_lea.vmem [#allocation2], %s454
        %p456 = scmp.lt.s32.totalorder %s31, 1
        %s457 = scalar_select %p456, %s31, 1
        %p458 = scmp.lt.s32.totalorder %s32, 0
        %s459 = scalar_select %p458, %s32, 0
        %s460 = smul.addr %s457, 80
        %s461 = sadd.s32 %s459, %s460
        %s462 = smul.addr %s461, 8
        %s463 = scalar_lea.vmem %s0, %s462
        %v465 = vld [vmem:[%s463] sm:$0xff]
        %v466 = vld [vmem:[%s463 + $0x8] sm:$0xff]
        %v467 = vld [vmem:[%s463 + $0x10] sm:$0xff]
        %v468 = vld [vmem:[%s463 + $0x18] sm:$0xff]
        %v469 = vld [vmem:[%s463 + $0x20] sm:$0xff]
        %v470 = vld [vmem:[%s463 + $0x28] sm:$0xff]
        %v471 = vld [vmem:[%s463 + $0x30] sm:$0xff]
        %v472 = vld [vmem:[%s463 + $0x38] sm:$0xff]
        %v473 = vld [vmem:[%s463 + $0x40] sm:$0xff]
        %v474 = vld [vmem:[%s463 + $0x48] sm:$0xff]
        %v475 = vld [vmem:[%s463 + $0x50] sm:$0xff]
        %v476 = vld [vmem:[%s463 + $0x58] sm:$0xff]
        %v477 = vld [vmem:[%s463 + $0x60] sm:$0xff]
        %v478 = vld [vmem:[%s463 + $0x68] sm:$0xff]
        %v479 = vld [vmem:[%s463 + $0x70] sm:$0xff]
        %v480 = vld [vmem:[%s463 + $0x78] sm:$0xff]
        %v481 = vld [vmem:[%s463 + $0x80] sm:$0xff]
        %v482 = vld [vmem:[%s463 + $0x88] sm:$0xff]
        %v483 = vld [vmem:[%s463 + $0x90] sm:$0xff]
        %v484 = vld [vmem:[%s463 + $0x98] sm:$0xff]
        %v485 = vld [vmem:[%s463 + $0xa0] sm:$0xff]
        %v486 = vld [vmem:[%s463 + $0xa8] sm:$0xff]
        %v487 = vld [vmem:[%s463 + $0xb0] sm:$0xff]
        %v488 = vld [vmem:[%s463 + $0xb8] sm:$0xff]
        %v489 = vld [vmem:[%s463 + $0xc0] sm:$0xff]
        %v490 = vld [vmem:[%s463 + $0xc8] sm:$0xff]
        %v491 = vld [vmem:[%s463 + $0xd0] sm:$0xff]
        %v492 = vld [vmem:[%s463 + $0xd8] sm:$0xff]
        %v493 = vld [vmem:[%s463 + $0xe0] sm:$0xff]
        %v494 = vld [vmem:[%s463 + $0xe8] sm:$0xff]
        %v495 = vld [vmem:[%s463 + $0xf0] sm:$0xff]
        %v496 = vld [vmem:[%s463 + $0xf8] sm:$0xff]
        %v497 = vld [vmem:[%s463 + $0x100] sm:$0xff]
        %v498 = vld [vmem:[%s463 + $0x108] sm:$0xff]
        %v499 = vld [vmem:[%s463 + $0x110] sm:$0xff]
        %v500 = vld [vmem:[%s463 + $0x118] sm:$0xff]
        %v501 = vld [vmem:[%s463 + $0x120] sm:$0xff]
        %v502 = vld [vmem:[%s463 + $0x128] sm:$0xff]
        %v503 = vld [vmem:[%s463 + $0x130] sm:$0xff]
        %v504 = vld [vmem:[%s463 + $0x138] sm:$0xff]
        %v505 = vld [vmem:[%s463 + $0x140] sm:$0xff]
        %v506 = vld [vmem:[%s463 + $0x148] sm:$0xff]
        %v507 = vld [vmem:[%s463 + $0x150] sm:$0xff]
        %v508 = vld [vmem:[%s463 + $0x158] sm:$0xff]
        %v509 = vld [vmem:[%s463 + $0x160] sm:$0xff]
        %v510 = vld [vmem:[%s463 + $0x168] sm:$0xff]
        %v511 = vld [vmem:[%s463 + $0x170] sm:$0xff]
        %v512 = vld [vmem:[%s463 + $0x178] sm:$0xff]
        %v513 = vld [vmem:[%s463 + $0x180] sm:$0xff]
        %v514 = vld [vmem:[%s463 + $0x188] sm:$0xff]
        %v515 = vld [vmem:[%s463 + $0x190] sm:$0xff]
        %v516 = vld [vmem:[%s463 + $0x198] sm:$0xff]
        %v517 = vld [vmem:[%s463 + $0x1a0] sm:$0xff]
        %v518 = vld [vmem:[%s463 + $0x1a8] sm:$0xff]
        %v519 = vld [vmem:[%s463 + $0x1b0] sm:$0xff]
        %v520 = vld [vmem:[%s463 + $0x1b8] sm:$0xff]
        %v521 = vld [vmem:[%s463 + $0x1c0] sm:$0xff]
        %v522 = vld [vmem:[%s463 + $0x1c8] sm:$0xff]
        %v523 = vld [vmem:[%s463 + $0x1d0] sm:$0xff]
        %v524 = vld [vmem:[%s463 + $0x1d8] sm:$0xff]
        %v525 = vld [vmem:[%s463 + $0x1e0] sm:$0xff]
        %v526 = vld [vmem:[%s463 + $0x1e8] sm:$0xff]
        %v527 = vld [vmem:[%s463 + $0x1f0] sm:$0xff]
        %v528 = vld [vmem:[%s463 + $0x1f8] sm:$0xff]
        %v529 = vld [vmem:[%s463 + $0x200] sm:$0xff]
        %v530 = vld [vmem:[%s463 + $0x208] sm:$0xff]
        %v531 = vld [vmem:[%s463 + $0x210] sm:$0xff]
        %v532 = vld [vmem:[%s463 + $0x218] sm:$0xff]
        %v533 = vld [vmem:[%s463 + $0x220] sm:$0xff]
        %v534 = vld [vmem:[%s463 + $0x228] sm:$0xff]
        %v535 = vld [vmem:[%s463 + $0x230] sm:$0xff]
        %v536 = vld [vmem:[%s463 + $0x238] sm:$0xff]
        %v537 = vld [vmem:[%s463 + $0x240] sm:$0xff]
        %v538 = vld [vmem:[%s463 + $0x248] sm:$0xff]
        %v539 = vld [vmem:[%s463 + $0x250] sm:$0xff]
        %v540 = vld [vmem:[%s463 + $0x258] sm:$0xff]
        %v541 = vld [vmem:[%s463 + $0x260] sm:$0xff]
        %v542 = vld [vmem:[%s463 + $0x268] sm:$0xff]
        %v543 = vld [vmem:[%s463 + $0x270] sm:$0xff]
        %v544 = vld [vmem:[%s463 + $0x278] sm:$0xff]
        %v545 = vld [vmem:[%s3] sm:$0xff]
        %v546 = vld [vmem:[%s3 + $0x8] sm:$0xff]
        %v547 = vld [vmem:[%s3 + $0x10] sm:$0xff]
        %v548 = vld [vmem:[%s3 + $0x18] sm:$0xff]
        %v549 = vld [vmem:[%s3 + $0x20] sm:$0xff]
        %v550 = vld [vmem:[%s3 + $0x28] sm:$0xff]
        %v551 = vld [vmem:[%s3 + $0x30] sm:$0xff]
        %v552 = vld [vmem:[%s3 + $0x38] sm:$0xff]
        %v553 = vld [vmem:[%s3 + $0x40] sm:$0xff]
        %v554 = vld [vmem:[%s3 + $0x48] sm:$0xff]
        %v555 = vld [vmem:[%s3 + $0x50] sm:$0xff]
        %v556 = vld [vmem:[%s3 + $0x58] sm:$0xff]
        %v557 = vld [vmem:[%s3 + $0x60] sm:$0xff]
        %v558 = vld [vmem:[%s3 + $0x68] sm:$0xff]
        %v559 = vld [vmem:[%s3 + $0x70] sm:$0xff]
        %v560 = vld [vmem:[%s3 + $0x78] sm:$0xff]
        %v561 = vld [vmem:[%s3 + $0x80] sm:$0xff]
        %v562 = vld [vmem:[%s3 + $0x88] sm:$0xff]
        %v563 = vld [vmem:[%s3 + $0x90] sm:$0xff]
        %v564 = vld [vmem:[%s3 + $0x98] sm:$0xff]
        %v565 = vld [vmem:[%s3 + $0xa0] sm:$0xff]
        %v566 = vld [vmem:[%s3 + $0xa8] sm:$0xff]
        %v567 = vld [vmem:[%s3 + $0xb0] sm:$0xff]
        %v568 = vld [vmem:[%s3 + $0xb8] sm:$0xff]
        %v569 = vld [vmem:[%s3 + $0xc0] sm:$0xff]
        %v570 = vld [vmem:[%s3 + $0xc8] sm:$0xff]
        %v571 = vld [vmem:[%s3 + $0xd0] sm:$0xff]
        %v572 = vld [vmem:[%s3 + $0xd8] sm:$0xff]
        %v573 = vld [vmem:[%s3 + $0xe0] sm:$0xff]
        %v574 = vld [vmem:[%s3 + $0xe8] sm:$0xff]
        %v575 = vld [vmem:[%s3 + $0xf0] sm:$0xff]
        %v576 = vld [vmem:[%s3 + $0xf8] sm:$0xff]
        %v577 = vld [vmem:[%s3 + $0x100] sm:$0xff]
        %v578 = vld [vmem:[%s3 + $0x108] sm:$0xff]
        %v579 = vld [vmem:[%s3 + $0x110] sm:$0xff]
        %v580 = vld [vmem:[%s3 + $0x118] sm:$0xff]
        %v581 = vld [vmem:[%s3 + $0x120] sm:$0xff]
        %v582 = vld [vmem:[%s3 + $0x128] sm:$0xff]
        %v583 = vld [vmem:[%s3 + $0x130] sm:$0xff]
        %v584 = vld [vmem:[%s3 + $0x138] sm:$0xff]
        %v585 = vld [vmem:[%s3 + $0x140] sm:$0xff]
        %v586 = vld [vmem:[%s3 + $0x148] sm:$0xff]
        %v587 = vld [vmem:[%s3 + $0x150] sm:$0xff]
        %v588 = vld [vmem:[%s3 + $0x158] sm:$0xff]
        %v589 = vld [vmem:[%s3 + $0x160] sm:$0xff]
        %v590 = vld [vmem:[%s3 + $0x168] sm:$0xff]
        %v591 = vld [vmem:[%s3 + $0x170] sm:$0xff]
        %v592 = vld [vmem:[%s3 + $0x178] sm:$0xff]
        %v593 = vld [vmem:[%s3 + $0x180] sm:$0xff]
        %v594 = vld [vmem:[%s3 + $0x188] sm:$0xff]
        %v595 = vld [vmem:[%s3 + $0x190] sm:$0xff]
        %v596 = vld [vmem:[%s3 + $0x198] sm:$0xff]
        %v597 = vld [vmem:[%s3 + $0x1a0] sm:$0xff]
        %v598 = vld [vmem:[%s3 + $0x1a8] sm:$0xff]
        %v599 = vld [vmem:[%s3 + $0x1b0] sm:$0xff]
        %v600 = vld [vmem:[%s3 + $0x1b8] sm:$0xff]
        %v601 = vld [vmem:[%s3 + $0x1c0] sm:$0xff]
        %v602 = vld [vmem:[%s3 + $0x1c8] sm:$0xff]
        %v603 = vld [vmem:[%s3 + $0x1d0] sm:$0xff]
        %v604 = vld [vmem:[%s3 + $0x1d8] sm:$0xff]
        %v605 = vld [vmem:[%s3 + $0x1e0] sm:$0xff]
        %v606 = vld [vmem:[%s3 + $0x1e8] sm:$0xff]
        %v607 = vld [vmem:[%s3 + $0x1f0] sm:$0xff]
        %v608 = vld [vmem:[%s3 + $0x1f8] sm:$0xff]
        %v609 = vld [vmem:[%s3 + $0x200] sm:$0xff]
        %v610 = vld [vmem:[%s3 + $0x208] sm:$0xff]
        %v611 = vld [vmem:[%s3 + $0x210] sm:$0xff]
        %v612 = vld [vmem:[%s3 + $0x218] sm:$0xff]
        %v613 = vld [vmem:[%s3 + $0x220] sm:$0xff]
        %v614 = vld [vmem:[%s3 + $0x228] sm:$0xff]
        %v615 = vld [vmem:[%s3 + $0x230] sm:$0xff]
        %v616 = vld [vmem:[%s3 + $0x238] sm:$0xff]
        %v617 = vld [vmem:[%s3 + $0x240] sm:$0xff]
        %v618 = vld [vmem:[%s3 + $0x248] sm:$0xff]
        %v619 = vld [vmem:[%s3 + $0x250] sm:$0xff]
        %v620 = vld [vmem:[%s3 + $0x258] sm:$0xff]
        %v621 = vld [vmem:[%s3 + $0x260] sm:$0xff]
        %v622 = vld [vmem:[%s3 + $0x268] sm:$0xff]
        %v623 = vld [vmem:[%s3 + $0x270] sm:$0xff]
        %v624 = vld [vmem:[%s3 + $0x278] sm:$0xff]
        %626 = vset.pattern.permute.xlu0 0
        %627 = vperm.xlu0 %626, %v545
        %v628 = vpop.permute.xlu0 %627
        %631 = vset.pattern.permute.xlu0 0
        %632 = vperm.xlu0 %631, %v546
        %v633 = vpop.permute.xlu0 %632
        %636 = vset.pattern.permute.xlu0 0
        %637 = vperm.xlu0 %636, %v547
        %v638 = vpop.permute.xlu0 %637
        %641 = vset.pattern.permute.xlu0 0
        %642 = vperm.xlu0 %641, %v548
        %v643 = vpop.permute.xlu0 %642
        %646 = vset.pattern.permute.xlu0 0
        %647 = vperm.xlu0 %646, %v549
        %v648 = vpop.permute.xlu0 %647
        %651 = vset.pattern.permute.xlu0 0
        %652 = vperm.xlu0 %651, %v550
        %v653 = vpop.permute.xlu0 %652
        %656 = vset.pattern.permute.xlu0 0
        %657 = vperm.xlu0 %656, %v551
        %v658 = vpop.permute.xlu0 %657
        %661 = vset.pattern.permute.xlu0 0
        %662 = vperm.xlu0 %661, %v552
        %v663 = vpop.permute.xlu0 %662
        %666 = vset.pattern.permute.xlu0 0
        %667 = vperm.xlu0 %666, %v553
        %v668 = vpop.permute.xlu0 %667
        %671 = vset.pattern.permute.xlu0 0
        %672 = vperm.xlu0 %671, %v554
        %v673 = vpop.permute.xlu0 %672
        %676 = vset.pattern.permute.xlu0 0
        %677 = vperm.xlu0 %676, %v555
        %v678 = vpop.permute.xlu0 %677
        %681 = vset.pattern.permute.xlu0 0
        %682 = vperm.xlu0 %681, %v556
        %v683 = vpop.permute.xlu0 %682
        %686 = vset.pattern.permute.xlu0 0
        %687 = vperm.xlu0 %686, %v557
        %v688 = vpop.permute.xlu0 %687
        %691 = vset.pattern.permute.xlu0 0
        %692 = vperm.xlu0 %691, %v558
        %v693 = vpop.permute.xlu0 %692
        %696 = vset.pattern.permute.xlu0 0
        %697 = vperm.xlu0 %696, %v559
        %v698 = vpop.permute.xlu0 %697
        %701 = vset.pattern.permute.xlu0 0
        %702 = vperm.xlu0 %701, %v560
        %v703 = vpop.permute.xlu0 %702
        %706 = vset.pattern.permute.xlu0 0
        %707 = vperm.xlu0 %706, %v561
        %v708 = vpop.permute.xlu0 %707
        %711 = vset.pattern.permute.xlu0 0
        %712 = vperm.xlu0 %711, %v562
        %v713 = vpop.permute.xlu0 %712
        %716 = vset.pattern.permute.xlu0 0
        %717 = vperm.xlu0 %716, %v563
        %v718 = vpop.permute.xlu0 %717
        %721 = vset.pattern.permute.xlu0 0
        %722 = vperm.xlu0 %721, %v564
        %v723 = vpop.permute.xlu0 %722
        %726 = vset.pattern.permute.xlu0 0
        %727 = vperm.xlu0 %726, %v565
        %v728 = vpop.permute.xlu0 %727
        %731 = vset.pattern.permute.xlu0 0
        %732 = vperm.xlu0 %731, %v566
        %v733 = vpop.permute.xlu0 %732
        %736 = vset.pattern.permute.xlu0 0
        %737 = vperm.xlu0 %736, %v567
        %v738 = vpop.permute.xlu0 %737
        %741 = vset.pattern.permute.xlu0 0
        %742 = vperm.xlu0 %741, %v568
        %v743 = vpop.permute.xlu0 %742
        %746 = vset.pattern.permute.xlu0 0
        %747 = vperm.xlu0 %746, %v569
        %v748 = vpop.permute.xlu0 %747
        %751 = vset.pattern.permute.xlu0 0
        %752 = vperm.xlu0 %751, %v570
        %v753 = vpop.permute.xlu0 %752
        %756 = vset.pattern.permute.xlu0 0
        %757 = vperm.xlu0 %756, %v571
        %v758 = vpop.permute.xlu0 %757
        %761 = vset.pattern.permute.xlu0 0
        %762 = vperm.xlu0 %761, %v572
        %v763 = vpop.permute.xlu0 %762
        %766 = vset.pattern.permute.xlu0 0
        %767 = vperm.xlu0 %766, %v573
        %v768 = vpop.permute.xlu0 %767
        %771 = vset.pattern.permute.xlu0 0
        %772 = vperm.xlu0 %771, %v574
        %v773 = vpop.permute.xlu0 %772
        %776 = vset.pattern.permute.xlu0 0
        %777 = vperm.xlu0 %776, %v575
        %v778 = vpop.permute.xlu0 %777
        %781 = vset.pattern.permute.xlu0 0
        %782 = vperm.xlu0 %781, %v576
        %v783 = vpop.permute.xlu0 %782
        %786 = vset.pattern.permute.xlu0 0
        %787 = vperm.xlu0 %786, %v577
        %v788 = vpop.permute.xlu0 %787
        %791 = vset.pattern.permute.xlu0 0
        %792 = vperm.xlu0 %791, %v578
        %v793 = vpop.permute.xlu0 %792
        %796 = vset.pattern.permute.xlu0 0
        %797 = vperm.xlu0 %796, %v579
        %v798 = vpop.permute.xlu0 %797
        %801 = vset.pattern.permute.xlu0 0
        %802 = vperm.xlu0 %801, %v580
        %v803 = vpop.permute.xlu0 %802
        %806 = vset.pattern.permute.xlu0 0
        %807 = vperm.xlu0 %806, %v581
        %v808 = vpop.permute.xlu0 %807
        %811 = vset.pattern.permute.xlu0 0
        %812 = vperm.xlu0 %811, %v582
        %v813 = vpop.permute.xlu0 %812
        %816 = vset.pattern.permute.xlu0 0
        %817 = vperm.xlu0 %816, %v583
        %v818 = vpop.permute.xlu0 %817
        %821 = vset.pattern.permute.xlu0 0
        %822 = vperm.xlu0 %821, %v584
        %v823 = vpop.permute.xlu0 %822
        %826 = vset.pattern.permute.xlu0 0
        %827 = vperm.xlu0 %826, %v585
        %v828 = vpop.permute.xlu0 %827
        %831 = vset.pattern.permute.xlu0 0
        %832 = vperm.xlu0 %831, %v586
        %v833 = vpop.permute.xlu0 %832
        %836 = vset.pattern.permute.xlu0 0
        %837 = vperm.xlu0 %836, %v587
        %v838 = vpop.permute.xlu0 %837
        %841 = vset.pattern.permute.xlu0 0
        %842 = vperm.xlu0 %841, %v588
        %v843 = vpop.permute.xlu0 %842
        %846 = vset.pattern.permute.xlu0 0
        %847 = vperm.xlu0 %846, %v589
        %v848 = vpop.permute.xlu0 %847
        %851 = vset.pattern.permute.xlu0 0
        %852 = vperm.xlu0 %851, %v590
        %v853 = vpop.permute.xlu0 %852
        %856 = vset.pattern.permute.xlu0 0
        %857 = vperm.xlu0 %856, %v591
        %v858 = vpop.permute.xlu0 %857
        %861 = vset.pattern.permute.xlu0 0
        %862 = vperm.xlu0 %861, %v592
        %v863 = vpop.permute.xlu0 %862
        %866 = vset.pattern.permute.xlu0 0
        %867 = vperm.xlu0 %866, %v593
        %v868 = vpop.permute.xlu0 %867
        %871 = vset.pattern.permute.xlu0 0
        %872 = vperm.xlu0 %871, %v594
        %v873 = vpop.permute.xlu0 %872
        %876 = vset.pattern.permute.xlu0 0
        %877 = vperm.xlu0 %876, %v595
        %v878 = vpop.permute.xlu0 %877
        %881 = vset.pattern.permute.xlu0 0
        %882 = vperm.xlu0 %881, %v596
        %v883 = vpop.permute.xlu0 %882
        %886 = vset.pattern.permute.xlu0 0
        %887 = vperm.xlu0 %886, %v597
        %v888 = vpop.permute.xlu0 %887
        %891 = vset.pattern.permute.xlu0 0
        %892 = vperm.xlu0 %891, %v598
        %v893 = vpop.permute.xlu0 %892
        %896 = vset.pattern.permute.xlu0 0
        %897 = vperm.xlu0 %896, %v599
        %v898 = vpop.permute.xlu0 %897
        %901 = vset.pattern.permute.xlu0 0
        %902 = vperm.xlu0 %901, %v600
        %v903 = vpop.permute.xlu0 %902
        %906 = vset.pattern.permute.xlu0 0
        %907 = vperm.xlu0 %906, %v601
        %v908 = vpop.permute.xlu0 %907
        %911 = vset.pattern.permute.xlu0 0
        %912 = vperm.xlu0 %911, %v602
        %v913 = vpop.permute.xlu0 %912
        %916 = vset.pattern.permute.xlu0 0
        %917 = vperm.xlu0 %916, %v603
        %v918 = vpop.permute.xlu0 %917
        %921 = vset.pattern.permute.xlu0 0
        %922 = vperm.xlu0 %921, %v604
        %v923 = vpop.permute.xlu0 %922
        %926 = vset.pattern.permute.xlu0 0
        %927 = vperm.xlu0 %926, %v605
        %v928 = vpop.permute.xlu0 %927
        %931 = vset.pattern.permute.xlu0 0
        %932 = vperm.xlu0 %931, %v606
        %v933 = vpop.permute.xlu0 %932
        %936 = vset.pattern.permute.xlu0 0
        %937 = vperm.xlu0 %936, %v607
        %v938 = vpop.permute.xlu0 %937
        %941 = vset.pattern.permute.xlu0 0
        %942 = vperm.xlu0 %941, %v608
        %v943 = vpop.permute.xlu0 %942
        %946 = vset.pattern.permute.xlu0 0
        %947 = vperm.xlu0 %946, %v609
        %v948 = vpop.permute.xlu0 %947
        %951 = vset.pattern.permute.xlu0 0
        %952 = vperm.xlu0 %951, %v610
        %v953 = vpop.permute.xlu0 %952
        %956 = vset.pattern.permute.xlu0 0
        %957 = vperm.xlu0 %956, %v611
        %v958 = vpop.permute.xlu0 %957
        %961 = vset.pattern.permute.xlu0 0
        %962 = vperm.xlu0 %961, %v612
        %v963 = vpop.permute.xlu0 %962
        %966 = vset.pattern.permute.xlu0 0
        %967 = vperm.xlu0 %966, %v613
        %v968 = vpop.permute.xlu0 %967
        %971 = vset.pattern.permute.xlu0 0
        %972 = vperm.xlu0 %971, %v614
        %v973 = vpop.permute.xlu0 %972
        %976 = vset.pattern.permute.xlu0 0
        %977 = vperm.xlu0 %976, %v615
        %v978 = vpop.permute.xlu0 %977
        %981 = vset.pattern.permute.xlu0 0
        %982 = vperm.xlu0 %981, %v616
        %v983 = vpop.permute.xlu0 %982
        %986 = vset.pattern.permute.xlu0 0
        %987 = vperm.xlu0 %986, %v617
        %v988 = vpop.permute.xlu0 %987
        %991 = vset.pattern.permute.xlu0 0
        %992 = vperm.xlu0 %991, %v618
        %v993 = vpop.permute.xlu0 %992
        %996 = vset.pattern.permute.xlu0 0
        %997 = vperm.xlu0 %996, %v619
        %v998 = vpop.permute.xlu0 %997
        %1001 = vset.pattern.permute.xlu0 0
        %1002 = vperm.xlu0 %1001, %v620
        %v1003 = vpop.permute.xlu0 %1002
        %1006 = vset.pattern.permute.xlu0 0
        %1007 = vperm.xlu0 %1006, %v621
        %v1008 = vpop.permute.xlu0 %1007
        %1011 = vset.pattern.permute.xlu0 0
        %1012 = vperm.xlu0 %1011, %v622
        %v1013 = vpop.permute.xlu0 %1012
        %1016 = vset.pattern.permute.xlu0 0
        %1017 = vperm.xlu0 %1016, %v623
        %v1018 = vpop.permute.xlu0 %1017
        %1021 = vset.pattern.permute.xlu0 0
        %1022 = vperm.xlu0 %1021, %v624
        %v1023 = vpop.permute.xlu0 %1022
        %v1025 = vmul.f32 %v465, %v628
        %v1026 = vmul.f32 %v466, %v633
        %v1027 = vmul.f32 %v467, %v638
        %v1028 = vmul.f32 %v468, %v643
        %v1029 = vmul.f32 %v469, %v648
        %v1030 = vmul.f32 %v470, %v653
        %v1031 = vmul.f32 %v471, %v658
        %v1032 = vmul.f32 %v472, %v663
        %v1033 = vmul.f32 %v473, %v668
        %v1034 = vmul.f32 %v474, %v673
        %v1035 = vmul.f32 %v475, %v678
        %v1036 = vmul.f32 %v476, %v683
        %v1037 = vmul.f32 %v477, %v688
        %v1038 = vmul.f32 %v478, %v693
        %v1039 = vmul.f32 %v479, %v698
        %v1040 = vmul.f32 %v480, %v703
        %v1041 = vmul.f32 %v481, %v708
        %v1042 = vmul.f32 %v482, %v713
        %v1043 = vmul.f32 %v483, %v718
        %v1044 = vmul.f32 %v484, %v723
        %v1045 = vmul.f32 %v485, %v728
        %v1046 = vmul.f32 %v486, %v733
        %v1047 = vmul.f32 %v487, %v738
        %v1048 = vmul.f32 %v488, %v743
        %v1049 = vmul.f32 %v489, %v748
        %v1050 = vmul.f32 %v490, %v753
        %v1051 = vmul.f32 %v491, %v758
        %v1052 = vmul.f32 %v492, %v763
        %v1053 = vmul.f32 %v493, %v768
        %v1054 = vmul.f32 %v494, %v773
        %v1055 = vmul.f32 %v495, %v778
        %v1056 = vmul.f32 %v496, %v783
        %v1057 = vmul.f32 %v497, %v788
        %v1058 = vmul.f32 %v498, %v793
        %v1059 = vmul.f32 %v499, %v798
        %v1060 = vmul.f32 %v500, %v803
        %v1061 = vmul.f32 %v501, %v808
        %v1062 = vmul.f32 %v502, %v813
        %v1063 = vmul.f32 %v503, %v818
        %v1064 = vmul.f32 %v504, %v823
        %v1065 = vmul.f32 %v505, %v828
        %v1066 = vmul.f32 %v506, %v833
        %v1067 = vmul.f32 %v507, %v838
        %v1068 = vmul.f32 %v508, %v843
        %v1069 = vmul.f32 %v509, %v848
        %v1070 = vmul.f32 %v510, %v853
        %v1071 = vmul.f32 %v511, %v858
        %v1072 = vmul.f32 %v512, %v863
        %v1073 = vmul.f32 %v513, %v868
        %v1074 = vmul.f32 %v514, %v873
        %v1075 = vmul.f32 %v515, %v878
        %v1076 = vmul.f32 %v516, %v883
        %v1077 = vmul.f32 %v517, %v888
        %v1078 = vmul.f32 %v518, %v893
        %v1079 = vmul.f32 %v519, %v898
        %v1080 = vmul.f32 %v520, %v903
        %v1081 = vmul.f32 %v521, %v908
        %v1082 = vmul.f32 %v522, %v913
        %v1083 = vmul.f32 %v523, %v918
        %v1084 = vmul.f32 %v524, %v923
        %v1085 = vmul.f32 %v525, %v928
        %v1086 = vmul.f32 %v526, %v933
        %v1087 = vmul.f32 %v527, %v938
        %v1088 = vmul.f32 %v528, %v943
        %v1089 = vmul.f32 %v529, %v948
        %v1090 = vmul.f32 %v530, %v953
        %v1091 = vmul.f32 %v531, %v958
        %v1092 = vmul.f32 %v532, %v963
        %v1093 = vmul.f32 %v533, %v968
        %v1094 = vmul.f32 %v534, %v973
        %v1095 = vmul.f32 %v535, %v978
        %v1096 = vmul.f32 %v536, %v983
        %v1097 = vmul.f32 %v537, %v988
        %v1098 = vmul.f32 %v538, %v993
        %v1099 = vmul.f32 %v539, %v998
        %v1100 = vmul.f32 %v540, %v1003
        %v1101 = vmul.f32 %v541, %v1008
        %v1102 = vmul.f32 %v542, %v1013
        %v1103 = vmul.f32 %v543, %v1018
        %v1104 = vmul.f32 %v544, %v1023
        %v1105 = vld [vmem:[%s4] sm:$0xff]
        %v1106 = vld [vmem:[%s4 + $0x8] sm:$0xff]
        %v1107 = vld [vmem:[%s4 + $0x10] sm:$0xff]
        %v1108 = vld [vmem:[%s4 + $0x18] sm:$0xff]
        %v1109 = vld [vmem:[%s4 + $0x20] sm:$0xff]
        %v1110 = vld [vmem:[%s4 + $0x28] sm:$0xff]
        %v1111 = vld [vmem:[%s4 + $0x30] sm:$0xff]
        %v1112 = vld [vmem:[%s4 + $0x38] sm:$0xff]
        %v1113 = vld [vmem:[%s4 + $0x40] sm:$0xff]
        %v1114 = vld [vmem:[%s4 + $0x48] sm:$0xff]
        %v1115 = vld [vmem:[%s4 + $0x50] sm:$0xff]
        %v1116 = vld [vmem:[%s4 + $0x58] sm:$0xff]
        %v1117 = vld [vmem:[%s4 + $0x60] sm:$0xff]
        %v1118 = vld [vmem:[%s4 + $0x68] sm:$0xff]
        %v1119 = vld [vmem:[%s4 + $0x70] sm:$0xff]
        %v1120 = vld [vmem:[%s4 + $0x78] sm:$0xff]
        %v1121 = vld [vmem:[%s4 + $0x80] sm:$0xff]
        %v1122 = vld [vmem:[%s4 + $0x88] sm:$0xff]
        %v1123 = vld [vmem:[%s4 + $0x90] sm:$0xff]
        %v1124 = vld [vmem:[%s4 + $0x98] sm:$0xff]
        %v1125 = vld [vmem:[%s4 + $0xa0] sm:$0xff]
        %v1126 = vld [vmem:[%s4 + $0xa8] sm:$0xff]
        %v1127 = vld [vmem:[%s4 + $0xb0] sm:$0xff]
        %v1128 = vld [vmem:[%s4 + $0xb8] sm:$0xff]
        %v1129 = vld [vmem:[%s4 + $0xc0] sm:$0xff]
        %v1130 = vld [vmem:[%s4 + $0xc8] sm:$0xff]
        %v1131 = vld [vmem:[%s4 + $0xd0] sm:$0xff]
        %v1132 = vld [vmem:[%s4 + $0xd8] sm:$0xff]
        %v1133 = vld [vmem:[%s4 + $0xe0] sm:$0xff]
        %v1134 = vld [vmem:[%s4 + $0xe8] sm:$0xff]
        %v1135 = vld [vmem:[%s4 + $0xf0] sm:$0xff]
        %v1136 = vld [vmem:[%s4 + $0xf8] sm:$0xff]
        %v1137 = vld [vmem:[%s4 + $0x100] sm:$0xff]
        %v1138 = vld [vmem:[%s4 + $0x108] sm:$0xff]
        %v1139 = vld [vmem:[%s4 + $0x110] sm:$0xff]
        %v1140 = vld [vmem:[%s4 + $0x118] sm:$0xff]
        %v1141 = vld [vmem:[%s4 + $0x120] sm:$0xff]
        %v1142 = vld [vmem:[%s4 + $0x128] sm:$0xff]
        %v1143 = vld [vmem:[%s4 + $0x130] sm:$0xff]
        %v1144 = vld [vmem:[%s4 + $0x138] sm:$0xff]
        %v1145 = vld [vmem:[%s4 + $0x140] sm:$0xff]
        %v1146 = vld [vmem:[%s4 + $0x148] sm:$0xff]
        %v1147 = vld [vmem:[%s4 + $0x150] sm:$0xff]
        %v1148 = vld [vmem:[%s4 + $0x158] sm:$0xff]
        %v1149 = vld [vmem:[%s4 + $0x160] sm:$0xff]
        %v1150 = vld [vmem:[%s4 + $0x168] sm:$0xff]
        %v1151 = vld [vmem:[%s4 + $0x170] sm:$0xff]
        %v1152 = vld [vmem:[%s4 + $0x178] sm:$0xff]
        %v1153 = vld [vmem:[%s4 + $0x180] sm:$0xff]
        %v1154 = vld [vmem:[%s4 + $0x188] sm:$0xff]
        %v1155 = vld [vmem:[%s4 + $0x190] sm:$0xff]
        %v1156 = vld [vmem:[%s4 + $0x198] sm:$0xff]
        %v1157 = vld [vmem:[%s4 + $0x1a0] sm:$0xff]
        %v1158 = vld [vmem:[%s4 + $0x1a8] sm:$0xff]
        %v1159 = vld [vmem:[%s4 + $0x1b0] sm:$0xff]
        %v1160 = vld [vmem:[%s4 + $0x1b8] sm:$0xff]
        %v1161 = vld [vmem:[%s4 + $0x1c0] sm:$0xff]
        %v1162 = vld [vmem:[%s4 + $0x1c8] sm:$0xff]
        %v1163 = vld [vmem:[%s4 + $0x1d0] sm:$0xff]
        %v1164 = vld [vmem:[%s4 + $0x1d8] sm:$0xff]
        %v1165 = vld [vmem:[%s4 + $0x1e0] sm:$0xff]
        %v1166 = vld [vmem:[%s4 + $0x1e8] sm:$0xff]
        %v1167 = vld [vmem:[%s4 + $0x1f0] sm:$0xff]
        %v1168 = vld [vmem:[%s4 + $0x1f8] sm:$0xff]
        %v1169 = vld [vmem:[%s4 + $0x200] sm:$0xff]
        %v1170 = vld [vmem:[%s4 + $0x208] sm:$0xff]
        %v1171 = vld [vmem:[%s4 + $0x210] sm:$0xff]
        %v1172 = vld [vmem:[%s4 + $0x218] sm:$0xff]
        %v1173 = vld [vmem:[%s4 + $0x220] sm:$0xff]
        %v1174 = vld [vmem:[%s4 + $0x228] sm:$0xff]
        %v1175 = vld [vmem:[%s4 + $0x230] sm:$0xff]
        %v1176 = vld [vmem:[%s4 + $0x238] sm:$0xff]
        %v1177 = vld [vmem:[%s4 + $0x240] sm:$0xff]
        %v1178 = vld [vmem:[%s4 + $0x248] sm:$0xff]
        %v1179 = vld [vmem:[%s4 + $0x250] sm:$0xff]
        %v1180 = vld [vmem:[%s4 + $0x258] sm:$0xff]
        %v1181 = vld [vmem:[%s4 + $0x260] sm:$0xff]
        %v1182 = vld [vmem:[%s4 + $0x268] sm:$0xff]
        %v1183 = vld [vmem:[%s4 + $0x270] sm:$0xff]
        %v1184 = vld [vmem:[%s4 + $0x278] sm:$0xff]
        %1186 = vset.pattern.permute.xlu0 0
        %1187 = vperm.xlu0 %1186, %v1105
        %v1188 = vpop.permute.xlu0 %1187
        %1191 = vset.pattern.permute.xlu0 0
        %1192 = vperm.xlu0 %1191, %v1106
        %v1193 = vpop.permute.xlu0 %1192
        %1196 = vset.pattern.permute.xlu0 0
        %1197 = vperm.xlu0 %1196, %v1107
        %v1198 = vpop.permute.xlu0 %1197
        %1201 = vset.pattern.permute.xlu0 0
        %1202 = vperm.xlu0 %1201, %v1108
        %v1203 = vpop.permute.xlu0 %1202
        %1206 = vset.pattern.permute.xlu0 0
        %1207 = vperm.xlu0 %1206, %v1109
        %v1208 = vpop.permute.xlu0 %1207
        %1211 = vset.pattern.permute.xlu0 0
        %1212 = vperm.xlu0 %1211, %v1110
        %v1213 = vpop.permute.xlu0 %1212
        %1216 = vset.pattern.permute.xlu0 0
        %1217 = vperm.xlu0 %1216, %v1111
        %v1218 = vpop.permute.xlu0 %1217
        %1221 = vset.pattern.permute.xlu0 0
        %1222 = vperm.xlu0 %1221, %v1112
        %v1223 = vpop.permute.xlu0 %1222
        %1226 = vset.pattern.permute.xlu0 0
        %1227 = vperm.xlu0 %1226, %v1113
        %v1228 = vpop.permute.xlu0 %1227
        %1231 = vset.pattern.permute.xlu0 0
        %1232 = vperm.xlu0 %1231, %v1114
        %v1233 = vpop.permute.xlu0 %1232
        %1236 = vset.pattern.permute.xlu0 0
        %1237 = vperm.xlu0 %1236, %v1115
        %v1238 = vpop.permute.xlu0 %1237
        %1241 = vset.pattern.permute.xlu0 0
        %1242 = vperm.xlu0 %1241, %v1116
        %v1243 = vpop.permute.xlu0 %1242
        %1246 = vset.pattern.permute.xlu0 0
        %1247 = vperm.xlu0 %1246, %v1117
        %v1248 = vpop.permute.xlu0 %1247
        %1251 = vset.pattern.permute.xlu0 0
        %1252 = vperm.xlu0 %1251, %v1118
        %v1253 = vpop.permute.xlu0 %1252
        %1256 = vset.pattern.permute.xlu0 0
        %1257 = vperm.xlu0 %1256, %v1119
        %v1258 = vpop.permute.xlu0 %1257
        %1261 = vset.pattern.permute.xlu0 0
        %1262 = vperm.xlu0 %1261, %v1120
        %v1263 = vpop.permute.xlu0 %1262
        %1266 = vset.pattern.permute.xlu0 0
        %1267 = vperm.xlu0 %1266, %v1121
        %v1268 = vpop.permute.xlu0 %1267
        %1271 = vset.pattern.permute.xlu0 0
        %1272 = vperm.xlu0 %1271, %v1122
        %v1273 = vpop.permute.xlu0 %1272
        %1276 = vset.pattern.permute.xlu0 0
        %1277 = vperm.xlu0 %1276, %v1123
        %v1278 = vpop.permute.xlu0 %1277
        %1281 = vset.pattern.permute.xlu0 0
        %1282 = vperm.xlu0 %1281, %v1124
        %v1283 = vpop.permute.xlu0 %1282
        %1286 = vset.pattern.permute.xlu0 0
        %1287 = vperm.xlu0 %1286, %v1125
        %v1288 = vpop.permute.xlu0 %1287
        %1291 = vset.pattern.permute.xlu0 0
        %1292 = vperm.xlu0 %1291, %v1126
        %v1293 = vpop.permute.xlu0 %1292
        %1296 = vset.pattern.permute.xlu0 0
        %1297 = vperm.xlu0 %1296, %v1127
        %v1298 = vpop.permute.xlu0 %1297
        %1301 = vset.pattern.permute.xlu0 0
        %1302 = vperm.xlu0 %1301, %v1128
        %v1303 = vpop.permute.xlu0 %1302
        %1306 = vset.pattern.permute.xlu0 0
        %1307 = vperm.xlu0 %1306, %v1129
        %v1308 = vpop.permute.xlu0 %1307
        %1311 = vset.pattern.permute.xlu0 0
        %1312 = vperm.xlu0 %1311, %v1130
        %v1313 = vpop.permute.xlu0 %1312
        %1316 = vset.pattern.permute.xlu0 0
        %1317 = vperm.xlu0 %1316, %v1131
        %v1318 = vpop.permute.xlu0 %1317
        %1321 = vset.pattern.permute.xlu0 0
        %1322 = vperm.xlu0 %1321, %v1132
        %v1323 = vpop.permute.xlu0 %1322
        %1326 = vset.pattern.permute.xlu0 0
        %1327 = vperm.xlu0 %1326, %v1133
        %v1328 = vpop.permute.xlu0 %1327
        %1331 = vset.pattern.permute.xlu0 0
        %1332 = vperm.xlu0 %1331, %v1134
        %v1333 = vpop.permute.xlu0 %1332
        %1336 = vset.pattern.permute.xlu0 0
        %1337 = vperm.xlu0 %1336, %v1135
        %v1338 = vpop.permute.xlu0 %1337
        %1341 = vset.pattern.permute.xlu0 0
        %1342 = vperm.xlu0 %1341, %v1136
        %v1343 = vpop.permute.xlu0 %1342
        %1346 = vset.pattern.permute.xlu0 0
        %1347 = vperm.xlu0 %1346, %v1137
        %v1348 = vpop.permute.xlu0 %1347
        %1351 = vset.pattern.permute.xlu0 0
        %1352 = vperm.xlu0 %1351, %v1138
        %v1353 = vpop.permute.xlu0 %1352
        %1356 = vset.pattern.permute.xlu0 0
        %1357 = vperm.xlu0 %1356, %v1139
        %v1358 = vpop.permute.xlu0 %1357
        %1361 = vset.pattern.permute.xlu0 0
        %1362 = vperm.xlu0 %1361, %v1140
        %v1363 = vpop.permute.xlu0 %1362
        %1366 = vset.pattern.permute.xlu0 0
        %1367 = vperm.xlu0 %1366, %v1141
        %v1368 = vpop.permute.xlu0 %1367
        %1371 = vset.pattern.permute.xlu0 0
        %1372 = vperm.xlu0 %1371, %v1142
        %v1373 = vpop.permute.xlu0 %1372
        %1376 = vset.pattern.permute.xlu0 0
        %1377 = vperm.xlu0 %1376, %v1143
        %v1378 = vpop.permute.xlu0 %1377
        %1381 = vset.pattern.permute.xlu0 0
        %1382 = vperm.xlu0 %1381, %v1144
        %v1383 = vpop.permute.xlu0 %1382
        %1386 = vset.pattern.permute.xlu0 0
        %1387 = vperm.xlu0 %1386, %v1145
        %v1388 = vpop.permute.xlu0 %1387
        %1391 = vset.pattern.permute.xlu0 0
        %1392 = vperm.xlu0 %1391, %v1146
        %v1393 = vpop.permute.xlu0 %1392
        %1396 = vset.pattern.permute.xlu0 0
        %1397 = vperm.xlu0 %1396, %v1147
        %v1398 = vpop.permute.xlu0 %1397
        %1401 = vset.pattern.permute.xlu0 0
        %1402 = vperm.xlu0 %1401, %v1148
        %v1403 = vpop.permute.xlu0 %1402
        %1406 = vset.pattern.permute.xlu0 0
        %1407 = vperm.xlu0 %1406, %v1149
        %v1408 = vpop.permute.xlu0 %1407
        %1411 = vset.pattern.permute.xlu0 0
        %1412 = vperm.xlu0 %1411, %v1150
        %v1413 = vpop.permute.xlu0 %1412
        %1416 = vset.pattern.permute.xlu0 0
        %1417 = vperm.xlu0 %1416, %v1151
        %v1418 = vpop.permute.xlu0 %1417
        %1421 = vset.pattern.permute.xlu0 0
        %1422 = vperm.xlu0 %1421, %v1152
        %v1423 = vpop.permute.xlu0 %1422
        %1426 = vset.pattern.permute.xlu0 0
        %1427 = vperm.xlu0 %1426, %v1153
        %v1428 = vpop.permute.xlu0 %1427
        %1431 = vset.pattern.permute.xlu0 0
        %1432 = vperm.xlu0 %1431, %v1154
        %v1433 = vpop.permute.xlu0 %1432
        %1436 = vset.pattern.permute.xlu0 0
        %1437 = vperm.xlu0 %1436, %v1155
        %v1438 = vpop.permute.xlu0 %1437
        %1441 = vset.pattern.permute.xlu0 0
        %1442 = vperm.xlu0 %1441, %v1156
        %v1443 = vpop.permute.xlu0 %1442
        %1446 = vset.pattern.permute.xlu0 0
        %1447 = vperm.xlu0 %1446, %v1157
        %v1448 = vpop.permute.xlu0 %1447
        %1451 = vset.pattern.permute.xlu0 0
        %1452 = vperm.xlu0 %1451, %v1158
        %v1453 = vpop.permute.xlu0 %1452
        %1456 = vset.pattern.permute.xlu0 0
        %1457 = vperm.xlu0 %1456, %v1159
        %v1458 = vpop.permute.xlu0 %1457
        %1461 = vset.pattern.permute.xlu0 0
        %1462 = vperm.xlu0 %1461, %v1160
        %v1463 = vpop.permute.xlu0 %1462
        %1466 = vset.pattern.permute.xlu0 0
        %1467 = vperm.xlu0 %1466, %v1161
        %v1468 = vpop.permute.xlu0 %1467
        %1471 = vset.pattern.permute.xlu0 0
        %1472 = vperm.xlu0 %1471, %v1162
        %v1473 = vpop.permute.xlu0 %1472
        %1476 = vset.pattern.permute.xlu0 0
        %1477 = vperm.xlu0 %1476, %v1163
        %v1478 = vpop.permute.xlu0 %1477
        %1481 = vset.pattern.permute.xlu0 0
        %1482 = vperm.xlu0 %1481, %v1164
        %v1483 = vpop.permute.xlu0 %1482
        %1486 = vset.pattern.permute.xlu0 0
        %1487 = vperm.xlu0 %1486, %v1165
        %v1488 = vpop.permute.xlu0 %1487
        %1491 = vset.pattern.permute.xlu0 0
        %1492 = vperm.xlu0 %1491, %v1166
        %v1493 = vpop.permute.xlu0 %1492
        %1496 = vset.pattern.permute.xlu0 0
        %1497 = vperm.xlu0 %1496, %v1167
        %v1498 = vpop.permute.xlu0 %1497
        %1501 = vset.pattern.permute.xlu0 0
        %1502 = vperm.xlu0 %1501, %v1168
        %v1503 = vpop.permute.xlu0 %1502
        %1506 = vset.pattern.permute.xlu0 0
        %1507 = vperm.xlu0 %1506, %v1169
        %v1508 = vpop.permute.xlu0 %1507
        %1511 = vset.pattern.permute.xlu0 0
        %1512 = vperm.xlu0 %1511, %v1170
        %v1513 = vpop.permute.xlu0 %1512
        %1516 = vset.pattern.permute.xlu0 0
        %1517 = vperm.xlu0 %1516, %v1171
        %v1518 = vpop.permute.xlu0 %1517
        %1521 = vset.pattern.permute.xlu0 0
        %1522 = vperm.xlu0 %1521, %v1172
        %v1523 = vpop.permute.xlu0 %1522
        %1526 = vset.pattern.permute.xlu0 0
        %1527 = vperm.xlu0 %1526, %v1173
        %v1528 = vpop.permute.xlu0 %1527
        %1531 = vset.pattern.permute.xlu0 0
        %1532 = vperm.xlu0 %1531, %v1174
        %v1533 = vpop.permute.xlu0 %1532
        %1536 = vset.pattern.permute.xlu0 0
        %1537 = vperm.xlu0 %1536, %v1175
        %v1538 = vpop.permute.xlu0 %1537
        %1541 = vset.pattern.permute.xlu0 0
        %1542 = vperm.xlu0 %1541, %v1176
        %v1543 = vpop.permute.xlu0 %1542
        %1546 = vset.pattern.permute.xlu0 0
        %1547 = vperm.xlu0 %1546, %v1177
        %v1548 = vpop.permute.xlu0 %1547
        %1551 = vset.pattern.permute.xlu0 0
        %1552 = vperm.xlu0 %1551, %v1178
        %v1553 = vpop.permute.xlu0 %1552
        %1556 = vset.pattern.permute.xlu0 0
        %1557 = vperm.xlu0 %1556, %v1179
        %v1558 = vpop.permute.xlu0 %1557
        %1561 = vset.pattern.permute.xlu0 0
        %1562 = vperm.xlu0 %1561, %v1180
        %v1563 = vpop.permute.xlu0 %1562
        %1566 = vset.pattern.permute.xlu0 0
        %1567 = vperm.xlu0 %1566, %v1181
        %v1568 = vpop.permute.xlu0 %1567
        %1571 = vset.pattern.permute.xlu0 0
        %1572 = vperm.xlu0 %1571, %v1182
        %v1573 = vpop.permute.xlu0 %1572
        %1576 = vset.pattern.permute.xlu0 0
        %1577 = vperm.xlu0 %1576, %v1183
        %v1578 = vpop.permute.xlu0 %1577
        %1581 = vset.pattern.permute.xlu0 0
        %1582 = vperm.xlu0 %1581, %v1184
        %v1583 = vpop.permute.xlu0 %1582
        %v1585 = vadd.f32 %v1025, %v1188
        %v1586 = vadd.f32 %v1026, %v1193
        %v1587 = vadd.f32 %v1027, %v1198
        %v1588 = vadd.f32 %v1028, %v1203
        %v1589 = vadd.f32 %v1029, %v1208
        %v1590 = vadd.f32 %v1030, %v1213
        %v1591 = vadd.f32 %v1031, %v1218
        %v1592 = vadd.f32 %v1032, %v1223
        %v1593 = vadd.f32 %v1033, %v1228
        %v1594 = vadd.f32 %v1034, %v1233
        %v1595 = vadd.f32 %v1035, %v1238
        %v1596 = vadd.f32 %v1036, %v1243
        %v1597 = vadd.f32 %v1037, %v1248
        %v1598 = vadd.f32 %v1038, %v1253
        %v1599 = vadd.f32 %v1039, %v1258
        %v1600 = vadd.f32 %v1040, %v1263
        %v1601 = vadd.f32 %v1041, %v1268
        %v1602 = vadd.f32 %v1042, %v1273
        %v1603 = vadd.f32 %v1043, %v1278
        %v1604 = vadd.f32 %v1044, %v1283
        %v1605 = vadd.f32 %v1045, %v1288
        %v1606 = vadd.f32 %v1046, %v1293
        %v1607 = vadd.f32 %v1047, %v1298
        %v1608 = vadd.f32 %v1048, %v1303
        %v1609 = vadd.f32 %v1049, %v1308
        %v1610 = vadd.f32 %v1050, %v1313
        %v1611 = vadd.f32 %v1051, %v1318
        %v1612 = vadd.f32 %v1052, %v1323
        %v1613 = vadd.f32 %v1053, %v1328
        %v1614 = vadd.f32 %v1054, %v1333
        %v1615 = vadd.f32 %v1055, %v1338
        %v1616 = vadd.f32 %v1056, %v1343
        %v1617 = vadd.f32 %v1057, %v1348
        %v1618 = vadd.f32 %v1058, %v1353
        %v1619 = vadd.f32 %v1059, %v1358
        %v1620 = vadd.f32 %v1060, %v1363
        %v1621 = vadd.f32 %v1061, %v1368
        %v1622 = vadd.f32 %v1062, %v1373
        %v1623 = vadd.f32 %v1063, %v1378
        %v1624 = vadd.f32 %v1064, %v1383
        %v1625 = vadd.f32 %v1065, %v1388
        %v1626 = vadd.f32 %v1066, %v1393
        %v1627 = vadd.f32 %v1067, %v1398
        %v1628 = vadd.f32 %v1068, %v1403
        %v1629 = vadd.f32 %v1069, %v1408
        %v1630 = vadd.f32 %v1070, %v1413
        %v1631 = vadd.f32 %v1071, %v1418
        %v1632 = vadd.f32 %v1072, %v1423
        %v1633 = vadd.f32 %v1073, %v1428
        %v1634 = vadd.f32 %v1074, %v1433
        %v1635 = vadd.f32 %v1075, %v1438
        %v1636 = vadd.f32 %v1076, %v1443
        %v1637 = vadd.f32 %v1077, %v1448
        %v1638 = vadd.f32 %v1078, %v1453
        %v1639 = vadd.f32 %v1079, %v1458
        %v1640 = vadd.f32 %v1080, %v1463
        %v1641 = vadd.f32 %v1081, %v1468
        %v1642 = vadd.f32 %v1082, %v1473
        %v1643 = vadd.f32 %v1083, %v1478
        %v1644 = vadd.f32 %v1084, %v1483
        %v1645 = vadd.f32 %v1085, %v1488
        %v1646 = vadd.f32 %v1086, %v1493
        %v1647 = vadd.f32 %v1087, %v1498
        %v1648 = vadd.f32 %v1088, %v1503
        %v1649 = vadd.f32 %v1089, %v1508
        %v1650 = vadd.f32 %v1090, %v1513
        %v1651 = vadd.f32 %v1091, %v1518
        %v1652 = vadd.f32 %v1092, %v1523
        %v1653 = vadd.f32 %v1093, %v1528
        %v1654 = vadd.f32 %v1094, %v1533
        %v1655 = vadd.f32 %v1095, %v1538
        %v1656 = vadd.f32 %v1096, %v1543
        %v1657 = vadd.f32 %v1097, %v1548
        %v1658 = vadd.f32 %v1098, %v1553
        %v1659 = vadd.f32 %v1099, %v1558
        %v1660 = vadd.f32 %v1100, %v1563
        %v1661 = vadd.f32 %v1101, %v1568
        %v1662 = vadd.f32 %v1102, %v1573
        %v1663 = vadd.f32 %v1103, %v1578
        %v1664 = vadd.f32 %v1104, %v1583
        %v1665 = vmax.f32 %v1585, 0.0
        %v1666 = vmax.f32 %v1586, 0.0
        %v1667 = vmax.f32 %v1587, 0.0
        %v1668 = vmax.f32 %v1588, 0.0
        %v1669 = vmax.f32 %v1589, 0.0
        %v1670 = vmax.f32 %v1590, 0.0
        %v1671 = vmax.f32 %v1591, 0.0
        %v1672 = vmax.f32 %v1592, 0.0
        %v1673 = vmax.f32 %v1593, 0.0
        %v1674 = vmax.f32 %v1594, 0.0
        %v1675 = vmax.f32 %v1595, 0.0
        %v1676 = vmax.f32 %v1596, 0.0
        %v1677 = vmax.f32 %v1597, 0.0
        %v1678 = vmax.f32 %v1598, 0.0
        %v1679 = vmax.f32 %v1599, 0.0
        %v1680 = vmax.f32 %v1600, 0.0
        %v1681 = vmax.f32 %v1601, 0.0
        %v1682 = vmax.f32 %v1602, 0.0
        %v1683 = vmax.f32 %v1603, 0.0
        %v1684 = vmax.f32 %v1604, 0.0
        %v1685 = vmax.f32 %v1605, 0.0
        %v1686 = vmax.f32 %v1606, 0.0
        %v1687 = vmax.f32 %v1607, 0.0
        %v1688 = vmax.f32 %v1608, 0.0
        %v1689 = vmax.f32 %v1609, 0.0
        %v1690 = vmax.f32 %v1610, 0.0
        %v1691 = vmax.f32 %v1611, 0.0
        %v1692 = vmax.f32 %v1612, 0.0
        %v1693 = vmax.f32 %v1613, 0.0
        %v1694 = vmax.f32 %v1614, 0.0
        %v1695 = vmax.f32 %v1615, 0.0
        %v1696 = vmax.f32 %v1616, 0.0
        %v1697 = vmax.f32 %v1617, 0.0
        %v1698 = vmax.f32 %v1618, 0.0
        %v1699 = vmax.f32 %v1619, 0.0
        %v1700 = vmax.f32 %v1620, 0.0
        %v1701 = vmax.f32 %v1621, 0.0
        %v1702 = vmax.f32 %v1622, 0.0
        %v1703 = vmax.f32 %v1623, 0.0
        %v1704 = vmax.f32 %v1624, 0.0
        %v1705 = vmax.f32 %v1625, 0.0
        %v1706 = vmax.f32 %v1626, 0.0
        %v1707 = vmax.f32 %v1627, 0.0
        %v1708 = vmax.f32 %v1628, 0.0
        %v1709 = vmax.f32 %v1629, 0.0
        %v1710 = vmax.f32 %v1630, 0.0
        %v1711 = vmax.f32 %v1631, 0.0
        %v1712 = vmax.f32 %v1632, 0.0
        %v1713 = vmax.f32 %v1633, 0.0
        %v1714 = vmax.f32 %v1634, 0.0
        %v1715 = vmax.f32 %v1635, 0.0
        %v1716 = vmax.f32 %v1636, 0.0
        %v1717 = vmax.f32 %v1637, 0.0
        %v1718 = vmax.f32 %v1638, 0.0
        %v1719 = vmax.f32 %v1639, 0.0
        %v1720 = vmax.f32 %v1640, 0.0
        %v1721 = vmax.f32 %v1641, 0.0
        %v1722 = vmax.f32 %v1642, 0.0
        %v1723 = vmax.f32 %v1643, 0.0
        %v1724 = vmax.f32 %v1644, 0.0
        %v1725 = vmax.f32 %v1645, 0.0
        %v1726 = vmax.f32 %v1646, 0.0
        %v1727 = vmax.f32 %v1647, 0.0
        %v1728 = vmax.f32 %v1648, 0.0
        %v1729 = vmax.f32 %v1649, 0.0
        %v1730 = vmax.f32 %v1650, 0.0
        %v1731 = vmax.f32 %v1651, 0.0
        %v1732 = vmax.f32 %v1652, 0.0
        %v1733 = vmax.f32 %v1653, 0.0
        %v1734 = vmax.f32 %v1654, 0.0
        %v1735 = vmax.f32 %v1655, 0.0
        %v1736 = vmax.f32 %v1656, 0.0
        %v1737 = vmax.f32 %v1657, 0.0
        %v1738 = vmax.f32 %v1658, 0.0
        %v1739 = vmax.f32 %v1659, 0.0
        %v1740 = vmax.f32 %v1660, 0.0
        %v1741 = vmax.f32 %v1661, 0.0
        %v1742 = vmax.f32 %v1662, 0.0
        %v1743 = vmax.f32 %v1663, 0.0
        %v1744 = vmax.f32 %v1664, 0.0
        %v1745 = vpack.c.bf16 %v1666, %v1665
        %v1746 = vpack.c.bf16 %v1668, %v1667
        %v1747 = vpack.c.bf16 %v1670, %v1669
        %v1748 = vpack.c.bf16 %v1672, %v1671
        %v1749 = vpack.c.bf16 %v1674, %v1673
        %v1750 = vpack.c.bf16 %v1676, %v1675
        %v1751 = vpack.c.bf16 %v1678, %v1677
        %v1752 = vpack.c.bf16 %v1680, %v1679
        %v1753 = vpack.c.bf16 %v1682, %v1681
        %v1754 = vpack.c.bf16 %v1684, %v1683
        %v1755 = vpack.c.bf16 %v1686, %v1685
        %v1756 = vpack.c.bf16 %v1688, %v1687
        %v1757 = vpack.c.bf16 %v1690, %v1689
        %v1758 = vpack.c.bf16 %v1692, %v1691
        %v1759 = vpack.c.bf16 %v1694, %v1693
        %v1760 = vpack.c.bf16 %v1696, %v1695
        %v1761 = vpack.c.bf16 %v1698, %v1697
        %v1762 = vpack.c.bf16 %v1700, %v1699
        %v1763 = vpack.c.bf16 %v1702, %v1701
        %v1764 = vpack.c.bf16 %v1704, %v1703
        %v1765 = vpack.c.bf16 %v1706, %v1705
        %v1766 = vpack.c.bf16 %v1708, %v1707
        %v1767 = vpack.c.bf16 %v1710, %v1709
        %v1768 = vpack.c.bf16 %v1712, %v1711
        %v1769 = vpack.c.bf16 %v1714, %v1713
        %v1770 = vpack.c.bf16 %v1716, %v1715
        %v1771 = vpack.c.bf16 %v1718, %v1717
        %v1772 = vpack.c.bf16 %v1720, %v1719
        %v1773 = vpack.c.bf16 %v1722, %v1721
        %v1774 = vpack.c.bf16 %v1724, %v1723
        %v1775 = vpack.c.bf16 %v1726, %v1725
        %v1776 = vpack.c.bf16 %v1728, %v1727
        %v1777 = vpack.c.bf16 %v1730, %v1729
        %v1778 = vpack.c.bf16 %v1732, %v1731
        %v1779 = vpack.c.bf16 %v1734, %v1733
        %v1780 = vpack.c.bf16 %v1736, %v1735
        %v1781 = vpack.c.bf16 %v1738, %v1737
        %v1782 = vpack.c.bf16 %v1740, %v1739
        %v1783 = vpack.c.bf16 %v1742, %v1741
        %v1784 = vpack.c.bf16 %v1744, %v1743
        %v1785 = vld [vmem:[%s9] sm:$0xff]
        %v1786 = vld [vmem:[%s9 + $0x8] sm:$0xff]
        %v1787 = vld [vmem:[%s9 + $0x10] sm:$0xf]
        %v1788 = vld [vmem:[%s9 + $0x14] sm:$0xff]
        %v1789 = vld [vmem:[%s9 + $0x1c] sm:$0xff]
        %v1790 = vld [vmem:[%s9 + $0x24] sm:$0xf]
        %v1791 = vld [vmem:[%s9 + $0x28] sm:$0xff]
        %v1792 = vld [vmem:[%s9 + $0x30] sm:$0xff]
        %v1793 = vld [vmem:[%s9 + $0x38] sm:$0xf]
        %v1794 = vld [vmem:[%s9 + $0x3c] sm:$0xff]
        %v1795 = vld [vmem:[%s9 + $0x44] sm:$0xff]
        %v1796 = vld [vmem:[%s9 + $0x4c] sm:$0xf]
        %v1797 = vld [vmem:[%s9 + $0x50] sm:$0xff]
        %v1798 = vld [vmem:[%s9 + $0x58] sm:$0xff]
        %v1799 = vld [vmem:[%s9 + $0x60] sm:$0xf]
        %v1800 = vld [vmem:[%s9 + $0x64] sm:$0xff]
        %v1801 = vld [vmem:[%s9 + $0x6c] sm:$0xff]
        %v1802 = vld [vmem:[%s9 + $0x74] sm:$0xf]
        %v1803 = vld [vmem:[%s9 + $0x78] sm:$0xff]
        %v1804 = vld [vmem:[%s9 + $0x80] sm:$0xff]
        %v1805 = vld [vmem:[%s9 + $0x88] sm:$0xf]
        %v1806 = vld [vmem:[%s9 + $0x8c] sm:$0xff]
        %v1807 = vld [vmem:[%s9 + $0x94] sm:$0xff]
        %v1808 = vld [vmem:[%s9 + $0x9c] sm:$0xf]
        %v1809 = vld [vmem:[%s9 + $0xa0] sm:$0xff]
        %v1810 = vld [vmem:[%s9 + $0xa8] sm:$0xff]
        %v1811 = vld [vmem:[%s9 + $0xb0] sm:$0xf]
        %v1812 = vld [vmem:[%s9 + $0xb4] sm:$0xff]
        %v1813 = vld [vmem:[%s9 + $0xbc] sm:$0xff]
        %v1814 = vld [vmem:[%s9 + $0xc4] sm:$0xf]
        %v1815 = vld [vmem:[%s9 + $0xc8] sm:$0xff]
        %v1816 = vld [vmem:[%s9 + $0xd0] sm:$0xff]
        %v1817 = vld [vmem:[%s9 + $0xd8] sm:$0xf]
        %v1818 = vld [vmem:[%s9 + $0xdc] sm:$0xff]
        %v1819 = vld [vmem:[%s9 + $0xe4] sm:$0xff]
        %v1820 = vld [vmem:[%s9 + $0xec] sm:$0xf]
        %v1821 = vld [vmem:[%s9 + $0xf0] sm:$0xff]
        %v1822 = vld [vmem:[%s9 + $0xf8] sm:$0xff]
        %v1823 = vld [vmem:[%s9 + $0x100] sm:$0xf]
        %v1824 = vld [vmem:[%s9 + $0x104] sm:$0xff]
        %v1825 = vld [vmem:[%s9 + $0x10c] sm:$0xff]
        %v1826 = vld [vmem:[%s9 + $0x114] sm:$0xf]
        %v1827 = vld [vmem:[%s9 + $0x118] sm:$0xff]
        %v1828 = vld [vmem:[%s9 + $0x120] sm:$0xff]
        %v1829 = vld [vmem:[%s9 + $0x128] sm:$0xf]
        %v1830 = vld [vmem:[%s9 + $0x12c] sm:$0xff]
        %v1831 = vld [vmem:[%s9 + $0x134] sm:$0xff]
        %v1832 = vld [vmem:[%s9 + $0x13c] sm:$0xf]
        %v1833 = vld [vmem:[%s9 + $0x140] sm:$0xff]
        %v1834 = vld [vmem:[%s9 + $0x148] sm:$0xff]
        %v1835 = vld [vmem:[%s9 + $0x150] sm:$0xf]
        %v1836 = vld [vmem:[%s9 + $0x154] sm:$0xff]
        %v1837 = vld [vmem:[%s9 + $0x15c] sm:$0xff]
        %v1838 = vld [vmem:[%s9 + $0x164] sm:$0xf]
        %v1839 = vld [vmem:[%s9 + $0x168] sm:$0xff]
        %v1840 = vld [vmem:[%s9 + $0x170] sm:$0xff]
        %v1841 = vld [vmem:[%s9 + $0x178] sm:$0xf]
        %v1842 = vld [vmem:[%s9 + $0x17c] sm:$0xff]
        %v1843 = vld [vmem:[%s9 + $0x184] sm:$0xff]
        %v1844 = vld [vmem:[%s9 + $0x18c] sm:$0xf]
        %v1845 = vld [vmem:[%s9 + $0x190] sm:$0xff]
        %v1846 = vld [vmem:[%s9 + $0x198] sm:$0xff]
        %v1847 = vld [vmem:[%s9 + $0x1a0] sm:$0xf]
        %v1848 = vld [vmem:[%s9 + $0x1a4] sm:$0xff]
        %v1849 = vld [vmem:[%s9 + $0x1ac] sm:$0xff]
        %v1850 = vld [vmem:[%s9 + $0x1b4] sm:$0xf]
        %v1851 = vld [vmem:[%s9 + $0x1b8] sm:$0xff]
        %v1852 = vld [vmem:[%s9 + $0x1c0] sm:$0xff]
        %v1853 = vld [vmem:[%s9 + $0x1c8] sm:$0xf]
        %v1854 = vld [vmem:[%s9 + $0x1cc] sm:$0xff]
        %v1855 = vld [vmem:[%s9 + $0x1d4] sm:$0xff]
        %v1856 = vld [vmem:[%s9 + $0x1dc] sm:$0xf]
        %v1857 = vld [vmem:[%s9 + $0x1e0] sm:$0xff]
        %v1858 = vld [vmem:[%s9 + $0x1e8] sm:$0xff]
        %v1859 = vld [vmem:[%s9 + $0x1f0] sm:$0xf]
        %v1860 = vld [vmem:[%s9 + $0x1f4] sm:$0xff]
        %v1861 = vld [vmem:[%s9 + $0x1fc] sm:$0xff]
        %v1862 = vld [vmem:[%s9 + $0x204] sm:$0xf]
        %v1863 = vld [vmem:[%s9 + $0x208] sm:$0xff]
        %v1864 = vld [vmem:[%s9 + $0x210] sm:$0xff]
        %v1865 = vld [vmem:[%s9 + $0x218] sm:$0xf]
        %v1866 = vld [vmem:[%s9 + $0x21c] sm:$0xff]
        %v1867 = vld [vmem:[%s9 + $0x224] sm:$0xff]
        %v1868 = vld [vmem:[%s9 + $0x22c] sm:$0xf]
        %v1869 = vld [vmem:[%s9 + $0x230] sm:$0xff]
        %v1870 = vld [vmem:[%s9 + $0x238] sm:$0xff]
        %v1871 = vld [vmem:[%s9 + $0x240] sm:$0xf]
        %v1872 = vld [vmem:[%s9 + $0x244] sm:$0xff]
        %v1873 = vld [vmem:[%s9 + $0x24c] sm:$0xff]
        %v1874 = vld [vmem:[%s9 + $0x254] sm:$0xf]
        %v1875 = vld [vmem:[%s9 + $0x258] sm:$0xff]
        %v1876 = vld [vmem:[%s9 + $0x260] sm:$0xff]
        %v1877 = vld [vmem:[%s9 + $0x268] sm:$0xf]
        %v1878 = vld [vmem:[%s9 + $0x26c] sm:$0xff]
        %v1879 = vld [vmem:[%s9 + $0x274] sm:$0xff]
        %v1880 = vld [vmem:[%s9 + $0x27c] sm:$0xf]
        %v1881 = vld [vmem:[%s10] sm:$0xff]
        %v1882 = vld [vmem:[%s10 + $0x8] sm:$0xff]
        %v1883 = vld [vmem:[%s10 + $0x10] sm:$0xff]
        %v1884 = vld [vmem:[%s10 + $0x18] sm:$0xff]
        %v1885 = vld [vmem:[%s10 + $0x20] sm:$0xff]
        %v1886 = vld [vmem:[%s10 + $0x28] sm:$0xff]
        %v1887 = vld [vmem:[%s10 + $0x30] sm:$0xff]
        %v1888 = vld [vmem:[%s10 + $0x38] sm:$0xff]
        %v1889 = vld [vmem:[%s10 + $0x40] sm:$0xff]
        %v1890 = vld [vmem:[%s10 + $0x48] sm:$0xff]
        %v1891 = vld [vmem:[%s10 + $0x50] sm:$0xff]
        %v1892 = vld [vmem:[%s10 + $0x58] sm:$0xff]
        %v1893 = vld [vmem:[%s10 + $0x60] sm:$0xff]
        %v1894 = vld [vmem:[%s10 + $0x68] sm:$0xff]
        %v1895 = vld [vmem:[%s10 + $0x70] sm:$0xff]
        %v1896 = vld [vmem:[%s10 + $0x78] sm:$0xff]
        %v1897 = vld [vmem:[%s10 + $0x80] sm:$0xff]
        %v1898 = vld [vmem:[%s10 + $0x88] sm:$0xff]
        %v1899 = vld [vmem:[%s10 + $0x90] sm:$0xff]
        %v1900 = vld [vmem:[%s10 + $0x98] sm:$0xff]
        %v1901 = vld [vmem:[%s10 + $0xa0] sm:$0xff]
        %v1902 = vld [vmem:[%s10 + $0xa8] sm:$0xff]
        %v1903 = vld [vmem:[%s10 + $0xb0] sm:$0xff]
        %v1904 = vld [vmem:[%s10 + $0xb8] sm:$0xff]
        %v1905 = vld [vmem:[%s10 + $0xc0] sm:$0xff]
        %v1906 = vld [vmem:[%s10 + $0xc8] sm:$0xff]
        %v1907 = vld [vmem:[%s10 + $0xd0] sm:$0xff]
        %v1908 = vld [vmem:[%s10 + $0xd8] sm:$0xff]
        %v1909 = vld [vmem:[%s10 + $0xe0] sm:$0xff]
        %v1910 = vld [vmem:[%s10 + $0xe8] sm:$0xff]
        %v1911 = vld [vmem:[%s10 + $0xf0] sm:$0xff]
        %v1912 = vld [vmem:[%s10 + $0xf8] sm:$0xff]
        %1914 = vset.pattern.permute.xlu0 0
        %1915 = vperm.xlu0 %1914, %v1881
        %v1916 = vpop.permute.xlu0 %1915
        %1919 = vset.pattern.permute.xlu0 0
        %1920 = vperm.xlu0 %1919, %v1882
        %v1921 = vpop.permute.xlu0 %1920
        %1924 = vset.pattern.permute.xlu0 0
        %1925 = vperm.xlu0 %1924, %v1883
        %v1926 = vpop.permute.xlu0 %1925
        %1929 = vset.pattern.permute.xlu0 0
        %1930 = vperm.xlu0 %1929, %v1884
        %v1931 = vpop.permute.xlu0 %1930
        %1934 = vset.pattern.permute.xlu0 0
        %1935 = vperm.xlu0 %1934, %v1885
        %v1936 = vpop.permute.xlu0 %1935
        %1939 = vset.pattern.permute.xlu0 0
        %1940 = vperm.xlu0 %1939, %v1886
        %v1941 = vpop.permute.xlu0 %1940
        %1944 = vset.pattern.permute.xlu0 0
        %1945 = vperm.xlu0 %1944, %v1887
        %v1946 = vpop.permute.xlu0 %1945
        %1949 = vset.pattern.permute.xlu0 0
        %1950 = vperm.xlu0 %1949, %v1888
        %v1951 = vpop.permute.xlu0 %1950
        %1954 = vset.pattern.permute.xlu0 0
        %1955 = vperm.xlu0 %1954, %v1889
        %v1956 = vpop.permute.xlu0 %1955
        %1959 = vset.pattern.permute.xlu0 0
        %1960 = vperm.xlu0 %1959, %v1890
        %v1961 = vpop.permute.xlu0 %1960
        %1964 = vset.pattern.permute.xlu0 0
        %1965 = vperm.xlu0 %1964, %v1891
        %v1966 = vpop.permute.xlu0 %1965
        %1969 = vset.pattern.permute.xlu0 0
        %1970 = vperm.xlu0 %1969, %v1892
        %v1971 = vpop.permute.xlu0 %1970
        %1974 = vset.pattern.permute.xlu0 0
        %1975 = vperm.xlu0 %1974, %v1893
        %v1976 = vpop.permute.xlu0 %1975
        %1979 = vset.pattern.permute.xlu0 0
        %1980 = vperm.xlu0 %1979, %v1894
        %v1981 = vpop.permute.xlu0 %1980
        %1984 = vset.pattern.permute.xlu0 0
        %1985 = vperm.xlu0 %1984, %v1895
        %v1986 = vpop.permute.xlu0 %1985
        %1989 = vset.pattern.permute.xlu0 0
        %1990 = vperm.xlu0 %1989, %v1896
        %v1991 = vpop.permute.xlu0 %1990
        %1994 = vset.pattern.permute.xlu0 0
        %1995 = vperm.xlu0 %1994, %v1897
        %v1996 = vpop.permute.xlu0 %1995
        %1999 = vset.pattern.permute.xlu0 0
        %2000 = vperm.xlu0 %1999, %v1898
        %v2001 = vpop.permute.xlu0 %2000
        %2004 = vset.pattern.permute.xlu0 0
        %2005 = vperm.xlu0 %2004, %v1899
        %v2006 = vpop.permute.xlu0 %2005
        %2009 = vset.pattern.permute.xlu0 0
        %2010 = vperm.xlu0 %2009, %v1900
        %v2011 = vpop.permute.xlu0 %2010
        %2014 = vset.pattern.permute.xlu0 0
        %2015 = vperm.xlu0 %2014, %v1901
        %v2016 = vpop.permute.xlu0 %2015
        %2019 = vset.pattern.permute.xlu0 0
        %2020 = vperm.xlu0 %2019, %v1902
        %v2021 = vpop.permute.xlu0 %2020
        %2024 = vset.pattern.permute.xlu0 0
        %2025 = vperm.xlu0 %2024, %v1903
        %v2026 = vpop.permute.xlu0 %2025
        %2029 = vset.pattern.permute.xlu0 0
        %2030 = vperm.xlu0 %2029, %v1904
        %v2031 = vpop.permute.xlu0 %2030
        %2034 = vset.pattern.permute.xlu0 0
        %2035 = vperm.xlu0 %2034, %v1905
        %v2036 = vpop.permute.xlu0 %2035
        %2039 = vset.pattern.permute.xlu0 0
        %2040 = vperm.xlu0 %2039, %v1906
        %v2041 = vpop.permute.xlu0 %2040
        %2044 = vset.pattern.permute.xlu0 0
        %2045 = vperm.xlu0 %2044, %v1907
        %v2046 = vpop.permute.xlu0 %2045
        %2049 = vset.pattern.permute.xlu0 0
        %2050 = vperm.xlu0 %2049, %v1908
        %v2051 = vpop.permute.xlu0 %2050
        %2054 = vset.pattern.permute.xlu0 0
        %2055 = vperm.xlu0 %2054, %v1909
        %v2056 = vpop.permute.xlu0 %2055
        %2059 = vset.pattern.permute.xlu0 0
        %2060 = vperm.xlu0 %2059, %v1910
        %v2061 = vpop.permute.xlu0 %2060
        %2064 = vset.pattern.permute.xlu0 0
        %2065 = vperm.xlu0 %2064, %v1911
        %v2066 = vpop.permute.xlu0 %2065
        %2069 = vset.pattern.permute.xlu0 0
        %2070 = vperm.xlu0 %2069, %v1912
        %v2071 = vpop.permute.xlu0 %2070
        %v2169 = vunpack.c.l.b16 %v1785
        %v2170 = vunpack.c.h.b16 %v1785
        %v2171 = vunpack.c.l.b16 %v1786
        %v2172 = vunpack.c.h.b16 %v1786
        %v2173 = vunpack.c.l.b16 %v1787
        %v2174 = vunpack.c.l.b16 %v1788
        %v2175 = vunpack.c.h.b16 %v1788
        %v2176 = vunpack.c.l.b16 %v1789
        %v2177 = vunpack.c.h.b16 %v1789
        %v2178 = vunpack.c.l.b16 %v1790
        %v2179 = vunpack.c.l.b16 %v1791
        %v2180 = vunpack.c.h.b16 %v1791
        %v2181 = vunpack.c.l.b16 %v1792
        %v2182 = vunpack.c.h.b16 %v1792
        %v2183 = vunpack.c.l.b16 %v1793
        %v2184 = vunpack.c.l.b16 %v1794
        %v2185 = vunpack.c.h.b16 %v1794
        %v2186 = vunpack.c.l.b16 %v1795
        %v2187 = vunpack.c.h.b16 %v1795
        %v2188 = vunpack.c.l.b16 %v1796
        %v2189 = vunpack.c.l.b16 %v1797
        %v2190 = vunpack.c.h.b16 %v1797
        %v2191 = vunpack.c.l.b16 %v1798
        %v2192 = vunpack.c.h.b16 %v1798
        %v2193 = vunpack.c.l.b16 %v1799
        %v2194 = vunpack.c.l.b16 %v1800
        %v2195 = vunpack.c.h.b16 %v1800
        %v2196 = vunpack.c.l.b16 %v1801
        %v2197 = vunpack.c.h.b16 %v1801
        %v2198 = vunpack.c.l.b16 %v1802
        %v2199 = vunpack.c.l.b16 %v1803
        %v2200 = vunpack.c.h.b16 %v1803
        %v2201 = vunpack.c.l.b16 %v1804
        %v2202 = vunpack.c.h.b16 %v1804
        %v2203 = vunpack.c.l.b16 %v1805
        %v2204 = vunpack.c.l.b16 %v1806
        %v2205 = vunpack.c.h.b16 %v1806
        %v2206 = vunpack.c.l.b16 %v1807
        %v2207 = vunpack.c.h.b16 %v1807
        %v2208 = vunpack.c.l.b16 %v1808
        %v2209 = vunpack.c.l.b16 %v1809
        %v2210 = vunpack.c.h.b16 %v1809
        %v2211 = vunpack.c.l.b16 %v1810
        %v2212 = vunpack.c.h.b16 %v1810
        %v2213 = vunpack.c.l.b16 %v1811
        %v2214 = vunpack.c.l.b16 %v1812
        %v2215 = vunpack.c.h.b16 %v1812
        %v2216 = vunpack.c.l.b16 %v1813
        %v2217 = vunpack.c.h.b16 %v1813
        %v2218 = vunpack.c.l.b16 %v1814
        %v2219 = vunpack.c.l.b16 %v1815
        %v2220 = vunpack.c.h.b16 %v1815
        %v2221 = vunpack.c.l.b16 %v1816
        %v2222 = vunpack.c.h.b16 %v1816
        %v2223 = vunpack.c.l.b16 %v1817
        %v2224 = vunpack.c.l.b16 %v1818
        %v2225 = vunpack.c.h.b16 %v1818
        %v2226 = vunpack.c.l.b16 %v1819
        %v2227 = vunpack.c.h.b16 %v1819
        %v2228 = vunpack.c.l.b16 %v1820
        %v2229 = vunpack.c.l.b16 %v1821
        %v2230 = vunpack.c.h.b16 %v1821
        %v2231 = vunpack.c.l.b16 %v1822
        %v2232 = vunpack.c.h.b16 %v1822
        %v2233 = vunpack.c.l.b16 %v1823
        %v2234 = vunpack.c.l.b16 %v1824
        %v2235 = vunpack.c.h.b16 %v1824
        %v2236 = vunpack.c.l.b16 %v1825
        %v2237 = vunpack.c.h.b16 %v1825
        %v2238 = vunpack.c.l.b16 %v1826
        %v2239 = vunpack.c.l.b16 %v1827
        %v2240 = vunpack.c.h.b16 %v1827
        %v2241 = vunpack.c.l.b16 %v1828
        %v2242 = vunpack.c.h.b16 %v1828
        %v2243 = vunpack.c.l.b16 %v1829
        %v2244 = vunpack.c.l.b16 %v1830
        %v2245 = vunpack.c.h.b16 %v1830
        %v2246 = vunpack.c.l.b16 %v1831
        %v2247 = vunpack.c.h.b16 %v1831
        %v2248 = vunpack.c.l.b16 %v1832
        %v2249 = vunpack.c.l.b16 %v1833
        %v2250 = vunpack.c.h.b16 %v1833
        %v2251 = vunpack.c.l.b16 %v1834
        %v2252 = vunpack.c.h.b16 %v1834
        %v2253 = vunpack.c.l.b16 %v1835
        %v2254 = vunpack.c.l.b16 %v1836
        %v2255 = vunpack.c.h.b16 %v1836
        %v2256 = vunpack.c.l.b16 %v1837
        %v2257 = vunpack.c.h.b16 %v1837
        %v2258 = vunpack.c.l.b16 %v1838
        %v2259 = vunpack.c.l.b16 %v1839
        %v2260 = vunpack.c.h.b16 %v1839
        %v2261 = vunpack.c.l.b16 %v1840
        %v2262 = vunpack.c.h.b16 %v1840
        %v2263 = vunpack.c.l.b16 %v1841
        %v2264 = vunpack.c.l.b16 %v1842
        %v2265 = vunpack.c.h.b16 %v1842
        %v2266 = vunpack.c.l.b16 %v1843
        %v2267 = vunpack.c.h.b16 %v1843
        %v2268 = vunpack.c.l.b16 %v1844
        %v2269 = vunpack.c.l.b16 %v1845
        %v2270 = vunpack.c.h.b16 %v1845
        %v2271 = vunpack.c.l.b16 %v1846
        %v2272 = vunpack.c.h.b16 %v1846
        %v2273 = vunpack.c.l.b16 %v1847
        %v2274 = vunpack.c.l.b16 %v1848
        %v2275 = vunpack.c.h.b16 %v1848
        %v2276 = vunpack.c.l.b16 %v1849
        %v2277 = vunpack.c.h.b16 %v1849
        %v2278 = vunpack.c.l.b16 %v1850
        %v2279 = vunpack.c.l.b16 %v1851
        %v2280 = vunpack.c.h.b16 %v1851
        %v2281 = vunpack.c.l.b16 %v1852
        %v2282 = vunpack.c.h.b16 %v1852
        %v2283 = vunpack.c.l.b16 %v1853
        %v2284 = vunpack.c.l.b16 %v1854
        %v2285 = vunpack.c.h.b16 %v1854
        %v2286 = vunpack.c.l.b16 %v1855
        %v2287 = vunpack.c.h.b16 %v1855
        %v2288 = vunpack.c.l.b16 %v1856
        %v2289 = vunpack.c.l.b16 %v1857
        %v2290 = vunpack.c.h.b16 %v1857
        %v2291 = vunpack.c.l.b16 %v1858
        %v2292 = vunpack.c.h.b16 %v1858
        %v2293 = vunpack.c.l.b16 %v1859
        %v2294 = vunpack.c.l.b16 %v1860
        %v2295 = vunpack.c.h.b16 %v1860
        %v2296 = vunpack.c.l.b16 %v1861
        %v2297 = vunpack.c.h.b16 %v1861
        %v2298 = vunpack.c.l.b16 %v1862
        %v2299 = vunpack.c.l.b16 %v1863
        %v2300 = vunpack.c.h.b16 %v1863
        %v2301 = vunpack.c.l.b16 %v1864
        %v2302 = vunpack.c.h.b16 %v1864
        %v2303 = vunpack.c.l.b16 %v1865
        %v2304 = vunpack.c.l.b16 %v1866
        %v2305 = vunpack.c.h.b16 %v1866
        %v2306 = vunpack.c.l.b16 %v1867
        %v2307 = vunpack.c.h.b16 %v1867
        %v2308 = vunpack.c.l.b16 %v1868
        %v2309 = vunpack.c.l.b16 %v1869
        %v2310 = vunpack.c.h.b16 %v1869
        %v2311 = vunpack.c.l.b16 %v1870
        %v2312 = vunpack.c.h.b16 %v1870
        %v2313 = vunpack.c.l.b16 %v1871
        %v2314 = vunpack.c.l.b16 %v1872
        %v2315 = vunpack.c.h.b16 %v1872
        %v2316 = vunpack.c.l.b16 %v1873
        %v2317 = vunpack.c.h.b16 %v1873
        %v2318 = vunpack.c.l.b16 %v1874
        %v2319 = vunpack.c.l.b16 %v1875
        %v2320 = vunpack.c.h.b16 %v1875
        %v2321 = vunpack.c.l.b16 %v1876
        %v2322 = vunpack.c.h.b16 %v1876
        %v2323 = vunpack.c.l.b16 %v1877
        %v2324 = vunpack.c.l.b16 %v1878
        %v2325 = vunpack.c.h.b16 %v1878
        %v2326 = vunpack.c.l.b16 %v1879
        %v2327 = vunpack.c.h.b16 %v1879
        %v2328 = vunpack.c.l.b16 %v1880
        %v2329 = vpack.c.b16 %v2174, %v2169
        %v2330 = vpack.c.b16 %v2175, %v2170
        %v2331 = vpack.c.b16 %v2176, %v2171
        %v2332 = vpack.c.b16 %v2177, %v2172
        %v2333 = vpack.c.b16 %v2178, %v2173
        %v2334 = vpack.c.b16 %v2184, %v2179
        %v2335 = vpack.c.b16 %v2185, %v2180
        %v2336 = vpack.c.b16 %v2186, %v2181
        %v2337 = vpack.c.b16 %v2187, %v2182
        %v2338 = vpack.c.b16 %v2188, %v2183
        %v2339 = vpack.c.b16 %v2194, %v2189
        %v2340 = vpack.c.b16 %v2195, %v2190
        %v2341 = vpack.c.b16 %v2196, %v2191
        %v2342 = vpack.c.b16 %v2197, %v2192
        %v2343 = vpack.c.b16 %v2198, %v2193
        %v2344 = vpack.c.b16 %v2204, %v2199
        %v2345 = vpack.c.b16 %v2205, %v2200
        %v2346 = vpack.c.b16 %v2206, %v2201
        %v2347 = vpack.c.b16 %v2207, %v2202
        %v2348 = vpack.c.b16 %v2208, %v2203
        %v2349 = vpack.c.b16 %v2214, %v2209
        %v2350 = vpack.c.b16 %v2215, %v2210
        %v2351 = vpack.c.b16 %v2216, %v2211
        %v2352 = vpack.c.b16 %v2217, %v2212
        %v2353 = vpack.c.b16 %v2218, %v2213
        %v2354 = vpack.c.b16 %v2224, %v2219
        %v2355 = vpack.c.b16 %v2225, %v2220
        %v2356 = vpack.c.b16 %v2226, %v2221
        %v2357 = vpack.c.b16 %v2227, %v2222
        %v2358 = vpack.c.b16 %v2228, %v2223
        %v2359 = vpack.c.b16 %v2234, %v2229
        %v2360 = vpack.c.b16 %v2235, %v2230
        %v2361 = vpack.c.b16 %v2236, %v2231
        %v2362 = vpack.c.b16 %v2237, %v2232
        %v2363 = vpack.c.b16 %v2238, %v2233
        %v2364 = vpack.c.b16 %v2244, %v2239
        %v2365 = vpack.c.b16 %v2245, %v2240
        %v2366 = vpack.c.b16 %v2246, %v2241
        %v2367 = vpack.c.b16 %v2247, %v2242
        %v2368 = vpack.c.b16 %v2248, %v2243
        %v2369 = vpack.c.b16 %v2254, %v2249
        %v2370 = vpack.c.b16 %v2255, %v2250
        %v2371 = vpack.c.b16 %v2256, %v2251
        %v2372 = vpack.c.b16 %v2257, %v2252
        %v2373 = vpack.c.b16 %v2258, %v2253
        %v2374 = vpack.c.b16 %v2264, %v2259
        %v2375 = vpack.c.b16 %v2265, %v2260
        %v2376 = vpack.c.b16 %v2266, %v2261
        %v2377 = vpack.c.b16 %v2267, %v2262
        %v2378 = vpack.c.b16 %v2268, %v2263
        %v2379 = vpack.c.b16 %v2274, %v2269
        %v2380 = vpack.c.b16 %v2275, %v2270
        %v2381 = vpack.c.b16 %v2276, %v2271
        %v2382 = vpack.c.b16 %v2277, %v2272
        %v2383 = vpack.c.b16 %v2278, %v2273
        %v2384 = vpack.c.b16 %v2284, %v2279
        %v2385 = vpack.c.b16 %v2285, %v2280
        %v2386 = vpack.c.b16 %v2286, %v2281
        %v2387 = vpack.c.b16 %v2287, %v2282
        %v2388 = vpack.c.b16 %v2288, %v2283
        %v2389 = vpack.c.b16 %v2294, %v2289
        %v2390 = vpack.c.b16 %v2295, %v2290
        %v2391 = vpack.c.b16 %v2296, %v2291
        %v2392 = vpack.c.b16 %v2297, %v2292
        %v2393 = vpack.c.b16 %v2298, %v2293
        %v2394 = vpack.c.b16 %v2304, %v2299
        %v2395 = vpack.c.b16 %v2305, %v2300
        %v2396 = vpack.c.b16 %v2306, %v2301
        %v2397 = vpack.c.b16 %v2307, %v2302
        %v2398 = vpack.c.b16 %v2308, %v2303
        %v2399 = vpack.c.b16 %v2314, %v2309
        %v2400 = vpack.c.b16 %v2315, %v2310
        %v2401 = vpack.c.b16 %v2316, %v2311
        %v2402 = vpack.c.b16 %v2317, %v2312
        %v2403 = vpack.c.b16 %v2318, %v2313
        %v2404 = vpack.c.b16 %v2324, %v2319
        %v2405 = vpack.c.b16 %v2325, %v2320
        %v2406 = vpack.c.b16 %v2326, %v2321
        %v2407 = vpack.c.b16 %v2327, %v2322
        %v2408 = vpack.c.b16 %v2328, %v2323
        %2489 = vmatprep.subr.bf16.mxu0 0
        %2490 = vmatpush1.bf16.msra.mxu0 %v1752
        %2491 = vmatprep.subr.bf16.mxu0 0
        %2492 = vmatpush1.bf16.msra.mxu0 %v1751
        %2493 = vmatprep.subr.bf16.mxu0 0
        %2494 = vmatpush1.bf16.msra.mxu0 %v1750
        %2495 = vmatprep.subr.bf16.mxu0 0
        %2496 = vmatpush1.bf16.msra.mxu0 %v1749
        %2497 = vmatprep.subr.bf16.mxu0 0
        %2498 = vmatpush1.bf16.msra.mxu0 %v1748
        %2499 = vmatprep.subr.bf16.mxu0 0
        %2500 = vmatpush1.bf16.msra.mxu0 %v1747
        %2501 = vmatprep.subr.bf16.mxu0 0
        %2502 = vmatpush1.bf16.msra.mxu0 %v1746
        %2503 = vmatprep.subr.bf16.mxu0 0
        %2504 = vmatpush1.bf16.msra.mxu0 %v1745
        %2505 = vmatprep.subr.bf16.mxu0 0
        %2506 = vmatpush2.bf16.msra.mxu0 %v1760
        %2507 = vmatprep.subr.bf16.mxu0 0
        %2508 = vmatpush2.bf16.msra.mxu0 %v1759
        %2509 = vmatprep.subr.bf16.mxu0 0
        %2510 = vmatpush2.bf16.msra.mxu0 %v1758
        %2511 = vmatprep.subr.bf16.mxu0 0
        %2512 = vmatpush2.bf16.msra.mxu0 %v1757
        %2513 = vmatprep.subr.bf16.mxu0 0
        %2514 = vmatpush2.bf16.msra.mxu0 %v1756
        %2515 = vmatprep.subr.bf16.mxu0 0
        %2516 = vmatpush2.bf16.msra.mxu0 %v1755
        %2517 = vmatprep.subr.bf16.mxu0 0
        %2518 = vmatpush2.bf16.msra.mxu0 %v1754
        %2519 = vmatprep.subr.bf16.mxu0 0
        %2520 = vmatpush2.bf16.msra.mxu0 %v1753
        %2521 = vmatprep.mubr.bf16.mxu0 %v2330
        %2522 = vmatmul.mubr.bf16.gmra.mxu0 %v2329
        %v2523 = vpop.f32.mrf.mxu0
        %v2524 = vadd.f32 %v1916, %v2523
        %v2525 = vpop.f32.mrf.mxu0
        %v2526 = vpop.f32.mrf.mxu0
        %v2527 = vadd.f32 %v1921, %v2526
        %v2528 = vpop.f32.mrf.mxu0
        %2529 = vmatprep.mubr.bf16.mxu0 %v2335
        %2530 = vmatmul.mubr.bf16.gmra.mxu0 %v2334
        %v2531 = vpop.f32.mrf.mxu0
        %v2532 = vadd.f32 %v1926, %v2531
        %v2533 = vpop.f32.mrf.mxu0
        %v2534 = vpop.f32.mrf.mxu0
        %v2535 = vadd.f32 %v1931, %v2534
        %v2536 = vpop.f32.mrf.mxu0
        %2537 = vmatprep.mubr.bf16.mxu0 %v2340
        %2538 = vmatmul.mubr.bf16.gmra.mxu0 %v2339
        %v2539 = vpop.f32.mrf.mxu0
        %v2540 = vadd.f32 %v1936, %v2539
        %v2541 = vpop.f32.mrf.mxu0
        %v2542 = vpop.f32.mrf.mxu0
        %v2543 = vadd.f32 %v1941, %v2542
        %v2544 = vpop.f32.mrf.mxu0
        %2545 = vmatprep.mubr.bf16.mxu0 %v2345
        %2546 = vmatmul.mubr.bf16.gmra.mxu0 %v2344
        %v2547 = vpop.f32.mrf.mxu0
        %v2548 = vadd.f32 %v1946, %v2547
        %v2549 = vpop.f32.mrf.mxu0
        %v2550 = vpop.f32.mrf.mxu0
        %v2551 = vadd.f32 %v1951, %v2550
        %v2552 = vpop.f32.mrf.mxu0
        %2553 = vmatprep.mubr.bf16.mxu0 %v2350
        %2554 = vmatmul.mubr.bf16.gmra.mxu0 %v2349
        %v2555 = vpop.f32.mrf.mxu0
        %v2556 = vadd.f32 %v1956, %v2555
        %v2557 = vpop.f32.mrf.mxu0
        %v2558 = vpop.f32.mrf.mxu0
        %v2559 = vadd.f32 %v1961, %v2558
        %v2560 = vpop.f32.mrf.mxu0
        %2561 = vmatprep.mubr.bf16.mxu0 %v2355
        %2562 = vmatmul.mubr.bf16.gmra.mxu0 %v2354
        %v2563 = vpop.f32.mrf.mxu0
        %v2564 = vadd.f32 %v1966, %v2563
        %v2565 = vpop.f32.mrf.mxu0
        %v2566 = vpop.f32.mrf.mxu0
        %v2567 = vadd.f32 %v1971, %v2566
        %v2568 = vpop.f32.mrf.mxu0
        %2569 = vmatprep.mubr.bf16.mxu0 %v2360
        %2570 = vmatmul.mubr.bf16.gmra.mxu0 %v2359
        %v2571 = vpop.f32.mrf.mxu0
        %v2572 = vadd.f32 %v1976, %v2571
        %v2573 = vpop.f32.mrf.mxu0
        %v2574 = vpop.f32.mrf.mxu0
        %v2575 = vadd.f32 %v1981, %v2574
        %v2576 = vpop.f32.mrf.mxu0
        %2577 = vmatprep.mubr.bf16.mxu0 %v2365
        %2578 = vmatmul.mubr.bf16.gmra.mxu0 %v2364
        %v2579 = vpop.f32.mrf.mxu0
        %v2580 = vadd.f32 %v1986, %v2579
        %v2581 = vpop.f32.mrf.mxu0
        %v2582 = vpop.f32.mrf.mxu0
        %v2583 = vadd.f32 %v1991, %v2582
        %v2584 = vpop.f32.mrf.mxu0
        %2585 = vmatprep.mubr.bf16.mxu0 %v2370
        %2586 = vmatmul.mubr.bf16.gmra.mxu0 %v2369
        %v2587 = vpop.f32.mrf.mxu0
        %v2588 = vadd.f32 %v1996, %v2587
        %v2589 = vpop.f32.mrf.mxu0
        %v2590 = vpop.f32.mrf.mxu0
        %v2591 = vadd.f32 %v2001, %v2590
        %v2592 = vpop.f32.mrf.mxu0
        %2593 = vmatprep.mubr.bf16.mxu0 %v2375
        %2594 = vmatmul.mubr.bf16.gmra.mxu0 %v2374
        %v2595 = vpop.f32.mrf.mxu0
        %v2596 = vadd.f32 %v2006, %v2595
        %v2597 = vpop.f32.mrf.mxu0
        %v2598 = vpop.f32.mrf.mxu0
        %v2599 = vadd.f32 %v2011, %v2598
        %v2600 = vpop.f32.mrf.mxu0
        %2601 = vmatprep.mubr.bf16.mxu0 %v2380
        %2602 = vmatmul.mubr.bf16.gmra.mxu0 %v2379
        %v2603 = vpop.f32.mrf.mxu0
        %v2604 = vadd.f32 %v2016, %v2603
        %v2605 = vpop.f32.mrf.mxu0
        %v2606 = vpop.f32.mrf.mxu0
        %v2607 = vadd.f32 %v2021, %v2606
        %v2608 = vpop.f32.mrf.mxu0
        %2609 = vmatprep.mubr.bf16.mxu0 %v2385
        %2610 = vmatmul.mubr.bf16.gmra.mxu0 %v2384
        %v2611 = vpop.f32.mrf.mxu0
        %v2612 = vadd.f32 %v2026, %v2611
        %v2613 = vpop.f32.mrf.mxu0
        %v2614 = vpop.f32.mrf.mxu0
        %v2615 = vadd.f32 %v2031, %v2614
        %v2616 = vpop.f32.mrf.mxu0
        %2617 = vmatprep.mubr.bf16.mxu0 %v2390
        %2618 = vmatmul.mubr.bf16.gmra.mxu0 %v2389
        %v2619 = vpop.f32.mrf.mxu0
        %v2620 = vadd.f32 %v2036, %v2619
        %v2621 = vpop.f32.mrf.mxu0
        %v2622 = vpop.f32.mrf.mxu0
        %v2623 = vadd.f32 %v2041, %v2622
        %v2624 = vpop.f32.mrf.mxu0
        %2625 = vmatprep.mubr.bf16.mxu0 %v2395
        %2626 = vmatmul.mubr.bf16.gmra.mxu0 %v2394
        %v2627 = vpop.f32.mrf.mxu0
        %v2628 = vadd.f32 %v2046, %v2627
        %v2629 = vpop.f32.mrf.mxu0
        %v2630 = vpop.f32.mrf.mxu0
        %v2631 = vadd.f32 %v2051, %v2630
        %v2632 = vpop.f32.mrf.mxu0
        %2633 = vmatprep.mubr.bf16.mxu0 %v2400
        %2634 = vmatmul.mubr.bf16.gmra.mxu0 %v2399
        %v2635 = vpop.f32.mrf.mxu0
        %v2636 = vadd.f32 %v2056, %v2635
        %v2637 = vpop.f32.mrf.mxu0
        %v2638 = vpop.f32.mrf.mxu0
        %v2639 = vadd.f32 %v2061, %v2638
        %v2640 = vpop.f32.mrf.mxu0
        %2641 = vmatprep.mubr.bf16.mxu0 %v2405
        %2642 = vmatmul.mubr.bf16.gmra.mxu0 %v2404
        %v2643 = vpop.f32.mrf.mxu0
        %v2644 = vadd.f32 %v2066, %v2643
        %v2645 = vpop.f32.mrf.mxu0
        %v2646 = vpop.f32.mrf.mxu0
        %v2647 = vadd.f32 %v2071, %v2646
        %v2648 = vpop.f32.mrf.mxu0
        %2649 = vdwg.mxu0
        %2650 = vmatprep.subr.bf16.mxu0 0
        %2651 = vmatpush1.bf16.msra.mxu0 %v1768
        %2652 = vmatprep.subr.bf16.mxu0 0
        %2653 = vmatpush1.bf16.msra.mxu0 %v1767
        %2654 = vmatprep.subr.bf16.mxu0 0
        %2655 = vmatpush1.bf16.msra.mxu0 %v1766
        %2656 = vmatprep.subr.bf16.mxu0 0
        %2657 = vmatpush1.bf16.msra.mxu0 %v1765
        %2658 = vmatprep.subr.bf16.mxu0 0
        %2659 = vmatpush1.bf16.msra.mxu0 %v1764
        %2660 = vmatprep.subr.bf16.mxu0 0
        %2661 = vmatpush1.bf16.msra.mxu0 %v1763
        %2662 = vmatprep.subr.bf16.mxu0 0
        %2663 = vmatpush1.bf16.msra.mxu0 %v1762
        %2664 = vmatprep.subr.bf16.mxu0 0
        %2665 = vmatpush1.bf16.msra.mxu0 %v1761
        %2666 = vmatprep.subr.bf16.mxu0 0
        %2667 = vmatpush2.bf16.msra.mxu0 %v1776
        %2668 = vmatprep.subr.bf16.mxu0 0
        %2669 = vmatpush2.bf16.msra.mxu0 %v1775
        %2670 = vmatprep.subr.bf16.mxu0 0
        %2671 = vmatpush2.bf16.msra.mxu0 %v1774
        %2672 = vmatprep.subr.bf16.mxu0 0
        %2673 = vmatpush2.bf16.msra.mxu0 %v1773
        %2674 = vmatprep.subr.bf16.mxu0 0
        %2675 = vmatpush2.bf16.msra.mxu0 %v1772
        %2676 = vmatprep.subr.bf16.mxu0 0
        %2677 = vmatpush2.bf16.msra.mxu0 %v1771
        %2678 = vmatprep.subr.bf16.mxu0 0
        %2679 = vmatpush2.bf16.msra.mxu0 %v1770
        %2680 = vmatprep.subr.bf16.mxu0 0
        %2681 = vmatpush2.bf16.msra.mxu0 %v1769
        %2682 = vmatprep.mubr.bf16.mxu0 %v2332
        %2683 = vmatmul.mubr.bf16.gmra.mxu0 %v2331
        %v2684 = vpop.f32.mrf.mxu0
        %v2685 = vadd.f32 %v2524, %v2684
        %v2686 = vpop.f32.mrf.mxu0
        %v2687 = vpop.f32.mrf.mxu0
        %v2688 = vadd.f32 %v2527, %v2687
        %v2689 = vpop.f32.mrf.mxu0
        %2690 = vmatprep.mubr.bf16.mxu0 %v2337
        %2691 = vmatmul.mubr.bf16.gmra.mxu0 %v2336
        %v2692 = vpop.f32.mrf.mxu0
        %v2693 = vadd.f32 %v2532, %v2692
        %v2694 = vpop.f32.mrf.mxu0
        %v2695 = vpop.f32.mrf.mxu0
        %v2696 = vadd.f32 %v2535, %v2695
        %v2697 = vpop.f32.mrf.mxu0
        %2698 = vmatprep.mubr.bf16.mxu0 %v2342
        %2699 = vmatmul.mubr.bf16.gmra.mxu0 %v2341
        %v2700 = vpop.f32.mrf.mxu0
        %v2701 = vadd.f32 %v2540, %v2700
        %v2702 = vpop.f32.mrf.mxu0
        %v2703 = vpop.f32.mrf.mxu0
        %v2704 = vadd.f32 %v2543, %v2703
        %v2705 = vpop.f32.mrf.mxu0
        %2706 = vmatprep.mubr.bf16.mxu0 %v2347
        %2707 = vmatmul.mubr.bf16.gmra.mxu0 %v2346
        %v2708 = vpop.f32.mrf.mxu0
        %v2709 = vadd.f32 %v2548, %v2708
        %v2710 = vpop.f32.mrf.mxu0
        %v2711 = vpop.f32.mrf.mxu0
        %v2712 = vadd.f32 %v2551, %v2711
        %v2713 = vpop.f32.mrf.mxu0
        %2714 = vmatprep.mubr.bf16.mxu0 %v2352
        %2715 = vmatmul.mubr.bf16.gmra.mxu0 %v2351
        %v2716 = vpop.f32.mrf.mxu0
        %v2717 = vadd.f32 %v2556, %v2716
        %v2718 = vpop.f32.mrf.mxu0
        %v2719 = vpop.f32.mrf.mxu0
        %v2720 = vadd.f32 %v2559, %v2719
        %v2721 = vpop.f32.mrf.mxu0
        %2722 = vmatprep.mubr.bf16.mxu0 %v2357
        %2723 = vmatmul.mubr.bf16.gmra.mxu0 %v2356
        %v2724 = vpop.f32.mrf.mxu0
        %v2725 = vadd.f32 %v2564, %v2724
        %v2726 = vpop.f32.mrf.mxu0
        %v2727 = vpop.f32.mrf.mxu0
        %v2728 = vadd.f32 %v2567, %v2727
        %v2729 = vpop.f32.mrf.mxu0
        %2730 = vmatprep.mubr.bf16.mxu0 %v2362
        %2731 = vmatmul.mubr.bf16.gmra.mxu0 %v2361
        %v2732 = vpop.f32.mrf.mxu0
        %v2733 = vadd.f32 %v2572, %v2732
        %v2734 = vpop.f32.mrf.mxu0
        %v2735 = vpop.f32.mrf.mxu0
        %v2736 = vadd.f32 %v2575, %v2735
        %v2737 = vpop.f32.mrf.mxu0
        %2738 = vmatprep.mubr.bf16.mxu0 %v2367
        %2739 = vmatmul.mubr.bf16.gmra.mxu0 %v2366
        %v2740 = vpop.f32.mrf.mxu0
        %v2741 = vadd.f32 %v2580, %v2740
        %v2742 = vpop.f32.mrf.mxu0
        %v2743 = vpop.f32.mrf.mxu0
        %v2744 = vadd.f32 %v2583, %v2743
        %v2745 = vpop.f32.mrf.mxu0
        %2746 = vmatprep.mubr.bf16.mxu0 %v2372
        %2747 = vmatmul.mubr.bf16.gmra.mxu0 %v2371
        %v2748 = vpop.f32.mrf.mxu0
        %v2749 = vadd.f32 %v2588, %v2748
        %v2750 = vpop.f32.mrf.mxu0
        %v2751 = vpop.f32.mrf.mxu0
        %v2752 = vadd.f32 %v2591, %v2751
        %v2753 = vpop.f32.mrf.mxu0
        %2754 = vmatprep.mubr.bf16.mxu0 %v2377
        %2755 = vmatmul.mubr.bf16.gmra.mxu0 %v2376
        %v2756 = vpop.f32.mrf.mxu0
        %v2757 = vadd.f32 %v2596, %v2756
        %v2758 = vpop.f32.mrf.mxu0
        %v2759 = vpop.f32.mrf.mxu0
        %v2760 = vadd.f32 %v2599, %v2759
        %v2761 = vpop.f32.mrf.mxu0
        %2762 = vmatprep.mubr.bf16.mxu0 %v2382
        %2763 = vmatmul.mubr.bf16.gmra.mxu0 %v2381
        %v2764 = vpop.f32.mrf.mxu0
        %v2765 = vadd.f32 %v2604, %v2764
        %v2766 = vpop.f32.mrf.mxu0
        %v2767 = vpop.f32.mrf.mxu0
        %v2768 = vadd.f32 %v2607, %v2767
        %v2769 = vpop.f32.mrf.mxu0
        %2770 = vmatprep.mubr.bf16.mxu0 %v2387
        %2771 = vmatmul.mubr.bf16.gmra.mxu0 %v2386
        %v2772 = vpop.f32.mrf.mxu0
        %v2773 = vadd.f32 %v2612, %v2772
        %v2774 = vpop.f32.mrf.mxu0
        %v2775 = vpop.f32.mrf.mxu0
        %v2776 = vadd.f32 %v2615, %v2775
        %v2777 = vpop.f32.mrf.mxu0
        %2778 = vmatprep.mubr.bf16.mxu0 %v2392
        %2779 = vmatmul.mubr.bf16.gmra.mxu0 %v2391
        %v2780 = vpop.f32.mrf.mxu0
        %v2781 = vadd.f32 %v2620, %v2780
        %v2782 = vpop.f32.mrf.mxu0
        %v2783 = vpop.f32.mrf.mxu0
        %v2784 = vadd.f32 %v2623, %v2783
        %v2785 = vpop.f32.mrf.mxu0
        %2786 = vmatprep.mubr.bf16.mxu0 %v2397
        %2787 = vmatmul.mubr.bf16.gmra.mxu0 %v2396
        %v2788 = vpop.f32.mrf.mxu0
        %v2789 = vadd.f32 %v2628, %v2788
        %v2790 = vpop.f32.mrf.mxu0
        %v2791 = vpop.f32.mrf.mxu0
        %v2792 = vadd.f32 %v2631, %v2791
        %v2793 = vpop.f32.mrf.mxu0
        %2794 = vmatprep.mubr.bf16.mxu0 %v2402
        %2795 = vmatmul.mubr.bf16.gmra.mxu0 %v2401
        %v2796 = vpop.f32.mrf.mxu0
        %v2797 = vadd.f32 %v2636, %v2796
        %v2798 = vpop.f32.mrf.mxu0
        %v2799 = vpop.f32.mrf.mxu0
        %v2800 = vadd.f32 %v2639, %v2799
        %v2801 = vpop.f32.mrf.mxu0
        %2802 = vmatprep.mubr.bf16.mxu0 %v2407
        %2803 = vmatmul.mubr.bf16.gmra.mxu0 %v2406
        %v2804 = vpop.f32.mrf.mxu0
        %v2805 = vadd.f32 %v2644, %v2804
        %v2806 = vpop.f32.mrf.mxu0
        %v2807 = vpop.f32.mrf.mxu0
        %v2808 = vadd.f32 %v2647, %v2807
        %v2809 = vpop.f32.mrf.mxu0
        %2810 = vdwg.mxu0
        %2811 = vmatprep.subr.bf16.mxu0 0
        %2812 = vmatpush1.bf16.msra.mxu0 %v1784
        %2813 = vmatprep.subr.bf16.mxu0 0
        %2814 = vmatpush1.bf16.msra.mxu0 %v1783
        %2815 = vmatprep.subr.bf16.mxu0 0
        %2816 = vmatpush1.bf16.msra.mxu0 %v1782
        %2817 = vmatprep.subr.bf16.mxu0 0
        %2818 = vmatpush1.bf16.msra.mxu0 %v1781
        %2819 = vmatprep.subr.bf16.mxu0 0
        %2820 = vmatpush1.bf16.msra.mxu0 %v1780
        %2821 = vmatprep.subr.bf16.mxu0 0
        %2822 = vmatpush1.bf16.msra.mxu0 %v1779
        %2823 = vmatprep.subr.bf16.mxu0 0
        %2824 = vmatpush1.bf16.msra.mxu0 %v1778
        %2825 = vmatprep.subr.bf16.mxu0 0
        %2826 = vmatpush1.bf16.msra.mxu0 %v1777
        %2827 = vmatprep.subr.bf16.mxu0 0
        %2828 = vmatpush2.bf16.msra.mxu0 0
        %2829 = vmatprep.subr.bf16.mxu0 0
        %2830 = vmatpush2.bf16.msra.mxu0 0
        %2831 = vmatprep.subr.bf16.mxu0 0
        %2832 = vmatpush2.bf16.msra.mxu0 0
        %2833 = vmatprep.subr.bf16.mxu0 0
        %2834 = vmatpush2.bf16.msra.mxu0 0
        %2835 = vmatprep.subr.bf16.mxu0 0
        %2836 = vmatpush2.bf16.msra.mxu0 0
        %2837 = vmatprep.subr.bf16.mxu0 0
        %2838 = vmatpush2.bf16.msra.mxu0 0
        %2839 = vmatprep.subr.bf16.mxu0 0
        %2840 = vmatpush2.bf16.msra.mxu0 0
        %2841 = vmatprep.subr.bf16.mxu0 0
        %2842 = vmatpush2.bf16.msra.mxu0 0
        %2843 = vmatprep.mubr.bf16.mxu0 0
        %2844 = vmatmul.mubr.bf16.gmra.mxu0 %v2333
        %v2845 = vpop.f32.mrf.mxu0
        %v2846 = vadd.f32 %v2685, %v2845
        %v2847 = vpop.f32.mrf.mxu0
        %v2848 = vpop.f32.mrf.mxu0
        %v2849 = vadd.f32 %v2688, %v2848
        %v2850 = vpop.f32.mrf.mxu0
        %2851 = vmatprep.mubr.bf16.mxu0 0
        %2852 = vmatmul.mubr.bf16.gmra.mxu0 %v2338
        %v2853 = vpop.f32.mrf.mxu0
        %v2854 = vadd.f32 %v2693, %v2853
        %v2855 = vpop.f32.mrf.mxu0
        %v2856 = vpop.f32.mrf.mxu0
        %v2857 = vadd.f32 %v2696, %v2856
        %v2858 = vpop.f32.mrf.mxu0
        %2859 = vmatprep.mubr.bf16.mxu0 0
        %2860 = vmatmul.mubr.bf16.gmra.mxu0 %v2343
        %v2861 = vpop.f32.mrf.mxu0
        %v2862 = vadd.f32 %v2701, %v2861
        %v2863 = vpop.f32.mrf.mxu0
        %v2864 = vpop.f32.mrf.mxu0
        %v2865 = vadd.f32 %v2704, %v2864
        %v2866 = vpop.f32.mrf.mxu0
        %2867 = vmatprep.mubr.bf16.mxu0 0
        %2868 = vmatmul.mubr.bf16.gmra.mxu0 %v2348
        %v2869 = vpop.f32.mrf.mxu0
        %v2870 = vadd.f32 %v2709, %v2869
        %v2871 = vpop.f32.mrf.mxu0
        %v2872 = vpop.f32.mrf.mxu0
        %v2873 = vadd.f32 %v2712, %v2872
        %v2874 = vpop.f32.mrf.mxu0
        %2875 = vmatprep.mubr.bf16.mxu0 0
        %2876 = vmatmul.mubr.bf16.gmra.mxu0 %v2353
        %v2877 = vpop.f32.mrf.mxu0
        %v2878 = vadd.f32 %v2717, %v2877
        %v2879 = vpop.f32.mrf.mxu0
        %v2880 = vpop.f32.mrf.mxu0
        %v2881 = vadd.f32 %v2720, %v2880
        %v2882 = vpop.f32.mrf.mxu0
        %2883 = vmatprep.mubr.bf16.mxu0 0
        %2884 = vmatmul.mubr.bf16.gmra.mxu0 %v2358
        %v2885 = vpop.f32.mrf.mxu0
        %v2886 = vadd.f32 %v2725, %v2885
        %v2887 = vpop.f32.mrf.mxu0
        %v2888 = vpop.f32.mrf.mxu0
        %v2889 = vadd.f32 %v2728, %v2888
        %v2890 = vpop.f32.mrf.mxu0
        %2891 = vmatprep.mubr.bf16.mxu0 0
        %2892 = vmatmul.mubr.bf16.gmra.mxu0 %v2363
        %v2893 = vpop.f32.mrf.mxu0
        %v2894 = vadd.f32 %v2733, %v2893
        %v2895 = vpop.f32.mrf.mxu0
        %v2896 = vpop.f32.mrf.mxu0
        %v2897 = vadd.f32 %v2736, %v2896
        %v2898 = vpop.f32.mrf.mxu0
        %2899 = vmatprep.mubr.bf16.mxu0 0
        %2900 = vmatmul.mubr.bf16.gmra.mxu0 %v2368
        %v2901 = vpop.f32.mrf.mxu0
        %v2902 = vadd.f32 %v2741, %v2901
        %v2903 = vpop.f32.mrf.mxu0
        %v2904 = vpop.f32.mrf.mxu0
        %v2905 = vadd.f32 %v2744, %v2904
        %v2906 = vpop.f32.mrf.mxu0
        %2907 = vmatprep.mubr.bf16.mxu0 0
        %2908 = vmatmul.mubr.bf16.gmra.mxu0 %v2373
        %v2909 = vpop.f32.mrf.mxu0
        %v2910 = vadd.f32 %v2749, %v2909
        %v2911 = vpop.f32.mrf.mxu0
        %v2912 = vpop.f32.mrf.mxu0
        %v2913 = vadd.f32 %v2752, %v2912
        %v2914 = vpop.f32.mrf.mxu0
        %2915 = vmatprep.mubr.bf16.mxu0 0
        %2916 = vmatmul.mubr.bf16.gmra.mxu0 %v2378
        %v2917 = vpop.f32.mrf.mxu0
        %v2918 = vadd.f32 %v2757, %v2917
        %v2919 = vpop.f32.mrf.mxu0
        %v2920 = vpop.f32.mrf.mxu0
        %v2921 = vadd.f32 %v2760, %v2920
        %v2922 = vpop.f32.mrf.mxu0
        %2923 = vmatprep.mubr.bf16.mxu0 0
        %2924 = vmatmul.mubr.bf16.gmra.mxu0 %v2383
        %v2925 = vpop.f32.mrf.mxu0
        %v2926 = vadd.f32 %v2765, %v2925
        %v2927 = vpop.f32.mrf.mxu0
        %v2928 = vpop.f32.mrf.mxu0
        %v2929 = vadd.f32 %v2768, %v2928
        %v2930 = vpop.f32.mrf.mxu0
        %2931 = vmatprep.mubr.bf16.mxu0 0
        %2932 = vmatmul.mubr.bf16.gmra.mxu0 %v2388
        %v2933 = vpop.f32.mrf.mxu0
        %v2934 = vadd.f32 %v2773, %v2933
        %v2935 = vpop.f32.mrf.mxu0
        %v2936 = vpop.f32.mrf.mxu0
        %v2937 = vadd.f32 %v2776, %v2936
        %v2938 = vpop.f32.mrf.mxu0
        %2939 = vmatprep.mubr.bf16.mxu0 0
        %2940 = vmatmul.mubr.bf16.gmra.mxu0 %v2393
        %v2941 = vpop.f32.mrf.mxu0
        %v2942 = vadd.f32 %v2781, %v2941
        %v2943 = vpop.f32.mrf.mxu0
        %v2944 = vpop.f32.mrf.mxu0
        %v2945 = vadd.f32 %v2784, %v2944
        %v2946 = vpop.f32.mrf.mxu0
        %2947 = vmatprep.mubr.bf16.mxu0 0
        %2948 = vmatmul.mubr.bf16.gmra.mxu0 %v2398
        %v2949 = vpop.f32.mrf.mxu0
        %v2950 = vadd.f32 %v2789, %v2949
        %v2951 = vpop.f32.mrf.mxu0
        %v2952 = vpop.f32.mrf.mxu0
        %v2953 = vadd.f32 %v2792, %v2952
        %v2954 = vpop.f32.mrf.mxu0
        %2955 = vmatprep.mubr.bf16.mxu0 0
        %2956 = vmatmul.mubr.bf16.gmra.mxu0 %v2403
        %v2957 = vpop.f32.mrf.mxu0
        %v2958 = vadd.f32 %v2797, %v2957
        %v2959 = vpop.f32.mrf.mxu0
        %v2960 = vpop.f32.mrf.mxu0
        %v2961 = vadd.f32 %v2800, %v2960
        %v2962 = vpop.f32.mrf.mxu0
        %2963 = vmatprep.mubr.bf16.mxu0 0
        %2964 = vmatmul.mubr.bf16.gmra.mxu0 %v2408
        %v2965 = vpop.f32.mrf.mxu0
        %v2966 = vadd.f32 %v2805, %v2965
        %v2967 = vpop.f32.mrf.mxu0
        %v2968 = vpop.f32.mrf.mxu0
        %v2969 = vadd.f32 %v2808, %v2968
        %v2970 = vpop.f32.mrf.mxu0
        %2971 = vdwg.mxu0
        %v2972 = vld [vmem:[%s5] sm:$0xff]
        %v2973 = vld [vmem:[%s5 + $0x8] sm:$0xff]
        %v2974 = vld [vmem:[%s5 + $0x10] sm:$0xff]
        %v2975 = vld [vmem:[%s5 + $0x18] sm:$0xff]
        %v2976 = vld [vmem:[%s5 + $0x20] sm:$0xff]
        %v2977 = vld [vmem:[%s5 + $0x28] sm:$0xff]
        %v2978 = vld [vmem:[%s5 + $0x30] sm:$0xff]
        %v2979 = vld [vmem:[%s5 + $0x38] sm:$0xff]
        %v2980 = vld [vmem:[%s5 + $0x40] sm:$0xff]
        %v2981 = vld [vmem:[%s5 + $0x48] sm:$0xff]
        %v2982 = vld [vmem:[%s5 + $0x50] sm:$0xff]
        %v2983 = vld [vmem:[%s5 + $0x58] sm:$0xff]
        %v2984 = vld [vmem:[%s5 + $0x60] sm:$0xff]
        %v2985 = vld [vmem:[%s5 + $0x68] sm:$0xff]
        %v2986 = vld [vmem:[%s5 + $0x70] sm:$0xff]
        %v2987 = vld [vmem:[%s5 + $0x78] sm:$0xff]
        %v2988 = vld [vmem:[%s5 + $0x80] sm:$0xff]
        %v2989 = vld [vmem:[%s5 + $0x88] sm:$0xff]
        %v2990 = vld [vmem:[%s5 + $0x90] sm:$0xff]
        %v2991 = vld [vmem:[%s5 + $0x98] sm:$0xff]
        %v2992 = vld [vmem:[%s5 + $0xa0] sm:$0xff]
        %v2993 = vld [vmem:[%s5 + $0xa8] sm:$0xff]
        %v2994 = vld [vmem:[%s5 + $0xb0] sm:$0xff]
        %v2995 = vld [vmem:[%s5 + $0xb8] sm:$0xff]
        %v2996 = vld [vmem:[%s5 + $0xc0] sm:$0xff]
        %v2997 = vld [vmem:[%s5 + $0xc8] sm:$0xff]
        %v2998 = vld [vmem:[%s5 + $0xd0] sm:$0xff]
        %v2999 = vld [vmem:[%s5 + $0xd8] sm:$0xff]
        %v3000 = vld [vmem:[%s5 + $0xe0] sm:$0xff]
        %v3001 = vld [vmem:[%s5 + $0xe8] sm:$0xff]
        %v3002 = vld [vmem:[%s5 + $0xf0] sm:$0xff]
        %v3003 = vld [vmem:[%s5 + $0xf8] sm:$0xff]
        %3005 = vset.pattern.permute.xlu0 0
        %3006 = vperm.xlu0 %3005, %v2972
        %v3007 = vpop.permute.xlu0 %3006
        %3010 = vset.pattern.permute.xlu0 0
        %3011 = vperm.xlu0 %3010, %v2973
        %v3012 = vpop.permute.xlu0 %3011
        %3015 = vset.pattern.permute.xlu0 0
        %3016 = vperm.xlu0 %3015, %v2974
        %v3017 = vpop.permute.xlu0 %3016
        %3020 = vset.pattern.permute.xlu0 0
        %3021 = vperm.xlu0 %3020, %v2975
        %v3022 = vpop.permute.xlu0 %3021
        %3025 = vset.pattern.permute.xlu0 0
        %3026 = vperm.xlu0 %3025, %v2976
        %v3027 = vpop.permute.xlu0 %3026
        %3030 = vset.pattern.permute.xlu0 0
        %3031 = vperm.xlu0 %3030, %v2977
        %v3032 = vpop.permute.xlu0 %3031
        %3035 = vset.pattern.permute.xlu0 0
        %3036 = vperm.xlu0 %3035, %v2978
        %v3037 = vpop.permute.xlu0 %3036
        %3040 = vset.pattern.permute.xlu0 0
        %3041 = vperm.xlu0 %3040, %v2979
        %v3042 = vpop.permute.xlu0 %3041
        %3045 = vset.pattern.permute.xlu0 0
        %3046 = vperm.xlu0 %3045, %v2980
        %v3047 = vpop.permute.xlu0 %3046
        %3050 = vset.pattern.permute.xlu0 0
        %3051 = vperm.xlu0 %3050, %v2981
        %v3052 = vpop.permute.xlu0 %3051
        %3055 = vset.pattern.permute.xlu0 0
        %3056 = vperm.xlu0 %3055, %v2982
        %v3057 = vpop.permute.xlu0 %3056
        %3060 = vset.pattern.permute.xlu0 0
        %3061 = vperm.xlu0 %3060, %v2983
        %v3062 = vpop.permute.xlu0 %3061
        %3065 = vset.pattern.permute.xlu0 0
        %3066 = vperm.xlu0 %3065, %v2984
        %v3067 = vpop.permute.xlu0 %3066
        %3070 = vset.pattern.permute.xlu0 0
        %3071 = vperm.xlu0 %3070, %v2985
        %v3072 = vpop.permute.xlu0 %3071
        %3075 = vset.pattern.permute.xlu0 0
        %3076 = vperm.xlu0 %3075, %v2986
        %v3077 = vpop.permute.xlu0 %3076
        %3080 = vset.pattern.permute.xlu0 0
        %3081 = vperm.xlu0 %3080, %v2987
        %v3082 = vpop.permute.xlu0 %3081
        %3085 = vset.pattern.permute.xlu0 0
        %3086 = vperm.xlu0 %3085, %v2988
        %v3087 = vpop.permute.xlu0 %3086
        %3090 = vset.pattern.permute.xlu0 0
        %3091 = vperm.xlu0 %3090, %v2989
        %v3092 = vpop.permute.xlu0 %3091
        %3095 = vset.pattern.permute.xlu0 0
        %3096 = vperm.xlu0 %3095, %v2990
        %v3097 = vpop.permute.xlu0 %3096
        %3100 = vset.pattern.permute.xlu0 0
        %3101 = vperm.xlu0 %3100, %v2991
        %v3102 = vpop.permute.xlu0 %3101
        %3105 = vset.pattern.permute.xlu0 0
        %3106 = vperm.xlu0 %3105, %v2992
        %v3107 = vpop.permute.xlu0 %3106
        %3110 = vset.pattern.permute.xlu0 0
        %3111 = vperm.xlu0 %3110, %v2993
        %v3112 = vpop.permute.xlu0 %3111
        %3115 = vset.pattern.permute.xlu0 0
        %3116 = vperm.xlu0 %3115, %v2994
        %v3117 = vpop.permute.xlu0 %3116
        %3120 = vset.pattern.permute.xlu0 0
        %3121 = vperm.xlu0 %3120, %v2995
        %v3122 = vpop.permute.xlu0 %3121
        %3125 = vset.pattern.permute.xlu0 0
        %3126 = vperm.xlu0 %3125, %v2996
        %v3127 = vpop.permute.xlu0 %3126
        %3130 = vset.pattern.permute.xlu0 0
        %3131 = vperm.xlu0 %3130, %v2997
        %v3132 = vpop.permute.xlu0 %3131
        %3135 = vset.pattern.permute.xlu0 0
        %3136 = vperm.xlu0 %3135, %v2998
        %v3137 = vpop.permute.xlu0 %3136
        %3140 = vset.pattern.permute.xlu0 0
        %3141 = vperm.xlu0 %3140, %v2999
        %v3142 = vpop.permute.xlu0 %3141
        %3145 = vset.pattern.permute.xlu0 0
        %3146 = vperm.xlu0 %3145, %v3000
        %v3147 = vpop.permute.xlu0 %3146
        %3150 = vset.pattern.permute.xlu0 0
        %3151 = vperm.xlu0 %3150, %v3001
        %v3152 = vpop.permute.xlu0 %3151
        %3155 = vset.pattern.permute.xlu0 0
        %3156 = vperm.xlu0 %3155, %v3002
        %v3157 = vpop.permute.xlu0 %3156
        %3160 = vset.pattern.permute.xlu0 0
        %3161 = vperm.xlu0 %3160, %v3003
        %v3162 = vpop.permute.xlu0 %3161
        %v3164 = vmul.f32 %v2846, %v3007
        %v3165 = vmul.f32 %v2849, %v3012
        %v3166 = vmul.f32 %v2854, %v3017
        %v3167 = vmul.f32 %v2857, %v3022
        %v3168 = vmul.f32 %v2862, %v3027
        %v3169 = vmul.f32 %v2865, %v3032
        %v3170 = vmul.f32 %v2870, %v3037
        %v3171 = vmul.f32 %v2873, %v3042
        %v3172 = vmul.f32 %v2878, %v3047
        %v3173 = vmul.f32 %v2881, %v3052
        %v3174 = vmul.f32 %v2886, %v3057
        %v3175 = vmul.f32 %v2889, %v3062
        %v3176 = vmul.f32 %v2894, %v3067
        %v3177 = vmul.f32 %v2897, %v3072
        %v3178 = vmul.f32 %v2902, %v3077
        %v3179 = vmul.f32 %v2905, %v3082
        %v3180 = vmul.f32 %v2910, %v3087
        %v3181 = vmul.f32 %v2913, %v3092
        %v3182 = vmul.f32 %v2918, %v3097
        %v3183 = vmul.f32 %v2921, %v3102
        %v3184 = vmul.f32 %v2926, %v3107
        %v3185 = vmul.f32 %v2929, %v3112
        %v3186 = vmul.f32 %v2934, %v3117
        %v3187 = vmul.f32 %v2937, %v3122
        %v3188 = vmul.f32 %v2942, %v3127
        %v3189 = vmul.f32 %v2945, %v3132
        %v3190 = vmul.f32 %v2950, %v3137
        %v3191 = vmul.f32 %v2953, %v3142
        %v3192 = vmul.f32 %v2958, %v3147
        %v3193 = vmul.f32 %v2961, %v3152
        %v3194 = vmul.f32 %v2966, %v3157
        %v3195 = vmul.f32 %v2969, %v3162
        %v3196 = vld [vmem:[%s6] sm:$0xff]
        %v3197 = vld [vmem:[%s6 + $0x8] sm:$0xff]
        %v3198 = vld [vmem:[%s6 + $0x10] sm:$0xff]
        %v3199 = vld [vmem:[%s6 + $0x18] sm:$0xff]
        %v3200 = vld [vmem:[%s6 + $0x20] sm:$0xff]
        %v3201 = vld [vmem:[%s6 + $0x28] sm:$0xff]
        %v3202 = vld [vmem:[%s6 + $0x30] sm:$0xff]
        %v3203 = vld [vmem:[%s6 + $0x38] sm:$0xff]
        %v3204 = vld [vmem:[%s6 + $0x40] sm:$0xff]
        %v3205 = vld [vmem:[%s6 + $0x48] sm:$0xff]
        %v3206 = vld [vmem:[%s6 + $0x50] sm:$0xff]
        %v3207 = vld [vmem:[%s6 + $0x58] sm:$0xff]
        %v3208 = vld [vmem:[%s6 + $0x60] sm:$0xff]
        %v3209 = vld [vmem:[%s6 + $0x68] sm:$0xff]
        %v3210 = vld [vmem:[%s6 + $0x70] sm:$0xff]
        %v3211 = vld [vmem:[%s6 + $0x78] sm:$0xff]
        %v3212 = vld [vmem:[%s6 + $0x80] sm:$0xff]
        %v3213 = vld [vmem:[%s6 + $0x88] sm:$0xff]
        %v3214 = vld [vmem:[%s6 + $0x90] sm:$0xff]
        %v3215 = vld [vmem:[%s6 + $0x98] sm:$0xff]
        %v3216 = vld [vmem:[%s6 + $0xa0] sm:$0xff]
        %v3217 = vld [vmem:[%s6 + $0xa8] sm:$0xff]
        %v3218 = vld [vmem:[%s6 + $0xb0] sm:$0xff]
        %v3219 = vld [vmem:[%s6 + $0xb8] sm:$0xff]
        %v3220 = vld [vmem:[%s6 + $0xc0] sm:$0xff]
        %v3221 = vld [vmem:[%s6 + $0xc8] sm:$0xff]
        %v3222 = vld [vmem:[%s6 + $0xd0] sm:$0xff]
        %v3223 = vld [vmem:[%s6 + $0xd8] sm:$0xff]
        %v3224 = vld [vmem:[%s6 + $0xe0] sm:$0xff]
        %v3225 = vld [vmem:[%s6 + $0xe8] sm:$0xff]
        %v3226 = vld [vmem:[%s6 + $0xf0] sm:$0xff]
        %v3227 = vld [vmem:[%s6 + $0xf8] sm:$0xff]
        %3229 = vset.pattern.permute.xlu0 0
        %3230 = vperm.xlu0 %3229, %v3196
        %v3231 = vpop.permute.xlu0 %3230
        %3234 = vset.pattern.permute.xlu0 0
        %3235 = vperm.xlu0 %3234, %v3197
        %v3236 = vpop.permute.xlu0 %3235
        %3239 = vset.pattern.permute.xlu0 0
        %3240 = vperm.xlu0 %3239, %v3198
        %v3241 = vpop.permute.xlu0 %3240
        %3244 = vset.pattern.permute.xlu0 0
        %3245 = vperm.xlu0 %3244, %v3199
        %v3246 = vpop.permute.xlu0 %3245
        %3249 = vset.pattern.permute.xlu0 0
        %3250 = vperm.xlu0 %3249, %v3200
        %v3251 = vpop.permute.xlu0 %3250
        %3254 = vset.pattern.permute.xlu0 0
        %3255 = vperm.xlu0 %3254, %v3201
        %v3256 = vpop.permute.xlu0 %3255
        %3259 = vset.pattern.permute.xlu0 0
        %3260 = vperm.xlu0 %3259, %v3202
        %v3261 = vpop.permute.xlu0 %3260
        %3264 = vset.pattern.permute.xlu0 0
        %3265 = vperm.xlu0 %3264, %v3203
        %v3266 = vpop.permute.xlu0 %3265
        %3269 = vset.pattern.permute.xlu0 0
        %3270 = vperm.xlu0 %3269, %v3204
        %v3271 = vpop.permute.xlu0 %3270
        %3274 = vset.pattern.permute.xlu0 0
        %3275 = vperm.xlu0 %3274, %v3205
        %v3276 = vpop.permute.xlu0 %3275
        %3279 = vset.pattern.permute.xlu0 0
        %3280 = vperm.xlu0 %3279, %v3206
        %v3281 = vpop.permute.xlu0 %3280
        %3284 = vset.pattern.permute.xlu0 0
        %3285 = vperm.xlu0 %3284, %v3207
        %v3286 = vpop.permute.xlu0 %3285
        %3289 = vset.pattern.permute.xlu0 0
        %3290 = vperm.xlu0 %3289, %v3208
        %v3291 = vpop.permute.xlu0 %3290
        %3294 = vset.pattern.permute.xlu0 0
        %3295 = vperm.xlu0 %3294, %v3209
        %v3296 = vpop.permute.xlu0 %3295
        %3299 = vset.pattern.permute.xlu0 0
        %3300 = vperm.xlu0 %3299, %v3210
        %v3301 = vpop.permute.xlu0 %3300
        %3304 = vset.pattern.permute.xlu0 0
        %3305 = vperm.xlu0 %3304, %v3211
        %v3306 = vpop.permute.xlu0 %3305
        %3309 = vset.pattern.permute.xlu0 0
        %3310 = vperm.xlu0 %3309, %v3212
        %v3311 = vpop.permute.xlu0 %3310
        %3314 = vset.pattern.permute.xlu0 0
        %3315 = vperm.xlu0 %3314, %v3213
        %v3316 = vpop.permute.xlu0 %3315
        %3319 = vset.pattern.permute.xlu0 0
        %3320 = vperm.xlu0 %3319, %v3214
        %v3321 = vpop.permute.xlu0 %3320
        %3324 = vset.pattern.permute.xlu0 0
        %3325 = vperm.xlu0 %3324, %v3215
        %v3326 = vpop.permute.xlu0 %3325
        %3329 = vset.pattern.permute.xlu0 0
        %3330 = vperm.xlu0 %3329, %v3216
        %v3331 = vpop.permute.xlu0 %3330
        %3334 = vset.pattern.permute.xlu0 0
        %3335 = vperm.xlu0 %3334, %v3217
        %v3336 = vpop.permute.xlu0 %3335
        %3339 = vset.pattern.permute.xlu0 0
        %3340 = vperm.xlu0 %3339, %v3218
        %v3341 = vpop.permute.xlu0 %3340
        %3344 = vset.pattern.permute.xlu0 0
        %3345 = vperm.xlu0 %3344, %v3219
        %v3346 = vpop.permute.xlu0 %3345
        %3349 = vset.pattern.permute.xlu0 0
        %3350 = vperm.xlu0 %3349, %v3220
        %v3351 = vpop.permute.xlu0 %3350
        %3354 = vset.pattern.permute.xlu0 0
        %3355 = vperm.xlu0 %3354, %v3221
        %v3356 = vpop.permute.xlu0 %3355
        %3359 = vset.pattern.permute.xlu0 0
        %3360 = vperm.xlu0 %3359, %v3222
        %v3361 = vpop.permute.xlu0 %3360
        %3364 = vset.pattern.permute.xlu0 0
        %3365 = vperm.xlu0 %3364, %v3223
        %v3366 = vpop.permute.xlu0 %3365
        %3369 = vset.pattern.permute.xlu0 0
        %3370 = vperm.xlu0 %3369, %v3224
        %v3371 = vpop.permute.xlu0 %3370
        %3374 = vset.pattern.permute.xlu0 0
        %3375 = vperm.xlu0 %3374, %v3225
        %v3376 = vpop.permute.xlu0 %3375
        %3379 = vset.pattern.permute.xlu0 0
        %3380 = vperm.xlu0 %3379, %v3226
        %v3381 = vpop.permute.xlu0 %3380
        %3384 = vset.pattern.permute.xlu0 0
        %3385 = vperm.xlu0 %3384, %v3227
        %v3386 = vpop.permute.xlu0 %3385
        %v3388 = vadd.f32 %v3164, %v3231
        %v3389 = vadd.f32 %v3165, %v3236
        %v3390 = vadd.f32 %v3166, %v3241
        %v3391 = vadd.f32 %v3167, %v3246
        %v3392 = vadd.f32 %v3168, %v3251
        %v3393 = vadd.f32 %v3169, %v3256
        %v3394 = vadd.f32 %v3170, %v3261
        %v3395 = vadd.f32 %v3171, %v3266
        %v3396 = vadd.f32 %v3172, %v3271
        %v3397 = vadd.f32 %v3173, %v3276
        %v3398 = vadd.f32 %v3174, %v3281
        %v3399 = vadd.f32 %v3175, %v3286
        %v3400 = vadd.f32 %v3176, %v3291
        %v3401 = vadd.f32 %v3177, %v3296
        %v3402 = vadd.f32 %v3178, %v3301
        %v3403 = vadd.f32 %v3179, %v3306
        %v3404 = vadd.f32 %v3180, %v3311
        %v3405 = vadd.f32 %v3181, %v3316
        %v3406 = vadd.f32 %v3182, %v3321
        %v3407 = vadd.f32 %v3183, %v3326
        %v3408 = vadd.f32 %v3184, %v3331
        %v3409 = vadd.f32 %v3185, %v3336
        %v3410 = vadd.f32 %v3186, %v3341
        %v3411 = vadd.f32 %v3187, %v3346
        %v3412 = vadd.f32 %v3188, %v3351
        %v3413 = vadd.f32 %v3189, %v3356
        %v3414 = vadd.f32 %v3190, %v3361
        %v3415 = vadd.f32 %v3191, %v3366
        %v3416 = vadd.f32 %v3192, %v3371
        %v3417 = vadd.f32 %v3193, %v3376
        %v3418 = vadd.f32 %v3194, %v3381
        %v3419 = vadd.f32 %v3195, %v3386
        %v3420 = vmax.f32 %v3388, 0.0
        %v3421 = vmax.f32 %v3389, 0.0
        %v3422 = vmax.f32 %v3390, 0.0
        %v3423 = vmax.f32 %v3391, 0.0
        %v3424 = vmax.f32 %v3392, 0.0
        %v3425 = vmax.f32 %v3393, 0.0
        %v3426 = vmax.f32 %v3394, 0.0
        %v3427 = vmax.f32 %v3395, 0.0
        %v3428 = vmax.f32 %v3396, 0.0
        %v3429 = vmax.f32 %v3397, 0.0
        %v3430 = vmax.f32 %v3398, 0.0
        %v3431 = vmax.f32 %v3399, 0.0
        %v3432 = vmax.f32 %v3400, 0.0
        %v3433 = vmax.f32 %v3401, 0.0
        %v3434 = vmax.f32 %v3402, 0.0
        %v3435 = vmax.f32 %v3403, 0.0
        %v3436 = vmax.f32 %v3404, 0.0
        %v3437 = vmax.f32 %v3405, 0.0
        %v3438 = vmax.f32 %v3406, 0.0
        %v3439 = vmax.f32 %v3407, 0.0
        %v3440 = vmax.f32 %v3408, 0.0
        %v3441 = vmax.f32 %v3409, 0.0
        %v3442 = vmax.f32 %v3410, 0.0
        %v3443 = vmax.f32 %v3411, 0.0
        %v3444 = vmax.f32 %v3412, 0.0
        %v3445 = vmax.f32 %v3413, 0.0
        %v3446 = vmax.f32 %v3414, 0.0
        %v3447 = vmax.f32 %v3415, 0.0
        %v3448 = vmax.f32 %v3416, 0.0
        %v3449 = vmax.f32 %v3417, 0.0
        %v3450 = vmax.f32 %v3418, 0.0
        %v3451 = vmax.f32 %v3419, 0.0
        %v3452 = vpack.c.bf16 %v3421, %v3420
        %v3453 = vpack.c.bf16 %v3423, %v3422
        %v3454 = vpack.c.bf16 %v3425, %v3424
        %v3455 = vpack.c.bf16 %v3427, %v3426
        %v3456 = vpack.c.bf16 %v3429, %v3428
        %v3457 = vpack.c.bf16 %v3431, %v3430
        %v3458 = vpack.c.bf16 %v3433, %v3432
        %v3459 = vpack.c.bf16 %v3435, %v3434
        %v3460 = vpack.c.bf16 %v3437, %v3436
        %v3461 = vpack.c.bf16 %v3439, %v3438
        %v3462 = vpack.c.bf16 %v3441, %v3440
        %v3463 = vpack.c.bf16 %v3443, %v3442
        %v3464 = vpack.c.bf16 %v3445, %v3444
        %v3465 = vpack.c.bf16 %v3447, %v3446
        %v3466 = vpack.c.bf16 %v3449, %v3448
        %v3467 = vpack.c.bf16 %v3451, %v3450
        %v3468 = vld [vmem:[%s11] sm:$0xff]
        %v3469 = vld [vmem:[%s11 + $0x8] sm:$0xff]
        %v3470 = vld [vmem:[%s11 + $0x10] sm:$0xff]
        %v3471 = vld [vmem:[%s11 + $0x18] sm:$0xff]
        %v3472 = vld [vmem:[%s11 + $0x20] sm:$0xff]
        %v3473 = vld [vmem:[%s11 + $0x28] sm:$0xff]
        %v3474 = vld [vmem:[%s11 + $0x30] sm:$0xff]
        %v3475 = vld [vmem:[%s11 + $0x38] sm:$0xff]
        %v3476 = vld [vmem:[%s11 + $0x40] sm:$0xff]
        %v3477 = vld [vmem:[%s11 + $0x48] sm:$0xff]
        %v3478 = vld [vmem:[%s11 + $0x50] sm:$0xff]
        %v3479 = vld [vmem:[%s11 + $0x58] sm:$0xff]
        %v3480 = vld [vmem:[%s11 + $0x60] sm:$0xff]
        %v3481 = vld [vmem:[%s11 + $0x68] sm:$0xff]
        %v3482 = vld [vmem:[%s11 + $0x70] sm:$0xff]
        %v3483 = vld [vmem:[%s11 + $0x78] sm:$0xff]
        %v3484 = vld [vmem:[%s11 + $0x80] sm:$0xff]
        %v3485 = vld [vmem:[%s11 + $0x88] sm:$0xff]
        %v3486 = vld [vmem:[%s11 + $0x90] sm:$0xff]
        %v3487 = vld [vmem:[%s11 + $0x98] sm:$0xff]
        %v3488 = vld [vmem:[%s11 + $0xa0] sm:$0xff]
        %v3489 = vld [vmem:[%s11 + $0xa8] sm:$0xff]
        %v3490 = vld [vmem:[%s11 + $0xb0] sm:$0xff]
        %v3491 = vld [vmem:[%s11 + $0xb8] sm:$0xff]
        %v3492 = vld [vmem:[%s11 + $0xc0] sm:$0xff]
        %v3493 = vld [vmem:[%s11 + $0xc8] sm:$0xff]
        %v3494 = vld [vmem:[%s11 + $0xd0] sm:$0xff]
        %v3495 = vld [vmem:[%s11 + $0xd8] sm:$0xff]
        %v3496 = vld [vmem:[%s11 + $0xe0] sm:$0xff]
        %v3497 = vld [vmem:[%s11 + $0xe8] sm:$0xff]
        %v3498 = vld [vmem:[%s11 + $0xf0] sm:$0xff]
        %v3499 = vld [vmem:[%s11 + $0xf8] sm:$0xff]
        %v3500 = vld [vmem:[%s12] sm:$0xff]
        %v3501 = vld [vmem:[%s12 + $0x8] sm:$0xff]
        %v3502 = vld [vmem:[%s12 + $0x10] sm:$0xff]
        %v3503 = vld [vmem:[%s12 + $0x18] sm:$0xff]
        %v3504 = vld [vmem:[%s12 + $0x20] sm:$0xff]
        %v3505 = vld [vmem:[%s12 + $0x28] sm:$0xff]
        %v3506 = vld [vmem:[%s12 + $0x30] sm:$0xff]
        %v3507 = vld [vmem:[%s12 + $0x38] sm:$0xff]
        %v3508 = vld [vmem:[%s12 + $0x40] sm:$0xff]
        %v3509 = vld [vmem:[%s12 + $0x48] sm:$0xff]
        %v3510 = vld [vmem:[%s12 + $0x50] sm:$0xff]
        %v3511 = vld [vmem:[%s12 + $0x58] sm:$0xff]
        %v3512 = vld [vmem:[%s12 + $0x60] sm:$0xff]
        %v3513 = vld [vmem:[%s12 + $0x68] sm:$0xff]
        %v3514 = vld [vmem:[%s12 + $0x70] sm:$0xff]
        %v3515 = vld [vmem:[%s12 + $0x78] sm:$0xff]
        %v3516 = vld [vmem:[%s12 + $0x80] sm:$0xff]
        %v3517 = vld [vmem:[%s12 + $0x88] sm:$0xff]
        %v3518 = vld [vmem:[%s12 + $0x90] sm:$0xff]
        %v3519 = vld [vmem:[%s12 + $0x98] sm:$0xff]
        %v3520 = vld [vmem:[%s12 + $0xa0] sm:$0xff]
        %v3521 = vld [vmem:[%s12 + $0xa8] sm:$0xff]
        %v3522 = vld [vmem:[%s12 + $0xb0] sm:$0xff]
        %v3523 = vld [vmem:[%s12 + $0xb8] sm:$0xff]
        %v3524 = vld [vmem:[%s12 + $0xc0] sm:$0xff]
        %v3525 = vld [vmem:[%s12 + $0xc8] sm:$0xff]
        %v3526 = vld [vmem:[%s12 + $0xd0] sm:$0xff]
        %v3527 = vld [vmem:[%s12 + $0xd8] sm:$0xff]
        %v3528 = vld [vmem:[%s12 + $0xe0] sm:$0xff]
        %v3529 = vld [vmem:[%s12 + $0xe8] sm:$0xff]
        %v3530 = vld [vmem:[%s12 + $0xf0] sm:$0xff]
        %v3531 = vld [vmem:[%s12 + $0xf8] sm:$0xff]
        %3533 = vset.pattern.permute.xlu0 0
        %3534 = vperm.xlu0 %3533, %v3500
        %v3535 = vpop.permute.xlu0 %3534
        %3538 = vset.pattern.permute.xlu0 0
        %3539 = vperm.xlu0 %3538, %v3501
        %v3540 = vpop.permute.xlu0 %3539
        %3543 = vset.pattern.permute.xlu0 0
        %3544 = vperm.xlu0 %3543, %v3502
        %v3545 = vpop.permute.xlu0 %3544
        %3548 = vset.pattern.permute.xlu0 0
        %3549 = vperm.xlu0 %3548, %v3503
        %v3550 = vpop.permute.xlu0 %3549
        %3553 = vset.pattern.permute.xlu0 0
        %3554 = vperm.xlu0 %3553, %v3504
        %v3555 = vpop.permute.xlu0 %3554
        %3558 = vset.pattern.permute.xlu0 0
        %3559 = vperm.xlu0 %3558, %v3505
        %v3560 = vpop.permute.xlu0 %3559
        %3563 = vset.pattern.permute.xlu0 0
        %3564 = vperm.xlu0 %3563, %v3506
        %v3565 = vpop.permute.xlu0 %3564
        %3568 = vset.pattern.permute.xlu0 0
        %3569 = vperm.xlu0 %3568, %v3507
        %v3570 = vpop.permute.xlu0 %3569
        %3573 = vset.pattern.permute.xlu0 0
        %3574 = vperm.xlu0 %3573, %v3508
        %v3575 = vpop.permute.xlu0 %3574
        %3578 = vset.pattern.permute.xlu0 0
        %3579 = vperm.xlu0 %3578, %v3509
        %v3580 = vpop.permute.xlu0 %3579
        %3583 = vset.pattern.permute.xlu0 0
        %3584 = vperm.xlu0 %3583, %v3510
        %v3585 = vpop.permute.xlu0 %3584
        %3588 = vset.pattern.permute.xlu0 0
        %3589 = vperm.xlu0 %3588, %v3511
        %v3590 = vpop.permute.xlu0 %3589
        %3593 = vset.pattern.permute.xlu0 0
        %3594 = vperm.xlu0 %3593, %v3512
        %v3595 = vpop.permute.xlu0 %3594
        %3598 = vset.pattern.permute.xlu0 0
        %3599 = vperm.xlu0 %3598, %v3513
        %v3600 = vpop.permute.xlu0 %3599
        %3603 = vset.pattern.permute.xlu0 0
        %3604 = vperm.xlu0 %3603, %v3514
        %v3605 = vpop.permute.xlu0 %3604
        %3608 = vset.pattern.permute.xlu0 0
        %3609 = vperm.xlu0 %3608, %v3515
        %v3610 = vpop.permute.xlu0 %3609
        %3613 = vset.pattern.permute.xlu0 0
        %3614 = vperm.xlu0 %3613, %v3516
        %v3615 = vpop.permute.xlu0 %3614
        %3618 = vset.pattern.permute.xlu0 0
        %3619 = vperm.xlu0 %3618, %v3517
        %v3620 = vpop.permute.xlu0 %3619
        %3623 = vset.pattern.permute.xlu0 0
        %3624 = vperm.xlu0 %3623, %v3518
        %v3625 = vpop.permute.xlu0 %3624
        %3628 = vset.pattern.permute.xlu0 0
        %3629 = vperm.xlu0 %3628, %v3519
        %v3630 = vpop.permute.xlu0 %3629
        %3633 = vset.pattern.permute.xlu0 0
        %3634 = vperm.xlu0 %3633, %v3520
        %v3635 = vpop.permute.xlu0 %3634
        %3638 = vset.pattern.permute.xlu0 0
        %3639 = vperm.xlu0 %3638, %v3521
        %v3640 = vpop.permute.xlu0 %3639
        %3643 = vset.pattern.permute.xlu0 0
        %3644 = vperm.xlu0 %3643, %v3522
        %v3645 = vpop.permute.xlu0 %3644
        %3648 = vset.pattern.permute.xlu0 0
        %3649 = vperm.xlu0 %3648, %v3523
        %v3650 = vpop.permute.xlu0 %3649
        %3653 = vset.pattern.permute.xlu0 0
        %3654 = vperm.xlu0 %3653, %v3524
        %v3655 = vpop.permute.xlu0 %3654
        %3658 = vset.pattern.permute.xlu0 0
        %3659 = vperm.xlu0 %3658, %v3525
        %v3660 = vpop.permute.xlu0 %3659
        %3663 = vset.pattern.permute.xlu0 0
        %3664 = vperm.xlu0 %3663, %v3526
        %v3665 = vpop.permute.xlu0 %3664
        %3668 = vset.pattern.permute.xlu0 0
        %3669 = vperm.xlu0 %3668, %v3527
        %v3670 = vpop.permute.xlu0 %3669
        %3673 = vset.pattern.permute.xlu0 0
        %3674 = vperm.xlu0 %3673, %v3528
        %v3675 = vpop.permute.xlu0 %3674
        %3678 = vset.pattern.permute.xlu0 0
        %3679 = vperm.xlu0 %3678, %v3529
        %v3680 = vpop.permute.xlu0 %3679
        %3683 = vset.pattern.permute.xlu0 0
        %3684 = vperm.xlu0 %3683, %v3530
        %v3685 = vpop.permute.xlu0 %3684
        %3688 = vset.pattern.permute.xlu0 0
        %3689 = vperm.xlu0 %3688, %v3531
        %v3690 = vpop.permute.xlu0 %3689
        %v3724 = vunpack.c.l.b16 %v3468
        %v3725 = vunpack.c.h.b16 %v3468
        %v3726 = vunpack.c.l.b16 %v3469
        %v3727 = vunpack.c.h.b16 %v3469
        %v3728 = vunpack.c.l.b16 %v3470
        %v3729 = vunpack.c.h.b16 %v3470
        %v3730 = vunpack.c.l.b16 %v3471
        %v3731 = vunpack.c.h.b16 %v3471
        %v3732 = vunpack.c.l.b16 %v3472
        %v3733 = vunpack.c.h.b16 %v3472
        %v3734 = vunpack.c.l.b16 %v3473
        %v3735 = vunpack.c.h.b16 %v3473
        %v3736 = vunpack.c.l.b16 %v3474
        %v3737 = vunpack.c.h.b16 %v3474
        %v3738 = vunpack.c.l.b16 %v3475
        %v3739 = vunpack.c.h.b16 %v3475
        %v3740 = vunpack.c.l.b16 %v3476
        %v3741 = vunpack.c.h.b16 %v3476
        %v3742 = vunpack.c.l.b16 %v3477
        %v3743 = vunpack.c.h.b16 %v3477
        %v3744 = vunpack.c.l.b16 %v3478
        %v3745 = vunpack.c.h.b16 %v3478
        %v3746 = vunpack.c.l.b16 %v3479
        %v3747 = vunpack.c.h.b16 %v3479
        %v3748 = vunpack.c.l.b16 %v3480
        %v3749 = vunpack.c.h.b16 %v3480
        %v3750 = vunpack.c.l.b16 %v3481
        %v3751 = vunpack.c.h.b16 %v3481
        %v3752 = vunpack.c.l.b16 %v3482
        %v3753 = vunpack.c.h.b16 %v3482
        %v3754 = vunpack.c.l.b16 %v3483
        %v3755 = vunpack.c.h.b16 %v3483
        %v3756 = vunpack.c.l.b16 %v3484
        %v3757 = vunpack.c.h.b16 %v3484
        %v3758 = vunpack.c.l.b16 %v3485
        %v3759 = vunpack.c.h.b16 %v3485
        %v3760 = vunpack.c.l.b16 %v3486
        %v3761 = vunpack.c.h.b16 %v3486
        %v3762 = vunpack.c.l.b16 %v3487
        %v3763 = vunpack.c.h.b16 %v3487
        %v3764 = vunpack.c.l.b16 %v3488
        %v3765 = vunpack.c.h.b16 %v3488
        %v3766 = vunpack.c.l.b16 %v3489
        %v3767 = vunpack.c.h.b16 %v3489
        %v3768 = vunpack.c.l.b16 %v3490
        %v3769 = vunpack.c.h.b16 %v3490
        %v3770 = vunpack.c.l.b16 %v3491
        %v3771 = vunpack.c.h.b16 %v3491
        %v3772 = vunpack.c.l.b16 %v3492
        %v3773 = vunpack.c.h.b16 %v3492
        %v3774 = vunpack.c.l.b16 %v3493
        %v3775 = vunpack.c.h.b16 %v3493
        %v3776 = vunpack.c.l.b16 %v3494
        %v3777 = vunpack.c.h.b16 %v3494
        %v3778 = vunpack.c.l.b16 %v3495
        %v3779 = vunpack.c.h.b16 %v3495
        %v3780 = vunpack.c.l.b16 %v3496
        %v3781 = vunpack.c.h.b16 %v3496
        %v3782 = vunpack.c.l.b16 %v3497
        %v3783 = vunpack.c.h.b16 %v3497
        %v3784 = vunpack.c.l.b16 %v3498
        %v3785 = vunpack.c.h.b16 %v3498
        %v3786 = vunpack.c.l.b16 %v3499
        %v3787 = vunpack.c.h.b16 %v3499
        %v3788 = vpack.c.b16 %v3726, %v3724
        %v3789 = vpack.c.b16 %v3727, %v3725
        %v3790 = vpack.c.b16 %v3730, %v3728
        %v3791 = vpack.c.b16 %v3731, %v3729
        %v3792 = vpack.c.b16 %v3734, %v3732
        %v3793 = vpack.c.b16 %v3735, %v3733
        %v3794 = vpack.c.b16 %v3738, %v3736
        %v3795 = vpack.c.b16 %v3739, %v3737
        %v3796 = vpack.c.b16 %v3742, %v3740
        %v3797 = vpack.c.b16 %v3743, %v3741
        %v3798 = vpack.c.b16 %v3746, %v3744
        %v3799 = vpack.c.b16 %v3747, %v3745
        %v3800 = vpack.c.b16 %v3750, %v3748
        %v3801 = vpack.c.b16 %v3751, %v3749
        %v3802 = vpack.c.b16 %v3754, %v3752
        %v3803 = vpack.c.b16 %v3755, %v3753
        %v3804 = vpack.c.b16 %v3758, %v3756
        %v3805 = vpack.c.b16 %v3759, %v3757
        %v3806 = vpack.c.b16 %v3762, %v3760
        %v3807 = vpack.c.b16 %v3763, %v3761
        %v3808 = vpack.c.b16 %v3766, %v3764
        %v3809 = vpack.c.b16 %v3767, %v3765
        %v3810 = vpack.c.b16 %v3770, %v3768
        %v3811 = vpack.c.b16 %v3771, %v3769
        %v3812 = vpack.c.b16 %v3774, %v3772
        %v3813 = vpack.c.b16 %v3775, %v3773
        %v3814 = vpack.c.b16 %v3778, %v3776
        %v3815 = vpack.c.b16 %v3779, %v3777
        %v3816 = vpack.c.b16 %v3782, %v3780
        %v3817 = vpack.c.b16 %v3783, %v3781
        %v3818 = vpack.c.b16 %v3786, %v3784
        %v3819 = vpack.c.b16 %v3787, %v3785
        %3852 = vmatprep.subr.bf16.mxu0 0
        %3853 = vmatpush1.bf16.msra.mxu0 %v3459
        %3854 = vmatprep.subr.bf16.mxu0 0
        %3855 = vmatpush1.bf16.msra.mxu0 %v3458
        %3856 = vmatprep.subr.bf16.mxu0 0
        %3857 = vmatpush1.bf16.msra.mxu0 %v3457
        %3858 = vmatprep.subr.bf16.mxu0 0
        %3859 = vmatpush1.bf16.msra.mxu0 %v3456
        %3860 = vmatprep.subr.bf16.mxu0 0
        %3861 = vmatpush1.bf16.msra.mxu0 %v3455
        %3862 = vmatprep.subr.bf16.mxu0 0
        %3863 = vmatpush1.bf16.msra.mxu0 %v3454
        %3864 = vmatprep.subr.bf16.mxu0 0
        %3865 = vmatpush1.bf16.msra.mxu0 %v3453
        %3866 = vmatprep.subr.bf16.mxu0 0
        %3867 = vmatpush1.bf16.msra.mxu0 %v3452
        %3868 = vmatprep.subr.bf16.mxu0 0
        %3869 = vmatpush2.bf16.msra.mxu0 %v3467
        %3870 = vmatprep.subr.bf16.mxu0 0
        %3871 = vmatpush2.bf16.msra.mxu0 %v3466
        %3872 = vmatprep.subr.bf16.mxu0 0
        %3873 = vmatpush2.bf16.msra.mxu0 %v3465
        %3874 = vmatprep.subr.bf16.mxu0 0
        %3875 = vmatpush2.bf16.msra.mxu0 %v3464
        %3876 = vmatprep.subr.bf16.mxu0 0
        %3877 = vmatpush2.bf16.msra.mxu0 %v3463
        %3878 = vmatprep.subr.bf16.mxu0 0
        %3879 = vmatpush2.bf16.msra.mxu0 %v3462
        %3880 = vmatprep.subr.bf16.mxu0 0
        %3881 = vmatpush2.bf16.msra.mxu0 %v3461
        %3882 = vmatprep.subr.bf16.mxu0 0
        %3883 = vmatpush2.bf16.msra.mxu0 %v3460
        %3884 = vmatprep.mubr.bf16.mxu0 %v3789
        %3885 = vmatmul.mubr.bf16.gmra.mxu0 %v3788
        %v3886 = vpop.f32.mrf.mxu0
        %v3887 = vadd.f32 %v3535, %v3886
        %v3888 = vpop.f32.mrf.mxu0
        %v3889 = vpop.f32.mrf.mxu0
        %v3890 = vadd.f32 %v3540, %v3889
        %v3891 = vpop.f32.mrf.mxu0
        %3892 = vmatprep.mubr.bf16.mxu0 %v3791
        %3893 = vmatmul.mubr.bf16.gmra.mxu0 %v3790
        %v3894 = vpop.f32.mrf.mxu0
        %v3895 = vadd.f32 %v3545, %v3894
        %v3896 = vpop.f32.mrf.mxu0
        %v3897 = vpop.f32.mrf.mxu0
        %v3898 = vadd.f32 %v3550, %v3897
        %v3899 = vpop.f32.mrf.mxu0
        %3900 = vmatprep.mubr.bf16.mxu0 %v3793
        %3901 = vmatmul.mubr.bf16.gmra.mxu0 %v3792
        %v3902 = vpop.f32.mrf.mxu0
        %v3903 = vadd.f32 %v3555, %v3902
        %v3904 = vpop.f32.mrf.mxu0
        %v3905 = vpop.f32.mrf.mxu0
        %v3906 = vadd.f32 %v3560, %v3905
        %v3907 = vpop.f32.mrf.mxu0
        %3908 = vmatprep.mubr.bf16.mxu0 %v3795
        %3909 = vmatmul.mubr.bf16.gmra.mxu0 %v3794
        %v3910 = vpop.f32.mrf.mxu0
        %v3911 = vadd.f32 %v3565, %v3910
        %v3912 = vpop.f32.mrf.mxu0
        %v3913 = vpop.f32.mrf.mxu0
        %v3914 = vadd.f32 %v3570, %v3913
        %v3915 = vpop.f32.mrf.mxu0
        %3916 = vmatprep.mubr.bf16.mxu0 %v3797
        %3917 = vmatmul.mubr.bf16.gmra.mxu0 %v3796
        %v3918 = vpop.f32.mrf.mxu0
        %v3919 = vadd.f32 %v3575, %v3918
        %v3920 = vpop.f32.mrf.mxu0
        %v3921 = vpop.f32.mrf.mxu0
        %v3922 = vadd.f32 %v3580, %v3921
        %v3923 = vpop.f32.mrf.mxu0
        %3924 = vmatprep.mubr.bf16.mxu0 %v3799
        %3925 = vmatmul.mubr.bf16.gmra.mxu0 %v3798
        %v3926 = vpop.f32.mrf.mxu0
        %v3927 = vadd.f32 %v3585, %v3926
        %v3928 = vpop.f32.mrf.mxu0
        %v3929 = vpop.f32.mrf.mxu0
        %v3930 = vadd.f32 %v3590, %v3929
        %v3931 = vpop.f32.mrf.mxu0
        %3932 = vmatprep.mubr.bf16.mxu0 %v3801
        %3933 = vmatmul.mubr.bf16.gmra.mxu0 %v3800
        %v3934 = vpop.f32.mrf.mxu0
        %v3935 = vadd.f32 %v3595, %v3934
        %v3936 = vpop.f32.mrf.mxu0
        %v3937 = vpop.f32.mrf.mxu0
        %v3938 = vadd.f32 %v3600, %v3937
        %v3939 = vpop.f32.mrf.mxu0
        %3940 = vmatprep.mubr.bf16.mxu0 %v3803
        %3941 = vmatmul.mubr.bf16.gmra.mxu0 %v3802
        %v3942 = vpop.f32.mrf.mxu0
        %v3943 = vadd.f32 %v3605, %v3942
        %v3944 = vpop.f32.mrf.mxu0
        %v3945 = vpop.f32.mrf.mxu0
        %v3946 = vadd.f32 %v3610, %v3945
        %v3947 = vpop.f32.mrf.mxu0
        %3948 = vmatprep.mubr.bf16.mxu0 %v3805
        %3949 = vmatmul.mubr.bf16.gmra.mxu0 %v3804
        %v3950 = vpop.f32.mrf.mxu0
        %v3951 = vadd.f32 %v3615, %v3950
        %v3952 = vpop.f32.mrf.mxu0
        %v3953 = vpop.f32.mrf.mxu0
        %v3954 = vadd.f32 %v3620, %v3953
        %v3955 = vpop.f32.mrf.mxu0
        %3956 = vmatprep.mubr.bf16.mxu0 %v3807
        %3957 = vmatmul.mubr.bf16.gmra.mxu0 %v3806
        %v3958 = vpop.f32.mrf.mxu0
        %v3959 = vadd.f32 %v3625, %v3958
        %v3960 = vpop.f32.mrf.mxu0
        %v3961 = vpop.f32.mrf.mxu0
        %v3962 = vadd.f32 %v3630, %v3961
        %v3963 = vpop.f32.mrf.mxu0
        %3964 = vmatprep.mubr.bf16.mxu0 %v3809
        %3965 = vmatmul.mubr.bf16.gmra.mxu0 %v3808
        %v3966 = vpop.f32.mrf.mxu0
        %v3967 = vadd.f32 %v3635, %v3966
        %v3968 = vpop.f32.mrf.mxu0
        %v3969 = vpop.f32.mrf.mxu0
        %v3970 = vadd.f32 %v3640, %v3969
        %v3971 = vpop.f32.mrf.mxu0
        %3972 = vmatprep.mubr.bf16.mxu0 %v3811
        %3973 = vmatmul.mubr.bf16.gmra.mxu0 %v3810
        %v3974 = vpop.f32.mrf.mxu0
        %v3975 = vadd.f32 %v3645, %v3974
        %v3976 = vpop.f32.mrf.mxu0
        %v3977 = vpop.f32.mrf.mxu0
        %v3978 = vadd.f32 %v3650, %v3977
        %v3979 = vpop.f32.mrf.mxu0
        %3980 = vmatprep.mubr.bf16.mxu0 %v3813
        %3981 = vmatmul.mubr.bf16.gmra.mxu0 %v3812
        %v3982 = vpop.f32.mrf.mxu0
        %v3983 = vadd.f32 %v3655, %v3982
        %v3984 = vpop.f32.mrf.mxu0
        %v3985 = vpop.f32.mrf.mxu0
        %v3986 = vadd.f32 %v3660, %v3985
        %v3987 = vpop.f32.mrf.mxu0
        %3988 = vmatprep.mubr.bf16.mxu0 %v3815
        %3989 = vmatmul.mubr.bf16.gmra.mxu0 %v3814
        %v3990 = vpop.f32.mrf.mxu0
        %v3991 = vadd.f32 %v3665, %v3990
        %v3992 = vpop.f32.mrf.mxu0
        %v3993 = vpop.f32.mrf.mxu0
        %v3994 = vadd.f32 %v3670, %v3993
        %v3995 = vpop.f32.mrf.mxu0
        %3996 = vmatprep.mubr.bf16.mxu0 %v3817
        %3997 = vmatmul.mubr.bf16.gmra.mxu0 %v3816
        %v3998 = vpop.f32.mrf.mxu0
        %v3999 = vadd.f32 %v3675, %v3998
        %v4000 = vpop.f32.mrf.mxu0
        %v4001 = vpop.f32.mrf.mxu0
        %v4002 = vadd.f32 %v3680, %v4001
        %v4003 = vpop.f32.mrf.mxu0
        %4004 = vmatprep.mubr.bf16.mxu0 %v3819
        %4005 = vmatmul.mubr.bf16.gmra.mxu0 %v3818
        %v4006 = vpop.f32.mrf.mxu0
        %v4007 = vadd.f32 %v3685, %v4006
        %v4008 = vpop.f32.mrf.mxu0
        %v4009 = vpop.f32.mrf.mxu0
        %v4010 = vadd.f32 %v3690, %v4009
        %v4011 = vpop.f32.mrf.mxu0
        %4012 = vdwg.mxu0
        %v4013 = vxor.u32 %v3887, 2147483648
        %v4014 = vxor.u32 %v3890, 2147483648
        %v4015 = vxor.u32 %v3895, 2147483648
        %v4016 = vxor.u32 %v3898, 2147483648
        %v4017 = vxor.u32 %v3903, 2147483648
        %v4018 = vxor.u32 %v3906, 2147483648
        %v4019 = vxor.u32 %v3911, 2147483648
        %v4020 = vxor.u32 %v3914, 2147483648
        %v4021 = vxor.u32 %v3919, 2147483648
        %v4022 = vxor.u32 %v3922, 2147483648
        %v4023 = vxor.u32 %v3927, 2147483648
        %v4024 = vxor.u32 %v3930, 2147483648
        %v4025 = vxor.u32 %v3935, 2147483648
        %v4026 = vxor.u32 %v3938, 2147483648
        %v4027 = vxor.u32 %v3943, 2147483648
        %v4028 = vxor.u32 %v3946, 2147483648
        %v4029 = vxor.u32 %v3951, 2147483648
        %v4030 = vxor.u32 %v3954, 2147483648
        %v4031 = vxor.u32 %v3959, 2147483648
        %v4032 = vxor.u32 %v3962, 2147483648
        %v4033 = vxor.u32 %v3967, 2147483648
        %v4034 = vxor.u32 %v3970, 2147483648
        %v4035 = vxor.u32 %v3975, 2147483648
        %v4036 = vxor.u32 %v3978, 2147483648
        %v4037 = vxor.u32 %v3983, 2147483648
        %v4038 = vxor.u32 %v3986, 2147483648
        %v4039 = vxor.u32 %v3991, 2147483648
        %v4040 = vxor.u32 %v3994, 2147483648
        %v4041 = vxor.u32 %v3999, 2147483648
        %v4042 = vxor.u32 %v4002, 2147483648
        %v4043 = vxor.u32 %v4007, 2147483648
        %v4044 = vxor.u32 %v4010, 2147483648
        %v4045 = vmul.f32 %v4013, 1.442695
        %v4046 = vpow.pop %v4045
        %v4047 = vmul.f32 %v4014, 1.442695
        %v4048 = vpow.pop %v4047
        %v4049 = vmul.f32 %v4015, 1.442695
        %v4050 = vpow.pop %v4049
        %v4051 = vmul.f32 %v4016, 1.442695
        %v4052 = vpow.pop %v4051
        %v4053 = vmul.f32 %v4017, 1.442695
        %v4054 = vpow.pop %v4053
        %v4055 = vmul.f32 %v4018, 1.442695
        %v4056 = vpow.pop %v4055
        %v4057 = vmul.f32 %v4019, 1.442695
        %v4058 = vpow.pop %v4057
        %v4059 = vmul.f32 %v4020, 1.442695
        %v4060 = vpow.pop %v4059
        %v4061 = vmul.f32 %v4021, 1.442695
        %v4062 = vpow.pop %v4061
        %v4063 = vmul.f32 %v4022, 1.442695
        %v4064 = vpow.pop %v4063
        %v4065 = vmul.f32 %v4023, 1.442695
        %v4066 = vpow.pop %v4065
        %v4067 = vmul.f32 %v4024, 1.442695
        %v4068 = vpow.pop %v4067
        %v4069 = vmul.f32 %v4025, 1.442695
        %v4070 = vpow.pop %v4069
        %v4071 = vmul.f32 %v4026, 1.442695
        %v4072 = vpow.pop %v4071
        %v4073 = vmul.f32 %v4027, 1.442695
        %v4074 = vpow.pop %v4073
        %v4075 = vmul.f32 %v4028, 1.442695
        %v4076 = vpow.pop %v4075
        %v4077 = vmul.f32 %v4029, 1.442695
        %v4078 = vpow.pop %v4077
        %v4079 = vmul.f32 %v4030, 1.442695
        %v4080 = vpow.pop %v4079
        %v4081 = vmul.f32 %v4031, 1.442695
        %v4082 = vpow.pop %v4081
        %v4083 = vmul.f32 %v4032, 1.442695
        %v4084 = vpow.pop %v4083
        %v4085 = vmul.f32 %v4033, 1.442695
        %v4086 = vpow.pop %v4085
        %v4087 = vmul.f32 %v4034, 1.442695
        %v4088 = vpow.pop %v4087
        %v4089 = vmul.f32 %v4035, 1.442695
        %v4090 = vpow.pop %v4089
        %v4091 = vmul.f32 %v4036, 1.442695
        %v4092 = vpow.pop %v4091
        %v4093 = vmul.f32 %v4037, 1.442695
        %v4094 = vpow.pop %v4093
        %v4095 = vmul.f32 %v4038, 1.442695
        %v4096 = vpow.pop %v4095
        %v4097 = vmul.f32 %v4039, 1.442695
        %v4098 = vpow.pop %v4097
        %v4099 = vmul.f32 %v4040, 1.442695
        %v4100 = vpow.pop %v4099
        %v4101 = vmul.f32 %v4041, 1.442695
        %v4102 = vpow.pop %v4101
        %v4103 = vmul.f32 %v4042, 1.442695
        %v4104 = vpow.pop %v4103
        %v4105 = vmul.f32 %v4043, 1.442695
        %v4106 = vpow.pop %v4105
        %v4107 = vmul.f32 %v4044, 1.442695
        %v4108 = vpow.pop %v4107
        %v4109 = vadd.f32 %v4046, 1.0
        %v4110 = vadd.f32 %v4048, 1.0
        %v4111 = vadd.f32 %v4050, 1.0
        %v4112 = vadd.f32 %v4052, 1.0
        %v4113 = vadd.f32 %v4054, 1.0
        %v4114 = vadd.f32 %v4056, 1.0
        %v4115 = vadd.f32 %v4058, 1.0
        %v4116 = vadd.f32 %v4060, 1.0
        %v4117 = vadd.f32 %v4062, 1.0
        %v4118 = vadd.f32 %v4064, 1.0
        %v4119 = vadd.f32 %v4066, 1.0
        %v4120 = vadd.f32 %v4068, 1.0
        %v4121 = vadd.f32 %v4070, 1.0
        %v4122 = vadd.f32 %v4072, 1.0
        %v4123 = vadd.f32 %v4074, 1.0
        %v4124 = vadd.f32 %v4076, 1.0
        %v4125 = vadd.f32 %v4078, 1.0
        %v4126 = vadd.f32 %v4080, 1.0
        %v4127 = vadd.f32 %v4082, 1.0
        %v4128 = vadd.f32 %v4084, 1.0
        %v4129 = vadd.f32 %v4086, 1.0
        %v4130 = vadd.f32 %v4088, 1.0
        %v4131 = vadd.f32 %v4090, 1.0
        %v4132 = vadd.f32 %v4092, 1.0
        %v4133 = vadd.f32 %v4094, 1.0
        %v4134 = vadd.f32 %v4096, 1.0
        %v4135 = vadd.f32 %v4098, 1.0
        %v4136 = vadd.f32 %v4100, 1.0
        %v4137 = vadd.f32 %v4102, 1.0
        %v4138 = vadd.f32 %v4104, 1.0
        %v4139 = vadd.f32 %v4106, 1.0
        %v4140 = vadd.f32 %v4108, 1.0
        %v4141 = vrcp.pop %v4109
        %v4142 = vmul.f32 1.0, %v4141
        %v4143 = vrcp.pop %v4110
        %v4144 = vmul.f32 1.0, %v4143
        %v4145 = vrcp.pop %v4111
        %v4146 = vmul.f32 1.0, %v4145
        %v4147 = vrcp.pop %v4112
        %v4148 = vmul.f32 1.0, %v4147
        %v4149 = vrcp.pop %v4113
        %v4150 = vmul.f32 1.0, %v4149
        %v4151 = vrcp.pop %v4114
        %v4152 = vmul.f32 1.0, %v4151
        %v4153 = vrcp.pop %v4115
        %v4154 = vmul.f32 1.0, %v4153
        %v4155 = vrcp.pop %v4116
        %v4156 = vmul.f32 1.0, %v4155
        %v4157 = vrcp.pop %v4117
        %v4158 = vmul.f32 1.0, %v4157
        %v4159 = vrcp.pop %v4118
        %v4160 = vmul.f32 1.0, %v4159
        %v4161 = vrcp.pop %v4119
        %v4162 = vmul.f32 1.0, %v4161
        %v4163 = vrcp.pop %v4120
        %v4164 = vmul.f32 1.0, %v4163
        %v4165 = vrcp.pop %v4121
        %v4166 = vmul.f32 1.0, %v4165
        %v4167 = vrcp.pop %v4122
        %v4168 = vmul.f32 1.0, %v4167
        %v4169 = vrcp.pop %v4123
        %v4170 = vmul.f32 1.0, %v4169
        %v4171 = vrcp.pop %v4124
        %v4172 = vmul.f32 1.0, %v4171
        %v4173 = vrcp.pop %v4125
        %v4174 = vmul.f32 1.0, %v4173
        %v4175 = vrcp.pop %v4126
        %v4176 = vmul.f32 1.0, %v4175
        %v4177 = vrcp.pop %v4127
        %v4178 = vmul.f32 1.0, %v4177
        %v4179 = vrcp.pop %v4128
        %v4180 = vmul.f32 1.0, %v4179
        %v4181 = vrcp.pop %v4129
        %v4182 = vmul.f32 1.0, %v4181
        %v4183 = vrcp.pop %v4130
        %v4184 = vmul.f32 1.0, %v4183
        %v4185 = vrcp.pop %v4131
        %v4186 = vmul.f32 1.0, %v4185
        %v4187 = vrcp.pop %v4132
        %v4188 = vmul.f32 1.0, %v4187
        %v4189 = vrcp.pop %v4133
        %v4190 = vmul.f32 1.0, %v4189
        %v4191 = vrcp.pop %v4134
        %v4192 = vmul.f32 1.0, %v4191
        %v4193 = vrcp.pop %v4135
        %v4194 = vmul.f32 1.0, %v4193
        %v4195 = vrcp.pop %v4136
        %v4196 = vmul.f32 1.0, %v4195
        %v4197 = vrcp.pop %v4137
        %v4198 = vmul.f32 1.0, %v4197
        %v4199 = vrcp.pop %v4138
        %v4200 = vmul.f32 1.0, %v4199
        %v4201 = vrcp.pop %v4139
        %v4202 = vmul.f32 1.0, %v4201
        %v4203 = vrcp.pop %v4140
        %v4204 = vmul.f32 1.0, %v4203
        %v4205 = vld [vmem:[%s1] sm:$0xff]
        %v4206 = vld [vmem:[%s1 + $0x8] sm:$0xff]
        %v4207 = vld [vmem:[%s1 + $0x10] sm:$0xff]
        %v4208 = vld [vmem:[%s1 + $0x18] sm:$0xff]
        %v4209 = vld [vmem:[%s1 + $0x20] sm:$0xff]
        %v4210 = vld [vmem:[%s1 + $0x28] sm:$0xff]
        %v4211 = vld [vmem:[%s1 + $0x30] sm:$0xff]
        %v4212 = vld [vmem:[%s1 + $0x38] sm:$0xff]
        %v4213 = vld [vmem:[%s1 + $0x40] sm:$0xff]
        %v4214 = vld [vmem:[%s1 + $0x48] sm:$0xff]
        %v4215 = vld [vmem:[%s1 + $0x50] sm:$0xff]
        %v4216 = vld [vmem:[%s1 + $0x58] sm:$0xff]
        %v4217 = vld [vmem:[%s1 + $0x60] sm:$0xff]
        %v4218 = vld [vmem:[%s1 + $0x68] sm:$0xff]
        %v4219 = vld [vmem:[%s1 + $0x70] sm:$0xff]
        %v4220 = vld [vmem:[%s1 + $0x78] sm:$0xff]
        %v4221 = vld [vmem:[%s1 + $0x80] sm:$0xff]
        %v4222 = vld [vmem:[%s1 + $0x88] sm:$0xff]
        %v4223 = vld [vmem:[%s1 + $0x90] sm:$0xff]
        %v4224 = vld [vmem:[%s1 + $0x98] sm:$0xff]
        %v4225 = vld [vmem:[%s1 + $0xa0] sm:$0xff]
        %v4226 = vld [vmem:[%s1 + $0xa8] sm:$0xff]
        %v4227 = vld [vmem:[%s1 + $0xb0] sm:$0xff]
        %v4228 = vld [vmem:[%s1 + $0xb8] sm:$0xff]
        %v4229 = vld [vmem:[%s1 + $0xc0] sm:$0xff]
        %v4230 = vld [vmem:[%s1 + $0xc8] sm:$0xff]
        %v4231 = vld [vmem:[%s1 + $0xd0] sm:$0xff]
        %v4232 = vld [vmem:[%s1 + $0xd8] sm:$0xff]
        %v4233 = vld [vmem:[%s1 + $0xe0] sm:$0xff]
        %v4234 = vld [vmem:[%s1 + $0xe8] sm:$0xff]
        %v4235 = vld [vmem:[%s1 + $0xf0] sm:$0xff]
        %v4236 = vld [vmem:[%s1 + $0xf8] sm:$0xff]
        %v4237 = vld [vmem:[%s1 + $0x100] sm:$0xff]
        %v4238 = vld [vmem:[%s1 + $0x108] sm:$0xff]
        %v4239 = vld [vmem:[%s1 + $0x110] sm:$0xff]
        %v4240 = vld [vmem:[%s1 + $0x118] sm:$0xff]
        %v4241 = vld [vmem:[%s1 + $0x120] sm:$0xff]
        %v4242 = vld [vmem:[%s1 + $0x128] sm:$0xff]
        %v4243 = vld [vmem:[%s1 + $0x130] sm:$0xff]
        %v4244 = vld [vmem:[%s1 + $0x138] sm:$0xff]
        %v4245 = vld [vmem:[%s1 + $0x140] sm:$0xff]
        %v4246 = vld [vmem:[%s1 + $0x148] sm:$0xff]
        %v4247 = vld [vmem:[%s1 + $0x150] sm:$0xff]
        %v4248 = vld [vmem:[%s1 + $0x158] sm:$0xff]
        %v4249 = vld [vmem:[%s1 + $0x160] sm:$0xff]
        %v4250 = vld [vmem:[%s1 + $0x168] sm:$0xff]
        %v4251 = vld [vmem:[%s1 + $0x170] sm:$0xff]
        %v4252 = vld [vmem:[%s1 + $0x178] sm:$0xff]
        %v4253 = vld [vmem:[%s1 + $0x180] sm:$0xff]
        %v4254 = vld [vmem:[%s1 + $0x188] sm:$0xff]
        %v4255 = vld [vmem:[%s1 + $0x190] sm:$0xff]
        %v4256 = vld [vmem:[%s1 + $0x198] sm:$0xff]
        %v4257 = vld [vmem:[%s1 + $0x1a0] sm:$0xff]
        %v4258 = vld [vmem:[%s1 + $0x1a8] sm:$0xff]
        %v4259 = vld [vmem:[%s1 + $0x1b0] sm:$0xff]
        %v4260 = vld [vmem:[%s1 + $0x1b8] sm:$0xff]
        %v4261 = vld [vmem:[%s1 + $0x1c0] sm:$0xff]
        %v4262 = vld [vmem:[%s1 + $0x1c8] sm:$0xff]
        %v4263 = vld [vmem:[%s1 + $0x1d0] sm:$0xff]
        %v4264 = vld [vmem:[%s1 + $0x1d8] sm:$0xff]
        %v4265 = vld [vmem:[%s1 + $0x1e0] sm:$0xff]
        %v4266 = vld [vmem:[%s1 + $0x1e8] sm:$0xff]
        %v4267 = vld [vmem:[%s1 + $0x1f0] sm:$0xff]
        %v4268 = vld [vmem:[%s1 + $0x1f8] sm:$0xff]
        %v4269 = vld [vmem:[%s1 + $0x200] sm:$0xff]
        %v4270 = vld [vmem:[%s1 + $0x208] sm:$0xff]
        %v4271 = vld [vmem:[%s1 + $0x210] sm:$0xff]
        %v4272 = vld [vmem:[%s1 + $0x218] sm:$0xff]
        %v4273 = vld [vmem:[%s1 + $0x220] sm:$0xff]
        %v4274 = vld [vmem:[%s1 + $0x228] sm:$0xff]
        %v4275 = vld [vmem:[%s1 + $0x230] sm:$0xff]
        %v4276 = vld [vmem:[%s1 + $0x238] sm:$0xff]
        %v4277 = vld [vmem:[%s1 + $0x240] sm:$0xff]
        %v4278 = vld [vmem:[%s1 + $0x248] sm:$0xff]
        %v4279 = vld [vmem:[%s1 + $0x250] sm:$0xff]
        %v4280 = vld [vmem:[%s1 + $0x258] sm:$0xff]
        %v4281 = vld [vmem:[%s1 + $0x260] sm:$0xff]
        %v4282 = vld [vmem:[%s1 + $0x268] sm:$0xff]
        %v4283 = vld [vmem:[%s1 + $0x270] sm:$0xff]
        %v4284 = vld [vmem:[%s1 + $0x278] sm:$0xff]
        %4286 = vset.pattern.permute.xlu0 0
        %4287 = vperm.xlu0 %4286, %v4205
        %v4288 = vpop.permute.xlu0 %4287
        %4291 = vset.pattern.permute.xlu0 0
        %4292 = vperm.xlu0 %4291, %v4206
        %v4293 = vpop.permute.xlu0 %4292
        %4296 = vset.pattern.permute.xlu0 0
        %4297 = vperm.xlu0 %4296, %v4207
        %v4298 = vpop.permute.xlu0 %4297
        %4301 = vset.pattern.permute.xlu0 0
        %4302 = vperm.xlu0 %4301, %v4208
        %v4303 = vpop.permute.xlu0 %4302
        %4306 = vset.pattern.permute.xlu0 0
        %4307 = vperm.xlu0 %4306, %v4209
        %v4308 = vpop.permute.xlu0 %4307
        %4311 = vset.pattern.permute.xlu0 0
        %4312 = vperm.xlu0 %4311, %v4210
        %v4313 = vpop.permute.xlu0 %4312
        %4316 = vset.pattern.permute.xlu0 0
        %4317 = vperm.xlu0 %4316, %v4211
        %v4318 = vpop.permute.xlu0 %4317
        %4321 = vset.pattern.permute.xlu0 0
        %4322 = vperm.xlu0 %4321, %v4212
        %v4323 = vpop.permute.xlu0 %4322
        %4326 = vset.pattern.permute.xlu0 0
        %4327 = vperm.xlu0 %4326, %v4213
        %v4328 = vpop.permute.xlu0 %4327
        %4331 = vset.pattern.permute.xlu0 0
        %4332 = vperm.xlu0 %4331, %v4214
        %v4333 = vpop.permute.xlu0 %4332
        %4336 = vset.pattern.permute.xlu0 0
        %4337 = vperm.xlu0 %4336, %v4215
        %v4338 = vpop.permute.xlu0 %4337
        %4341 = vset.pattern.permute.xlu0 0
        %4342 = vperm.xlu0 %4341, %v4216
        %v4343 = vpop.permute.xlu0 %4342
        %4346 = vset.pattern.permute.xlu0 0
        %4347 = vperm.xlu0 %4346, %v4217
        %v4348 = vpop.permute.xlu0 %4347
        %4351 = vset.pattern.permute.xlu0 0
        %4352 = vperm.xlu0 %4351, %v4218
        %v4353 = vpop.permute.xlu0 %4352
        %4356 = vset.pattern.permute.xlu0 0
        %4357 = vperm.xlu0 %4356, %v4219
        %v4358 = vpop.permute.xlu0 %4357
        %4361 = vset.pattern.permute.xlu0 0
        %4362 = vperm.xlu0 %4361, %v4220
        %v4363 = vpop.permute.xlu0 %4362
        %4366 = vset.pattern.permute.xlu0 0
        %4367 = vperm.xlu0 %4366, %v4221
        %v4368 = vpop.permute.xlu0 %4367
        %4371 = vset.pattern.permute.xlu0 0
        %4372 = vperm.xlu0 %4371, %v4222
        %v4373 = vpop.permute.xlu0 %4372
        %4376 = vset.pattern.permute.xlu0 0
        %4377 = vperm.xlu0 %4376, %v4223
        %v4378 = vpop.permute.xlu0 %4377
        %4381 = vset.pattern.permute.xlu0 0
        %4382 = vperm.xlu0 %4381, %v4224
        %v4383 = vpop.permute.xlu0 %4382
        %4386 = vset.pattern.permute.xlu0 0
        %4387 = vperm.xlu0 %4386, %v4225
        %v4388 = vpop.permute.xlu0 %4387
        %4391 = vset.pattern.permute.xlu0 0
        %4392 = vperm.xlu0 %4391, %v4226
        %v4393 = vpop.permute.xlu0 %4392
        %4396 = vset.pattern.permute.xlu0 0
        %4397 = vperm.xlu0 %4396, %v4227
        %v4398 = vpop.permute.xlu0 %4397
        %4401 = vset.pattern.permute.xlu0 0
        %4402 = vperm.xlu0 %4401, %v4228
        %v4403 = vpop.permute.xlu0 %4402
        %4406 = vset.pattern.permute.xlu0 0
        %4407 = vperm.xlu0 %4406, %v4229
        %v4408 = vpop.permute.xlu0 %4407
        %4411 = vset.pattern.permute.xlu0 0
        %4412 = vperm.xlu0 %4411, %v4230
        %v4413 = vpop.permute.xlu0 %4412
        %4416 = vset.pattern.permute.xlu0 0
        %4417 = vperm.xlu0 %4416, %v4231
        %v4418 = vpop.permute.xlu0 %4417
        %4421 = vset.pattern.permute.xlu0 0
        %4422 = vperm.xlu0 %4421, %v4232
        %v4423 = vpop.permute.xlu0 %4422
        %4426 = vset.pattern.permute.xlu0 0
        %4427 = vperm.xlu0 %4426, %v4233
        %v4428 = vpop.permute.xlu0 %4427
        %4431 = vset.pattern.permute.xlu0 0
        %4432 = vperm.xlu0 %4431, %v4234
        %v4433 = vpop.permute.xlu0 %4432
        %4436 = vset.pattern.permute.xlu0 0
        %4437 = vperm.xlu0 %4436, %v4235
        %v4438 = vpop.permute.xlu0 %4437
        %4441 = vset.pattern.permute.xlu0 0
        %4442 = vperm.xlu0 %4441, %v4236
        %v4443 = vpop.permute.xlu0 %4442
        %4446 = vset.pattern.permute.xlu0 0
        %4447 = vperm.xlu0 %4446, %v4237
        %v4448 = vpop.permute.xlu0 %4447
        %4451 = vset.pattern.permute.xlu0 0
        %4452 = vperm.xlu0 %4451, %v4238
        %v4453 = vpop.permute.xlu0 %4452
        %4456 = vset.pattern.permute.xlu0 0
        %4457 = vperm.xlu0 %4456, %v4239
        %v4458 = vpop.permute.xlu0 %4457
        %4461 = vset.pattern.permute.xlu0 0
        %4462 = vperm.xlu0 %4461, %v4240
        %v4463 = vpop.permute.xlu0 %4462
        %4466 = vset.pattern.permute.xlu0 0
        %4467 = vperm.xlu0 %4466, %v4241
        %v4468 = vpop.permute.xlu0 %4467
        %4471 = vset.pattern.permute.xlu0 0
        %4472 = vperm.xlu0 %4471, %v4242
        %v4473 = vpop.permute.xlu0 %4472
        %4476 = vset.pattern.permute.xlu0 0
        %4477 = vperm.xlu0 %4476, %v4243
        %v4478 = vpop.permute.xlu0 %4477
        %4481 = vset.pattern.permute.xlu0 0
        %4482 = vperm.xlu0 %4481, %v4244
        %v4483 = vpop.permute.xlu0 %4482
        %4486 = vset.pattern.permute.xlu0 0
        %4487 = vperm.xlu0 %4486, %v4245
        %v4488 = vpop.permute.xlu0 %4487
        %4491 = vset.pattern.permute.xlu0 0
        %4492 = vperm.xlu0 %4491, %v4246
        %v4493 = vpop.permute.xlu0 %4492
        %4496 = vset.pattern.permute.xlu0 0
        %4497 = vperm.xlu0 %4496, %v4247
        %v4498 = vpop.permute.xlu0 %4497
        %4501 = vset.pattern.permute.xlu0 0
        %4502 = vperm.xlu0 %4501, %v4248
        %v4503 = vpop.permute.xlu0 %4502
        %4506 = vset.pattern.permute.xlu0 0
        %4507 = vperm.xlu0 %4506, %v4249
        %v4508 = vpop.permute.xlu0 %4507
        %4511 = vset.pattern.permute.xlu0 0
        %4512 = vperm.xlu0 %4511, %v4250
        %v4513 = vpop.permute.xlu0 %4512
        %4516 = vset.pattern.permute.xlu0 0
        %4517 = vperm.xlu0 %4516, %v4251
        %v4518 = vpop.permute.xlu0 %4517
        %4521 = vset.pattern.permute.xlu0 0
        %4522 = vperm.xlu0 %4521, %v4252
        %v4523 = vpop.permute.xlu0 %4522
        %4526 = vset.pattern.permute.xlu0 0
        %4527 = vperm.xlu0 %4526, %v4253
        %v4528 = vpop.permute.xlu0 %4527
        %4531 = vset.pattern.permute.xlu0 0
        %4532 = vperm.xlu0 %4531, %v4254
        %v4533 = vpop.permute.xlu0 %4532
        %4536 = vset.pattern.permute.xlu0 0
        %4537 = vperm.xlu0 %4536, %v4255
        %v4538 = vpop.permute.xlu0 %4537
        %4541 = vset.pattern.permute.xlu0 0
        %4542 = vperm.xlu0 %4541, %v4256
        %v4543 = vpop.permute.xlu0 %4542
        %4546 = vset.pattern.permute.xlu0 0
        %4547 = vperm.xlu0 %4546, %v4257
        %v4548 = vpop.permute.xlu0 %4547
        %4551 = vset.pattern.permute.xlu0 0
        %4552 = vperm.xlu0 %4551, %v4258
        %v4553 = vpop.permute.xlu0 %4552
        %4556 = vset.pattern.permute.xlu0 0
        %4557 = vperm.xlu0 %4556, %v4259
        %v4558 = vpop.permute.xlu0 %4557
        %4561 = vset.pattern.permute.xlu0 0
        %4562 = vperm.xlu0 %4561, %v4260
        %v4563 = vpop.permute.xlu0 %4562
        %4566 = vset.pattern.permute.xlu0 0
        %4567 = vperm.xlu0 %4566, %v4261
        %v4568 = vpop.permute.xlu0 %4567
        %4571 = vset.pattern.permute.xlu0 0
        %4572 = vperm.xlu0 %4571, %v4262
        %v4573 = vpop.permute.xlu0 %4572
        %4576 = vset.pattern.permute.xlu0 0
        %4577 = vperm.xlu0 %4576, %v4263
        %v4578 = vpop.permute.xlu0 %4577
        %4581 = vset.pattern.permute.xlu0 0
        %4582 = vperm.xlu0 %4581, %v4264
        %v4583 = vpop.permute.xlu0 %4582
        %4586 = vset.pattern.permute.xlu0 0
        %4587 = vperm.xlu0 %4586, %v4265
        %v4588 = vpop.permute.xlu0 %4587
        %4591 = vset.pattern.permute.xlu0 0
        %4592 = vperm.xlu0 %4591, %v4266
        %v4593 = vpop.permute.xlu0 %4592
        %4596 = vset.pattern.permute.xlu0 0
        %4597 = vperm.xlu0 %4596, %v4267
        %v4598 = vpop.permute.xlu0 %4597
        %4601 = vset.pattern.permute.xlu0 0
        %4602 = vperm.xlu0 %4601, %v4268
        %v4603 = vpop.permute.xlu0 %4602
        %4606 = vset.pattern.permute.xlu0 0
        %4607 = vperm.xlu0 %4606, %v4269
        %v4608 = vpop.permute.xlu0 %4607
        %4611 = vset.pattern.permute.xlu0 0
        %4612 = vperm.xlu0 %4611, %v4270
        %v4613 = vpop.permute.xlu0 %4612
        %4616 = vset.pattern.permute.xlu0 0
        %4617 = vperm.xlu0 %4616, %v4271
        %v4618 = vpop.permute.xlu0 %4617
        %4621 = vset.pattern.permute.xlu0 0
        %4622 = vperm.xlu0 %4621, %v4272
        %v4623 = vpop.permute.xlu0 %4622
        %4626 = vset.pattern.permute.xlu0 0
        %4627 = vperm.xlu0 %4626, %v4273
        %v4628 = vpop.permute.xlu0 %4627
        %4631 = vset.pattern.permute.xlu0 0
        %4632 = vperm.xlu0 %4631, %v4274
        %v4633 = vpop.permute.xlu0 %4632
        %4636 = vset.pattern.permute.xlu0 0
        %4637 = vperm.xlu0 %4636, %v4275
        %v4638 = vpop.permute.xlu0 %4637
        %4641 = vset.pattern.permute.xlu0 0
        %4642 = vperm.xlu0 %4641, %v4276
        %v4643 = vpop.permute.xlu0 %4642
        %4646 = vset.pattern.permute.xlu0 0
        %4647 = vperm.xlu0 %4646, %v4277
        %v4648 = vpop.permute.xlu0 %4647
        %4651 = vset.pattern.permute.xlu0 0
        %4652 = vperm.xlu0 %4651, %v4278
        %v4653 = vpop.permute.xlu0 %4652
        %4656 = vset.pattern.permute.xlu0 0
        %4657 = vperm.xlu0 %4656, %v4279
        %v4658 = vpop.permute.xlu0 %4657
        %4661 = vset.pattern.permute.xlu0 0
        %4662 = vperm.xlu0 %4661, %v4280
        %v4663 = vpop.permute.xlu0 %4662
        %4666 = vset.pattern.permute.xlu0 0
        %4667 = vperm.xlu0 %4666, %v4281
        %v4668 = vpop.permute.xlu0 %4667
        %4671 = vset.pattern.permute.xlu0 0
        %4672 = vperm.xlu0 %4671, %v4282
        %v4673 = vpop.permute.xlu0 %4672
        %4676 = vset.pattern.permute.xlu0 0
        %4677 = vperm.xlu0 %4676, %v4283
        %v4678 = vpop.permute.xlu0 %4677
        %4681 = vset.pattern.permute.xlu0 0
        %4682 = vperm.xlu0 %4681, %v4284
        %v4683 = vpop.permute.xlu0 %4682
        %v4685 = vmul.f32 %v465, %v4288
        %v4686 = vmul.f32 %v466, %v4293
        %v4687 = vmul.f32 %v467, %v4298
        %v4688 = vmul.f32 %v468, %v4303
        %v4689 = vmul.f32 %v469, %v4308
        %v4690 = vmul.f32 %v470, %v4313
        %v4691 = vmul.f32 %v471, %v4318
        %v4692 = vmul.f32 %v472, %v4323
        %v4693 = vmul.f32 %v473, %v4328
        %v4694 = vmul.f32 %v474, %v4333
        %v4695 = vmul.f32 %v475, %v4338
        %v4696 = vmul.f32 %v476, %v4343
        %v4697 = vmul.f32 %v477, %v4348
        %v4698 = vmul.f32 %v478, %v4353
        %v4699 = vmul.f32 %v479, %v4358
        %v4700 = vmul.f32 %v480, %v4363
        %v4701 = vmul.f32 %v481, %v4368
        %v4702 = vmul.f32 %v482, %v4373
        %v4703 = vmul.f32 %v483, %v4378
        %v4704 = vmul.f32 %v484, %v4383
        %v4705 = vmul.f32 %v485, %v4388
        %v4706 = vmul.f32 %v486, %v4393
        %v4707 = vmul.f32 %v487, %v4398
        %v4708 = vmul.f32 %v488, %v4403
        %v4709 = vmul.f32 %v489, %v4408
        %v4710 = vmul.f32 %v490, %v4413
        %v4711 = vmul.f32 %v491, %v4418
        %v4712 = vmul.f32 %v492, %v4423
        %v4713 = vmul.f32 %v493, %v4428
        %v4714 = vmul.f32 %v494, %v4433
        %v4715 = vmul.f32 %v495, %v4438
        %v4716 = vmul.f32 %v496, %v4443
        %v4717 = vmul.f32 %v497, %v4448
        %v4718 = vmul.f32 %v498, %v4453
        %v4719 = vmul.f32 %v499, %v4458
        %v4720 = vmul.f32 %v500, %v4463
        %v4721 = vmul.f32 %v501, %v4468
        %v4722 = vmul.f32 %v502, %v4473
        %v4723 = vmul.f32 %v503, %v4478
        %v4724 = vmul.f32 %v504, %v4483
        %v4725 = vmul.f32 %v505, %v4488
        %v4726 = vmul.f32 %v506, %v4493
        %v4727 = vmul.f32 %v507, %v4498
        %v4728 = vmul.f32 %v508, %v4503
        %v4729 = vmul.f32 %v509, %v4508
        %v4730 = vmul.f32 %v510, %v4513
        %v4731 = vmul.f32 %v511, %v4518
        %v4732 = vmul.f32 %v512, %v4523
        %v4733 = vmul.f32 %v513, %v4528
        %v4734 = vmul.f32 %v514, %v4533
        %v4735 = vmul.f32 %v515, %v4538
        %v4736 = vmul.f32 %v516, %v4543
        %v4737 = vmul.f32 %v517, %v4548
        %v4738 = vmul.f32 %v518, %v4553
        %v4739 = vmul.f32 %v519, %v4558
        %v4740 = vmul.f32 %v520, %v4563
        %v4741 = vmul.f32 %v521, %v4568
        %v4742 = vmul.f32 %v522, %v4573
        %v4743 = vmul.f32 %v523, %v4578
        %v4744 = vmul.f32 %v524, %v4583
        %v4745 = vmul.f32 %v525, %v4588
        %v4746 = vmul.f32 %v526, %v4593
        %v4747 = vmul.f32 %v527, %v4598
        %v4748 = vmul.f32 %v528, %v4603
        %v4749 = vmul.f32 %v529, %v4608
        %v4750 = vmul.f32 %v530, %v4613
        %v4751 = vmul.f32 %v531, %v4618
        %v4752 = vmul.f32 %v532, %v4623
        %v4753 = vmul.f32 %v533, %v4628
        %v4754 = vmul.f32 %v534, %v4633
        %v4755 = vmul.f32 %v535, %v4638
        %v4756 = vmul.f32 %v536, %v4643
        %v4757 = vmul.f32 %v537, %v4648
        %v4758 = vmul.f32 %v538, %v4653
        %v4759 = vmul.f32 %v539, %v4658
        %v4760 = vmul.f32 %v540, %v4663
        %v4761 = vmul.f32 %v541, %v4668
        %v4762 = vmul.f32 %v542, %v4673
        %v4763 = vmul.f32 %v543, %v4678
        %v4764 = vmul.f32 %v544, %v4683
        %v4765 = vld [vmem:[%s2] sm:$0xff]
        %v4766 = vld [vmem:[%s2 + $0x8] sm:$0xff]
        %v4767 = vld [vmem:[%s2 + $0x10] sm:$0xff]
        %v4768 = vld [vmem:[%s2 + $0x18] sm:$0xff]
        %v4769 = vld [vmem:[%s2 + $0x20] sm:$0xff]
        %v4770 = vld [vmem:[%s2 + $0x28] sm:$0xff]
        %v4771 = vld [vmem:[%s2 + $0x30] sm:$0xff]
        %v4772 = vld [vmem:[%s2 + $0x38] sm:$0xff]
        %v4773 = vld [vmem:[%s2 + $0x40] sm:$0xff]
        %v4774 = vld [vmem:[%s2 + $0x48] sm:$0xff]
        %v4775 = vld [vmem:[%s2 + $0x50] sm:$0xff]
        %v4776 = vld [vmem:[%s2 + $0x58] sm:$0xff]
        %v4777 = vld [vmem:[%s2 + $0x60] sm:$0xff]
        %v4778 = vld [vmem:[%s2 + $0x68] sm:$0xff]
        %v4779 = vld [vmem:[%s2 + $0x70] sm:$0xff]
        %v4780 = vld [vmem:[%s2 + $0x78] sm:$0xff]
        %v4781 = vld [vmem:[%s2 + $0x80] sm:$0xff]
        %v4782 = vld [vmem:[%s2 + $0x88] sm:$0xff]
        %v4783 = vld [vmem:[%s2 + $0x90] sm:$0xff]
        %v4784 = vld [vmem:[%s2 + $0x98] sm:$0xff]
        %v4785 = vld [vmem:[%s2 + $0xa0] sm:$0xff]
        %v4786 = vld [vmem:[%s2 + $0xa8] sm:$0xff]
        %v4787 = vld [vmem:[%s2 + $0xb0] sm:$0xff]
        %v4788 = vld [vmem:[%s2 + $0xb8] sm:$0xff]
        %v4789 = vld [vmem:[%s2 + $0xc0] sm:$0xff]
        %v4790 = vld [vmem:[%s2 + $0xc8] sm:$0xff]
        %v4791 = vld [vmem:[%s2 + $0xd0] sm:$0xff]
        %v4792 = vld [vmem:[%s2 + $0xd8] sm:$0xff]
        %v4793 = vld [vmem:[%s2 + $0xe0] sm:$0xff]
        %v4794 = vld [vmem:[%s2 + $0xe8] sm:$0xff]
        %v4795 = vld [vmem:[%s2 + $0xf0] sm:$0xff]
        %v4796 = vld [vmem:[%s2 + $0xf8] sm:$0xff]
        %v4797 = vld [vmem:[%s2 + $0x100] sm:$0xff]
        %v4798 = vld [vmem:[%s2 + $0x108] sm:$0xff]
        %v4799 = vld [vmem:[%s2 + $0x110] sm:$0xff]
        %v4800 = vld [vmem:[%s2 + $0x118] sm:$0xff]
        %v4801 = vld [vmem:[%s2 + $0x120] sm:$0xff]
        %v4802 = vld [vmem:[%s2 + $0x128] sm:$0xff]
        %v4803 = vld [vmem:[%s2 + $0x130] sm:$0xff]
        %v4804 = vld [vmem:[%s2 + $0x138] sm:$0xff]
        %v4805 = vld [vmem:[%s2 + $0x140] sm:$0xff]
        %v4806 = vld [vmem:[%s2 + $0x148] sm:$0xff]
        %v4807 = vld [vmem:[%s2 + $0x150] sm:$0xff]
        %v4808 = vld [vmem:[%s2 + $0x158] sm:$0xff]
        %v4809 = vld [vmem:[%s2 + $0x160] sm:$0xff]
        %v4810 = vld [vmem:[%s2 + $0x168] sm:$0xff]
        %v4811 = vld [vmem:[%s2 + $0x170] sm:$0xff]
        %v4812 = vld [vmem:[%s2 + $0x178] sm:$0xff]
        %v4813 = vld [vmem:[%s2 + $0x180] sm:$0xff]
        %v4814 = vld [vmem:[%s2 + $0x188] sm:$0xff]
        %v4815 = vld [vmem:[%s2 + $0x190] sm:$0xff]
        %v4816 = vld [vmem:[%s2 + $0x198] sm:$0xff]
        %v4817 = vld [vmem:[%s2 + $0x1a0] sm:$0xff]
        %v4818 = vld [vmem:[%s2 + $0x1a8] sm:$0xff]
        %v4819 = vld [vmem:[%s2 + $0x1b0] sm:$0xff]
        %v4820 = vld [vmem:[%s2 + $0x1b8] sm:$0xff]
        %v4821 = vld [vmem:[%s2 + $0x1c0] sm:$0xff]
        %v4822 = vld [vmem:[%s2 + $0x1c8] sm:$0xff]
        %v4823 = vld [vmem:[%s2 + $0x1d0] sm:$0xff]
        %v4824 = vld [vmem:[%s2 + $0x1d8] sm:$0xff]
        %v4825 = vld [vmem:[%s2 + $0x1e0] sm:$0xff]
        %v4826 = vld [vmem:[%s2 + $0x1e8] sm:$0xff]
        %v4827 = vld [vmem:[%s2 + $0x1f0] sm:$0xff]
        %v4828 = vld [vmem:[%s2 + $0x1f8] sm:$0xff]
        %v4829 = vld [vmem:[%s2 + $0x200] sm:$0xff]
        %v4830 = vld [vmem:[%s2 + $0x208] sm:$0xff]
        %v4831 = vld [vmem:[%s2 + $0x210] sm:$0xff]
        %v4832 = vld [vmem:[%s2 + $0x218] sm:$0xff]
        %v4833 = vld [vmem:[%s2 + $0x220] sm:$0xff]
        %v4834 = vld [vmem:[%s2 + $0x228] sm:$0xff]
        %v4835 = vld [vmem:[%s2 + $0x230] sm:$0xff]
        %v4836 = vld [vmem:[%s2 + $0x238] sm:$0xff]
        %v4837 = vld [vmem:[%s2 + $0x240] sm:$0xff]
        %v4838 = vld [vmem:[%s2 + $0x248] sm:$0xff]
        %v4839 = vld [vmem:[%s2 + $0x250] sm:$0xff]
        %v4840 = vld [vmem:[%s2 + $0x258] sm:$0xff]
        %v4841 = vld [vmem:[%s2 + $0x260] sm:$0xff]
        %v4842 = vld [vmem:[%s2 + $0x268] sm:$0xff]
        %v4843 = vld [vmem:[%s2 + $0x270] sm:$0xff]
        %v4844 = vld [vmem:[%s2 + $0x278] sm:$0xff]
        %4846 = vset.pattern.permute.xlu0 0
        %4847 = vperm.xlu0 %4846, %v4765
        %v4848 = vpop.permute.xlu0 %4847
        %4851 = vset.pattern.permute.xlu0 0
        %4852 = vperm.xlu0 %4851, %v4766
        %v4853 = vpop.permute.xlu0 %4852
        %4856 = vset.pattern.permute.xlu0 0
        %4857 = vperm.xlu0 %4856, %v4767
        %v4858 = vpop.permute.xlu0 %4857
        %4861 = vset.pattern.permute.xlu0 0
        %4862 = vperm.xlu0 %4861, %v4768
        %v4863 = vpop.permute.xlu0 %4862
        %4866 = vset.pattern.permute.xlu0 0
        %4867 = vperm.xlu0 %4866, %v4769
        %v4868 = vpop.permute.xlu0 %4867
        %4871 = vset.pattern.permute.xlu0 0
        %4872 = vperm.xlu0 %4871, %v4770
        %v4873 = vpop.permute.xlu0 %4872
        %4876 = vset.pattern.permute.xlu0 0
        %4877 = vperm.xlu0 %4876, %v4771
        %v4878 = vpop.permute.xlu0 %4877
        %4881 = vset.pattern.permute.xlu0 0
        %4882 = vperm.xlu0 %4881, %v4772
        %v4883 = vpop.permute.xlu0 %4882
        %4886 = vset.pattern.permute.xlu0 0
        %4887 = vperm.xlu0 %4886, %v4773
        %v4888 = vpop.permute.xlu0 %4887
        %4891 = vset.pattern.permute.xlu0 0
        %4892 = vperm.xlu0 %4891, %v4774
        %v4893 = vpop.permute.xlu0 %4892
        %4896 = vset.pattern.permute.xlu0 0
        %4897 = vperm.xlu0 %4896, %v4775
        %v4898 = vpop.permute.xlu0 %4897
        %4901 = vset.pattern.permute.xlu0 0
        %4902 = vperm.xlu0 %4901, %v4776
        %v4903 = vpop.permute.xlu0 %4902
        %4906 = vset.pattern.permute.xlu0 0
        %4907 = vperm.xlu0 %4906, %v4777
        %v4908 = vpop.permute.xlu0 %4907
        %4911 = vset.pattern.permute.xlu0 0
        %4912 = vperm.xlu0 %4911, %v4778
        %v4913 = vpop.permute.xlu0 %4912
        %4916 = vset.pattern.permute.xlu0 0
        %4917 = vperm.xlu0 %4916, %v4779
        %v4918 = vpop.permute.xlu0 %4917
        %4921 = vset.pattern.permute.xlu0 0
        %4922 = vperm.xlu0 %4921, %v4780
        %v4923 = vpop.permute.xlu0 %4922
        %4926 = vset.pattern.permute.xlu0 0
        %4927 = vperm.xlu0 %4926, %v4781
        %v4928 = vpop.permute.xlu0 %4927
        %4931 = vset.pattern.permute.xlu0 0
        %4932 = vperm.xlu0 %4931, %v4782
        %v4933 = vpop.permute.xlu0 %4932
        %4936 = vset.pattern.permute.xlu0 0
        %4937 = vperm.xlu0 %4936, %v4783
        %v4938 = vpop.permute.xlu0 %4937
        %4941 = vset.pattern.permute.xlu0 0
        %4942 = vperm.xlu0 %4941, %v4784
        %v4943 = vpop.permute.xlu0 %4942
        %4946 = vset.pattern.permute.xlu0 0
        %4947 = vperm.xlu0 %4946, %v4785
        %v4948 = vpop.permute.xlu0 %4947
        %4951 = vset.pattern.permute.xlu0 0
        %4952 = vperm.xlu0 %4951, %v4786
        %v4953 = vpop.permute.xlu0 %4952
        %4956 = vset.pattern.permute.xlu0 0
        %4957 = vperm.xlu0 %4956, %v4787
        %v4958 = vpop.permute.xlu0 %4957
        %4961 = vset.pattern.permute.xlu0 0
        %4962 = vperm.xlu0 %4961, %v4788
        %v4963 = vpop.permute.xlu0 %4962
        %4966 = vset.pattern.permute.xlu0 0
        %4967 = vperm.xlu0 %4966, %v4789
        %v4968 = vpop.permute.xlu0 %4967
        %4971 = vset.pattern.permute.xlu0 0
        %4972 = vperm.xlu0 %4971, %v4790
        %v4973 = vpop.permute.xlu0 %4972
        %4976 = vset.pattern.permute.xlu0 0
        %4977 = vperm.xlu0 %4976, %v4791
        %v4978 = vpop.permute.xlu0 %4977
        %4981 = vset.pattern.permute.xlu0 0
        %4982 = vperm.xlu0 %4981, %v4792
        %v4983 = vpop.permute.xlu0 %4982
        %4986 = vset.pattern.permute.xlu0 0
        %4987 = vperm.xlu0 %4986, %v4793
        %v4988 = vpop.permute.xlu0 %4987
        %4991 = vset.pattern.permute.xlu0 0
        %4992 = vperm.xlu0 %4991, %v4794
        %v4993 = vpop.permute.xlu0 %4992
        %4996 = vset.pattern.permute.xlu0 0
        %4997 = vperm.xlu0 %4996, %v4795
        %v4998 = vpop.permute.xlu0 %4997
        %5001 = vset.pattern.permute.xlu0 0
        %5002 = vperm.xlu0 %5001, %v4796
        %v5003 = vpop.permute.xlu0 %5002
        %5006 = vset.pattern.permute.xlu0 0
        %5007 = vperm.xlu0 %5006, %v4797
        %v5008 = vpop.permute.xlu0 %5007
        %5011 = vset.pattern.permute.xlu0 0
        %5012 = vperm.xlu0 %5011, %v4798
        %v5013 = vpop.permute.xlu0 %5012
        %5016 = vset.pattern.permute.xlu0 0
        %5017 = vperm.xlu0 %5016, %v4799
        %v5018 = vpop.permute.xlu0 %5017
        %5021 = vset.pattern.permute.xlu0 0
        %5022 = vperm.xlu0 %5021, %v4800
        %v5023 = vpop.permute.xlu0 %5022
        %5026 = vset.pattern.permute.xlu0 0
        %5027 = vperm.xlu0 %5026, %v4801
        %v5028 = vpop.permute.xlu0 %5027
        %5031 = vset.pattern.permute.xlu0 0
        %5032 = vperm.xlu0 %5031, %v4802
        %v5033 = vpop.permute.xlu0 %5032
        %5036 = vset.pattern.permute.xlu0 0
        %5037 = vperm.xlu0 %5036, %v4803
        %v5038 = vpop.permute.xlu0 %5037
        %5041 = vset.pattern.permute.xlu0 0
        %5042 = vperm.xlu0 %5041, %v4804
        %v5043 = vpop.permute.xlu0 %5042
        %5046 = vset.pattern.permute.xlu0 0
        %5047 = vperm.xlu0 %5046, %v4805
        %v5048 = vpop.permute.xlu0 %5047
        %5051 = vset.pattern.permute.xlu0 0
        %5052 = vperm.xlu0 %5051, %v4806
        %v5053 = vpop.permute.xlu0 %5052
        %5056 = vset.pattern.permute.xlu0 0
        %5057 = vperm.xlu0 %5056, %v4807
        %v5058 = vpop.permute.xlu0 %5057
        %5061 = vset.pattern.permute.xlu0 0
        %5062 = vperm.xlu0 %5061, %v4808
        %v5063 = vpop.permute.xlu0 %5062
        %5066 = vset.pattern.permute.xlu0 0
        %5067 = vperm.xlu0 %5066, %v4809
        %v5068 = vpop.permute.xlu0 %5067
        %5071 = vset.pattern.permute.xlu0 0
        %5072 = vperm.xlu0 %5071, %v4810
        %v5073 = vpop.permute.xlu0 %5072
        %5076 = vset.pattern.permute.xlu0 0
        %5077 = vperm.xlu0 %5076, %v4811
        %v5078 = vpop.permute.xlu0 %5077
        %5081 = vset.pattern.permute.xlu0 0
        %5082 = vperm.xlu0 %5081, %v4812
        %v5083 = vpop.permute.xlu0 %5082
        %5086 = vset.pattern.permute.xlu0 0
        %5087 = vperm.xlu0 %5086, %v4813
        %v5088 = vpop.permute.xlu0 %5087
        %5091 = vset.pattern.permute.xlu0 0
        %5092 = vperm.xlu0 %5091, %v4814
        %v5093 = vpop.permute.xlu0 %5092
        %5096 = vset.pattern.permute.xlu0 0
        %5097 = vperm.xlu0 %5096, %v4815
        %v5098 = vpop.permute.xlu0 %5097
        %5101 = vset.pattern.permute.xlu0 0
        %5102 = vperm.xlu0 %5101, %v4816
        %v5103 = vpop.permute.xlu0 %5102
        %5106 = vset.pattern.permute.xlu0 0
        %5107 = vperm.xlu0 %5106, %v4817
        %v5108 = vpop.permute.xlu0 %5107
        %5111 = vset.pattern.permute.xlu0 0
        %5112 = vperm.xlu0 %5111, %v4818
        %v5113 = vpop.permute.xlu0 %5112
        %5116 = vset.pattern.permute.xlu0 0
        %5117 = vperm.xlu0 %5116, %v4819
        %v5118 = vpop.permute.xlu0 %5117
        %5121 = vset.pattern.permute.xlu0 0
        %5122 = vperm.xlu0 %5121, %v4820
        %v5123 = vpop.permute.xlu0 %5122
        %5126 = vset.pattern.permute.xlu0 0
        %5127 = vperm.xlu0 %5126, %v4821
        %v5128 = vpop.permute.xlu0 %5127
        %5131 = vset.pattern.permute.xlu0 0
        %5132 = vperm.xlu0 %5131, %v4822
        %v5133 = vpop.permute.xlu0 %5132
        %5136 = vset.pattern.permute.xlu0 0
        %5137 = vperm.xlu0 %5136, %v4823
        %v5138 = vpop.permute.xlu0 %5137
        %5141 = vset.pattern.permute.xlu0 0
        %5142 = vperm.xlu0 %5141, %v4824
        %v5143 = vpop.permute.xlu0 %5142
        %5146 = vset.pattern.permute.xlu0 0
        %5147 = vperm.xlu0 %5146, %v4825
        %v5148 = vpop.permute.xlu0 %5147
        %5151 = vset.pattern.permute.xlu0 0
        %5152 = vperm.xlu0 %5151, %v4826
        %v5153 = vpop.permute.xlu0 %5152
        %5156 = vset.pattern.permute.xlu0 0
        %5157 = vperm.xlu0 %5156, %v4827
        %v5158 = vpop.permute.xlu0 %5157
        %5161 = vset.pattern.permute.xlu0 0
        %5162 = vperm.xlu0 %5161, %v4828
        %v5163 = vpop.permute.xlu0 %5162
        %5166 = vset.pattern.permute.xlu0 0
        %5167 = vperm.xlu0 %5166, %v4829
        %v5168 = vpop.permute.xlu0 %5167
        %5171 = vset.pattern.permute.xlu0 0
        %5172 = vperm.xlu0 %5171, %v4830
        %v5173 = vpop.permute.xlu0 %5172
        %5176 = vset.pattern.permute.xlu0 0
        %5177 = vperm.xlu0 %5176, %v4831
        %v5178 = vpop.permute.xlu0 %5177
        %5181 = vset.pattern.permute.xlu0 0
        %5182 = vperm.xlu0 %5181, %v4832
        %v5183 = vpop.permute.xlu0 %5182
        %5186 = vset.pattern.permute.xlu0 0
        %5187 = vperm.xlu0 %5186, %v4833
        %v5188 = vpop.permute.xlu0 %5187
        %5191 = vset.pattern.permute.xlu0 0
        %5192 = vperm.xlu0 %5191, %v4834
        %v5193 = vpop.permute.xlu0 %5192
        %5196 = vset.pattern.permute.xlu0 0
        %5197 = vperm.xlu0 %5196, %v4835
        %v5198 = vpop.permute.xlu0 %5197
        %5201 = vset.pattern.permute.xlu0 0
        %5202 = vperm.xlu0 %5201, %v4836
        %v5203 = vpop.permute.xlu0 %5202
        %5206 = vset.pattern.permute.xlu0 0
        %5207 = vperm.xlu0 %5206, %v4837
        %v5208 = vpop.permute.xlu0 %5207
        %5211 = vset.pattern.permute.xlu0 0
        %5212 = vperm.xlu0 %5211, %v4838
        %v5213 = vpop.permute.xlu0 %5212
        %5216 = vset.pattern.permute.xlu0 0
        %5217 = vperm.xlu0 %5216, %v4839
        %v5218 = vpop.permute.xlu0 %5217
        %5221 = vset.pattern.permute.xlu0 0
        %5222 = vperm.xlu0 %5221, %v4840
        %v5223 = vpop.permute.xlu0 %5222
        %5226 = vset.pattern.permute.xlu0 0
        %5227 = vperm.xlu0 %5226, %v4841
        %v5228 = vpop.permute.xlu0 %5227
        %5231 = vset.pattern.permute.xlu0 0
        %5232 = vperm.xlu0 %5231, %v4842
        %v5233 = vpop.permute.xlu0 %5232
        %5236 = vset.pattern.permute.xlu0 0
        %5237 = vperm.xlu0 %5236, %v4843
        %v5238 = vpop.permute.xlu0 %5237
        %5241 = vset.pattern.permute.xlu0 0
        %5242 = vperm.xlu0 %5241, %v4844
        %v5243 = vpop.permute.xlu0 %5242
        %v5245 = vadd.f32 %v4685, %v4848
        %v5246 = vadd.f32 %v4686, %v4853
        %v5247 = vadd.f32 %v4687, %v4858
        %v5248 = vadd.f32 %v4688, %v4863
        %v5249 = vadd.f32 %v4689, %v4868
        %v5250 = vadd.f32 %v4690, %v4873
        %v5251 = vadd.f32 %v4691, %v4878
        %v5252 = vadd.f32 %v4692, %v4883
        %v5253 = vadd.f32 %v4693, %v4888
        %v5254 = vadd.f32 %v4694, %v4893
        %v5255 = vadd.f32 %v4695, %v4898
        %v5256 = vadd.f32 %v4696, %v4903
        %v5257 = vadd.f32 %v4697, %v4908
        %v5258 = vadd.f32 %v4698, %v4913
        %v5259 = vadd.f32 %v4699, %v4918
        %v5260 = vadd.f32 %v4700, %v4923
        %v5261 = vadd.f32 %v4701, %v4928
        %v5262 = vadd.f32 %v4702, %v4933
        %v5263 = vadd.f32 %v4703, %v4938
        %v5264 = vadd.f32 %v4704, %v4943
        %v5265 = vadd.f32 %v4705, %v4948
        %v5266 = vadd.f32 %v4706, %v4953
        %v5267 = vadd.f32 %v4707, %v4958
        %v5268 = vadd.f32 %v4708, %v4963
        %v5269 = vadd.f32 %v4709, %v4968
        %v5270 = vadd.f32 %v4710, %v4973
        %v5271 = vadd.f32 %v4711, %v4978
        %v5272 = vadd.f32 %v4712, %v4983
        %v5273 = vadd.f32 %v4713, %v4988
        %v5274 = vadd.f32 %v4714, %v4993
        %v5275 = vadd.f32 %v4715, %v4998
        %v5276 = vadd.f32 %v4716, %v5003
        %v5277 = vadd.f32 %v4717, %v5008
        %v5278 = vadd.f32 %v4718, %v5013
        %v5279 = vadd.f32 %v4719, %v5018
        %v5280 = vadd.f32 %v4720, %v5023
        %v5281 = vadd.f32 %v4721, %v5028
        %v5282 = vadd.f32 %v4722, %v5033
        %v5283 = vadd.f32 %v4723, %v5038
        %v5284 = vadd.f32 %v4724, %v5043
        %v5285 = vadd.f32 %v4725, %v5048
        %v5286 = vadd.f32 %v4726, %v5053
        %v5287 = vadd.f32 %v4727, %v5058
        %v5288 = vadd.f32 %v4728, %v5063
        %v5289 = vadd.f32 %v4729, %v5068
        %v5290 = vadd.f32 %v4730, %v5073
        %v5291 = vadd.f32 %v4731, %v5078
        %v5292 = vadd.f32 %v4732, %v5083
        %v5293 = vadd.f32 %v4733, %v5088
        %v5294 = vadd.f32 %v4734, %v5093
        %v5295 = vadd.f32 %v4735, %v5098
        %v5296 = vadd.f32 %v4736, %v5103
        %v5297 = vadd.f32 %v4737, %v5108
        %v5298 = vadd.f32 %v4738, %v5113
        %v5299 = vadd.f32 %v4739, %v5118
        %v5300 = vadd.f32 %v4740, %v5123
        %v5301 = vadd.f32 %v4741, %v5128
        %v5302 = vadd.f32 %v4742, %v5133
        %v5303 = vadd.f32 %v4743, %v5138
        %v5304 = vadd.f32 %v4744, %v5143
        %v5305 = vadd.f32 %v4745, %v5148
        %v5306 = vadd.f32 %v4746, %v5153
        %v5307 = vadd.f32 %v4747, %v5158
        %v5308 = vadd.f32 %v4748, %v5163
        %v5309 = vadd.f32 %v4749, %v5168
        %v5310 = vadd.f32 %v4750, %v5173
        %v5311 = vadd.f32 %v4751, %v5178
        %v5312 = vadd.f32 %v4752, %v5183
        %v5313 = vadd.f32 %v4753, %v5188
        %v5314 = vadd.f32 %v4754, %v5193
        %v5315 = vadd.f32 %v4755, %v5198
        %v5316 = vadd.f32 %v4756, %v5203
        %v5317 = vadd.f32 %v4757, %v5208
        %v5318 = vadd.f32 %v4758, %v5213
        %v5319 = vadd.f32 %v4759, %v5218
        %v5320 = vadd.f32 %v4760, %v5223
        %v5321 = vadd.f32 %v4761, %v5228
        %v5322 = vadd.f32 %v4762, %v5233
        %v5323 = vadd.f32 %v4763, %v5238
        %v5324 = vadd.f32 %v4764, %v5243
        %v5325 = vmax.f32 %v5245, 0.0
        %v5326 = vmax.f32 %v5246, 0.0
        %v5327 = vmax.f32 %v5247, 0.0
        %v5328 = vmax.f32 %v5248, 0.0
        %v5329 = vmax.f32 %v5249, 0.0
        %v5330 = vmax.f32 %v5250, 0.0
        %v5331 = vmax.f32 %v5251, 0.0
        %v5332 = vmax.f32 %v5252, 0.0
        %v5333 = vmax.f32 %v5253, 0.0
        %v5334 = vmax.f32 %v5254, 0.0
        %v5335 = vmax.f32 %v5255, 0.0
        %v5336 = vmax.f32 %v5256, 0.0
        %v5337 = vmax.f32 %v5257, 0.0
        %v5338 = vmax.f32 %v5258, 0.0
        %v5339 = vmax.f32 %v5259, 0.0
        %v5340 = vmax.f32 %v5260, 0.0
        %v5341 = vmax.f32 %v5261, 0.0
        %v5342 = vmax.f32 %v5262, 0.0
        %v5343 = vmax.f32 %v5263, 0.0
        %v5344 = vmax.f32 %v5264, 0.0
        %v5345 = vmax.f32 %v5265, 0.0
        %v5346 = vmax.f32 %v5266, 0.0
        %v5347 = vmax.f32 %v5267, 0.0
        %v5348 = vmax.f32 %v5268, 0.0
        %v5349 = vmax.f32 %v5269, 0.0
        %v5350 = vmax.f32 %v5270, 0.0
        %v5351 = vmax.f32 %v5271, 0.0
        %v5352 = vmax.f32 %v5272, 0.0
        %v5353 = vmax.f32 %v5273, 0.0
        %v5354 = vmax.f32 %v5274, 0.0
        %v5355 = vmax.f32 %v5275, 0.0
        %v5356 = vmax.f32 %v5276, 0.0
        %v5357 = vmax.f32 %v5277, 0.0
        %v5358 = vmax.f32 %v5278, 0.0
        %v5359 = vmax.f32 %v5279, 0.0
        %v5360 = vmax.f32 %v5280, 0.0
        %v5361 = vmax.f32 %v5281, 0.0
        %v5362 = vmax.f32 %v5282, 0.0
        %v5363 = vmax.f32 %v5283, 0.0
        %v5364 = vmax.f32 %v5284, 0.0
        %v5365 = vmax.f32 %v5285, 0.0
        %v5366 = vmax.f32 %v5286, 0.0
        %v5367 = vmax.f32 %v5287, 0.0
        %v5368 = vmax.f32 %v5288, 0.0
        %v5369 = vmax.f32 %v5289, 0.0
        %v5370 = vmax.f32 %v5290, 0.0
        %v5371 = vmax.f32 %v5291, 0.0
        %v5372 = vmax.f32 %v5292, 0.0
        %v5373 = vmax.f32 %v5293, 0.0
        %v5374 = vmax.f32 %v5294, 0.0
        %v5375 = vmax.f32 %v5295, 0.0
        %v5376 = vmax.f32 %v5296, 0.0
        %v5377 = vmax.f32 %v5297, 0.0
        %v5378 = vmax.f32 %v5298, 0.0
        %v5379 = vmax.f32 %v5299, 0.0
        %v5380 = vmax.f32 %v5300, 0.0
        %v5381 = vmax.f32 %v5301, 0.0
        %v5382 = vmax.f32 %v5302, 0.0
        %v5383 = vmax.f32 %v5303, 0.0
        %v5384 = vmax.f32 %v5304, 0.0
        %v5385 = vmax.f32 %v5305, 0.0
        %v5386 = vmax.f32 %v5306, 0.0
        %v5387 = vmax.f32 %v5307, 0.0
        %v5388 = vmax.f32 %v5308, 0.0
        %v5389 = vmax.f32 %v5309, 0.0
        %v5390 = vmax.f32 %v5310, 0.0
        %v5391 = vmax.f32 %v5311, 0.0
        %v5392 = vmax.f32 %v5312, 0.0
        %v5393 = vmax.f32 %v5313, 0.0
        %v5394 = vmax.f32 %v5314, 0.0
        %v5395 = vmax.f32 %v5315, 0.0
        %v5396 = vmax.f32 %v5316, 0.0
        %v5397 = vmax.f32 %v5317, 0.0
        %v5398 = vmax.f32 %v5318, 0.0
        %v5399 = vmax.f32 %v5319, 0.0
        %v5400 = vmax.f32 %v5320, 0.0
        %v5401 = vmax.f32 %v5321, 0.0
        %v5402 = vmax.f32 %v5322, 0.0
        %v5403 = vmax.f32 %v5323, 0.0
        %v5404 = vmax.f32 %v5324, 0.0
        %v5405 = vpack.c.bf16 %v5326, %v5325
        %v5406 = vpack.c.bf16 %v5328, %v5327
        %v5407 = vpack.c.bf16 %v5330, %v5329
        %v5408 = vpack.c.bf16 %v5332, %v5331
        %v5409 = vpack.c.bf16 %v5334, %v5333
        %v5410 = vpack.c.bf16 %v5336, %v5335
        %v5411 = vpack.c.bf16 %v5338, %v5337
        %v5412 = vpack.c.bf16 %v5340, %v5339
        %v5413 = vpack.c.bf16 %v5342, %v5341
        %v5414 = vpack.c.bf16 %v5344, %v5343
        %v5415 = vpack.c.bf16 %v5346, %v5345
        %v5416 = vpack.c.bf16 %v5348, %v5347
        %v5417 = vpack.c.bf16 %v5350, %v5349
        %v5418 = vpack.c.bf16 %v5352, %v5351
        %v5419 = vpack.c.bf16 %v5354, %v5353
        %v5420 = vpack.c.bf16 %v5356, %v5355
        %v5421 = vpack.c.bf16 %v5358, %v5357
        %v5422 = vpack.c.bf16 %v5360, %v5359
        %v5423 = vpack.c.bf16 %v5362, %v5361
        %v5424 = vpack.c.bf16 %v5364, %v5363
        %v5425 = vpack.c.bf16 %v5366, %v5365
        %v5426 = vpack.c.bf16 %v5368, %v5367
        %v5427 = vpack.c.bf16 %v5370, %v5369
        %v5428 = vpack.c.bf16 %v5372, %v5371
        %v5429 = vpack.c.bf16 %v5374, %v5373
        %v5430 = vpack.c.bf16 %v5376, %v5375
        %v5431 = vpack.c.bf16 %v5378, %v5377
        %v5432 = vpack.c.bf16 %v5380, %v5379
        %v5433 = vpack.c.bf16 %v5382, %v5381
        %v5434 = vpack.c.bf16 %v5384, %v5383
        %v5435 = vpack.c.bf16 %v5386, %v5385
        %v5436 = vpack.c.bf16 %v5388, %v5387
        %v5437 = vpack.c.bf16 %v5390, %v5389
        %v5438 = vpack.c.bf16 %v5392, %v5391
        %v5439 = vpack.c.bf16 %v5394, %v5393
        %v5440 = vpack.c.bf16 %v5396, %v5395
        %v5441 = vpack.c.bf16 %v5398, %v5397
        %v5442 = vpack.c.bf16 %v5400, %v5399
        %v5443 = vpack.c.bf16 %v5402, %v5401
        %v5444 = vpack.c.bf16 %v5404, %v5403
        %v5445 = vld [vmem:[%s7] sm:$0xff]
        %v5446 = vld [vmem:[%s7 + $0x8] sm:$0xff]
        %v5447 = vld [vmem:[%s7 + $0x10] sm:$0xf]
        %v5448 = vld [vmem:[%s7 + $0x14] sm:$0xff]
        %v5449 = vld [vmem:[%s7 + $0x1c] sm:$0xff]
        %v5450 = vld [vmem:[%s7 + $0x24] sm:$0xf]
        %v5451 = vld [vmem:[%s7 + $0x28] sm:$0xff]
        %v5452 = vld [vmem:[%s7 + $0x30] sm:$0xff]
        %v5453 = vld [vmem:[%s7 + $0x38] sm:$0xf]
        %v5454 = vld [vmem:[%s7 + $0x3c] sm:$0xff]
        %v5455 = vld [vmem:[%s7 + $0x44] sm:$0xff]
        %v5456 = vld [vmem:[%s7 + $0x4c] sm:$0xf]
        %v5457 = vld [vmem:[%s7 + $0x50] sm:$0xff]
        %v5458 = vld [vmem:[%s7 + $0x58] sm:$0xff]
        %v5459 = vld [vmem:[%s7 + $0x60] sm:$0xf]
        %v5460 = vld [vmem:[%s7 + $0x64] sm:$0xff]
        %v5461 = vld [vmem:[%s7 + $0x6c] sm:$0xff]
        %v5462 = vld [vmem:[%s7 + $0x74] sm:$0xf]
        %v5463 = vld [vmem:[%s7 + $0x78] sm:$0xff]
        %v5464 = vld [vmem:[%s7 + $0x80] sm:$0xff]
        %v5465 = vld [vmem:[%s7 + $0x88] sm:$0xf]
        %v5466 = vld [vmem:[%s7 + $0x8c] sm:$0xff]
        %v5467 = vld [vmem:[%s7 + $0x94] sm:$0xff]
        %v5468 = vld [vmem:[%s7 + $0x9c] sm:$0xf]
        %v5469 = vld [vmem:[%s7 + $0xa0] sm:$0xff]
        %v5470 = vld [vmem:[%s7 + $0xa8] sm:$0xff]
        %v5471 = vld [vmem:[%s7 + $0xb0] sm:$0xf]
        %v5472 = vld [vmem:[%s7 + $0xb4] sm:$0xff]
        %v5473 = vld [vmem:[%s7 + $0xbc] sm:$0xff]
        %v5474 = vld [vmem:[%s7 + $0xc4] sm:$0xf]
        %v5475 = vld [vmem:[%s7 + $0xc8] sm:$0xff]
        %v5476 = vld [vmem:[%s7 + $0xd0] sm:$0xff]
        %v5477 = vld [vmem:[%s7 + $0xd8] sm:$0xf]
        %v5478 = vld [vmem:[%s7 + $0xdc] sm:$0xff]
        %v5479 = vld [vmem:[%s7 + $0xe4] sm:$0xff]
        %v5480 = vld [vmem:[%s7 + $0xec] sm:$0xf]
        %v5481 = vld [vmem:[%s7 + $0xf0] sm:$0xff]
        %v5482 = vld [vmem:[%s7 + $0xf8] sm:$0xff]
        %v5483 = vld [vmem:[%s7 + $0x100] sm:$0xf]
        %v5484 = vld [vmem:[%s7 + $0x104] sm:$0xff]
        %v5485 = vld [vmem:[%s7 + $0x10c] sm:$0xff]
        %v5486 = vld [vmem:[%s7 + $0x114] sm:$0xf]
        %v5487 = vld [vmem:[%s7 + $0x118] sm:$0xff]
        %v5488 = vld [vmem:[%s7 + $0x120] sm:$0xff]
        %v5489 = vld [vmem:[%s7 + $0x128] sm:$0xf]
        %v5490 = vld [vmem:[%s7 + $0x12c] sm:$0xff]
        %v5491 = vld [vmem:[%s7 + $0x134] sm:$0xff]
        %v5492 = vld [vmem:[%s7 + $0x13c] sm:$0xf]
        %v5493 = vld [vmem:[%s7 + $0x140] sm:$0xff]
        %v5494 = vld [vmem:[%s7 + $0x148] sm:$0xff]
        %v5495 = vld [vmem:[%s7 + $0x150] sm:$0xf]
        %v5496 = vld [vmem:[%s7 + $0x154] sm:$0xff]
        %v5497 = vld [vmem:[%s7 + $0x15c] sm:$0xff]
        %v5498 = vld [vmem:[%s7 + $0x164] sm:$0xf]
        %v5499 = vld [vmem:[%s7 + $0x168] sm:$0xff]
        %v5500 = vld [vmem:[%s7 + $0x170] sm:$0xff]
        %v5501 = vld [vmem:[%s7 + $0x178] sm:$0xf]
        %v5502 = vld [vmem:[%s7 + $0x17c] sm:$0xff]
        %v5503 = vld [vmem:[%s7 + $0x184] sm:$0xff]
        %v5504 = vld [vmem:[%s7 + $0x18c] sm:$0xf]
        %v5505 = vld [vmem:[%s7 + $0x190] sm:$0xff]
        %v5506 = vld [vmem:[%s7 + $0x198] sm:$0xff]
        %v5507 = vld [vmem:[%s7 + $0x1a0] sm:$0xf]
        %v5508 = vld [vmem:[%s7 + $0x1a4] sm:$0xff]
        %v5509 = vld [vmem:[%s7 + $0x1ac] sm:$0xff]
        %v5510 = vld [vmem:[%s7 + $0x1b4] sm:$0xf]
        %v5511 = vld [vmem:[%s7 + $0x1b8] sm:$0xff]
        %v5512 = vld [vmem:[%s7 + $0x1c0] sm:$0xff]
        %v5513 = vld [vmem:[%s7 + $0x1c8] sm:$0xf]
        %v5514 = vld [vmem:[%s7 + $0x1cc] sm:$0xff]
        %v5515 = vld [vmem:[%s7 + $0x1d4] sm:$0xff]
        %v5516 = vld [vmem:[%s7 + $0x1dc] sm:$0xf]
        %v5517 = vld [vmem:[%s7 + $0x1e0] sm:$0xff]
        %v5518 = vld [vmem:[%s7 + $0x1e8] sm:$0xff]
        %v5519 = vld [vmem:[%s7 + $0x1f0] sm:$0xf]
        %v5520 = vld [vmem:[%s7 + $0x1f4] sm:$0xff]
        %v5521 = vld [vmem:[%s7 + $0x1fc] sm:$0xff]
        %v5522 = vld [vmem:[%s7 + $0x204] sm:$0xf]
        %v5523 = vld [vmem:[%s7 + $0x208] sm:$0xff]
        %v5524 = vld [vmem:[%s7 + $0x210] sm:$0xff]
        %v5525 = vld [vmem:[%s7 + $0x218] sm:$0xf]
        %v5526 = vld [vmem:[%s7 + $0x21c] sm:$0xff]
        %v5527 = vld [vmem:[%s7 + $0x224] sm:$0xff]
        %v5528 = vld [vmem:[%s7 + $0x22c] sm:$0xf]
        %v5529 = vld [vmem:[%s7 + $0x230] sm:$0xff]
        %v5530 = vld [vmem:[%s7 + $0x238] sm:$0xff]
        %v5531 = vld [vmem:[%s7 + $0x240] sm:$0xf]
        %v5532 = vld [vmem:[%s7 + $0x244] sm:$0xff]
        %v5533 = vld [vmem:[%s7 + $0x24c] sm:$0xff]
        %v5534 = vld [vmem:[%s7 + $0x254] sm:$0xf]
        %v5535 = vld [vmem:[%s7 + $0x258] sm:$0xff]
        %v5536 = vld [vmem:[%s7 + $0x260] sm:$0xff]
        %v5537 = vld [vmem:[%s7 + $0x268] sm:$0xf]
        %v5538 = vld [vmem:[%s7 + $0x26c] sm:$0xff]
        %v5539 = vld [vmem:[%s7 + $0x274] sm:$0xff]
        %v5540 = vld [vmem:[%s7 + $0x27c] sm:$0xf]
        %v5541 = vld [vmem:[%s8] sm:$0xff]
        %v5542 = vld [vmem:[%s8 + $0x8] sm:$0xff]
        %v5543 = vld [vmem:[%s8 + $0x10] sm:$0xff]
        %v5544 = vld [vmem:[%s8 + $0x18] sm:$0xff]
        %v5545 = vld [vmem:[%s8 + $0x20] sm:$0xff]
        %v5546 = vld [vmem:[%s8 + $0x28] sm:$0xff]
        %v5547 = vld [vmem:[%s8 + $0x30] sm:$0xff]
        %v5548 = vld [vmem:[%s8 + $0x38] sm:$0xff]
        %v5549 = vld [vmem:[%s8 + $0x40] sm:$0xff]
        %v5550 = vld [vmem:[%s8 + $0x48] sm:$0xff]
        %v5551 = vld [vmem:[%s8 + $0x50] sm:$0xff]
        %v5552 = vld [vmem:[%s8 + $0x58] sm:$0xff]
        %v5553 = vld [vmem:[%s8 + $0x60] sm:$0xff]
        %v5554 = vld [vmem:[%s8 + $0x68] sm:$0xff]
        %v5555 = vld [vmem:[%s8 + $0x70] sm:$0xff]
        %v5556 = vld [vmem:[%s8 + $0x78] sm:$0xff]
        %v5557 = vld [vmem:[%s8 + $0x80] sm:$0xff]
        %v5558 = vld [vmem:[%s8 + $0x88] sm:$0xff]
        %v5559 = vld [vmem:[%s8 + $0x90] sm:$0xff]
        %v5560 = vld [vmem:[%s8 + $0x98] sm:$0xff]
        %v5561 = vld [vmem:[%s8 + $0xa0] sm:$0xff]
        %v5562 = vld [vmem:[%s8 + $0xa8] sm:$0xff]
        %v5563 = vld [vmem:[%s8 + $0xb0] sm:$0xff]
        %v5564 = vld [vmem:[%s8 + $0xb8] sm:$0xff]
        %v5565 = vld [vmem:[%s8 + $0xc0] sm:$0xff]
        %v5566 = vld [vmem:[%s8 + $0xc8] sm:$0xff]
        %v5567 = vld [vmem:[%s8 + $0xd0] sm:$0xff]
        %v5568 = vld [vmem:[%s8 + $0xd8] sm:$0xff]
        %v5569 = vld [vmem:[%s8 + $0xe0] sm:$0xff]
        %v5570 = vld [vmem:[%s8 + $0xe8] sm:$0xff]
        %v5571 = vld [vmem:[%s8 + $0xf0] sm:$0xff]
        %v5572 = vld [vmem:[%s8 + $0xf8] sm:$0xff]
        %5574 = vset.pattern.permute.xlu0 0
        %5575 = vperm.xlu0 %5574, %v5541
        %v5576 = vpop.permute.xlu0 %5575
        %5579 = vset.pattern.permute.xlu0 0
        %5580 = vperm.xlu0 %5579, %v5542
        %v5581 = vpop.permute.xlu0 %5580
        %5584 = vset.pattern.permute.xlu0 0
        %5585 = vperm.xlu0 %5584, %v5543
        %v5586 = vpop.permute.xlu0 %5585
        %5589 = vset.pattern.permute.xlu0 0
        %5590 = vperm.xlu0 %5589, %v5544
        %v5591 = vpop.permute.xlu0 %5590
        %5594 = vset.pattern.permute.xlu0 0
        %5595 = vperm.xlu0 %5594, %v5545
        %v5596 = vpop.permute.xlu0 %5595
        %5599 = vset.pattern.permute.xlu0 0
        %5600 = vperm.xlu0 %5599, %v5546
        %v5601 = vpop.permute.xlu0 %5600
        %5604 = vset.pattern.permute.xlu0 0
        %5605 = vperm.xlu0 %5604, %v5547
        %v5606 = vpop.permute.xlu0 %5605
        %5609 = vset.pattern.permute.xlu0 0
        %5610 = vperm.xlu0 %5609, %v5548
        %v5611 = vpop.permute.xlu0 %5610
        %5614 = vset.pattern.permute.xlu0 0
        %5615 = vperm.xlu0 %5614, %v5549
        %v5616 = vpop.permute.xlu0 %5615
        %5619 = vset.pattern.permute.xlu0 0
        %5620 = vperm.xlu0 %5619, %v5550
        %v5621 = vpop.permute.xlu0 %5620
        %5624 = vset.pattern.permute.xlu0 0
        %5625 = vperm.xlu0 %5624, %v5551
        %v5626 = vpop.permute.xlu0 %5625
        %5629 = vset.pattern.permute.xlu0 0
        %5630 = vperm.xlu0 %5629, %v5552
        %v5631 = vpop.permute.xlu0 %5630
        %5634 = vset.pattern.permute.xlu0 0
        %5635 = vperm.xlu0 %5634, %v5553
        %v5636 = vpop.permute.xlu0 %5635
        %5639 = vset.pattern.permute.xlu0 0
        %5640 = vperm.xlu0 %5639, %v5554
        %v5641 = vpop.permute.xlu0 %5640
        %5644 = vset.pattern.permute.xlu0 0
        %5645 = vperm.xlu0 %5644, %v5555
        %v5646 = vpop.permute.xlu0 %5645
        %5649 = vset.pattern.permute.xlu0 0
        %5650 = vperm.xlu0 %5649, %v5556
        %v5651 = vpop.permute.xlu0 %5650
        %5654 = vset.pattern.permute.xlu0 0
        %5655 = vperm.xlu0 %5654, %v5557
        %v5656 = vpop.permute.xlu0 %5655
        %5659 = vset.pattern.permute.xlu0 0
        %5660 = vperm.xlu0 %5659, %v5558
        %v5661 = vpop.permute.xlu0 %5660
        %5664 = vset.pattern.permute.xlu0 0
        %5665 = vperm.xlu0 %5664, %v5559
        %v5666 = vpop.permute.xlu0 %5665
        %5669 = vset.pattern.permute.xlu0 0
        %5670 = vperm.xlu0 %5669, %v5560
        %v5671 = vpop.permute.xlu0 %5670
        %5674 = vset.pattern.permute.xlu0 0
        %5675 = vperm.xlu0 %5674, %v5561
        %v5676 = vpop.permute.xlu0 %5675
        %5679 = vset.pattern.permute.xlu0 0
        %5680 = vperm.xlu0 %5679, %v5562
        %v5681 = vpop.permute.xlu0 %5680
        %5684 = vset.pattern.permute.xlu0 0
        %5685 = vperm.xlu0 %5684, %v5563
        %v5686 = vpop.permute.xlu0 %5685
        %5689 = vset.pattern.permute.xlu0 0
        %5690 = vperm.xlu0 %5689, %v5564
        %v5691 = vpop.permute.xlu0 %5690
        %5694 = vset.pattern.permute.xlu0 0
        %5695 = vperm.xlu0 %5694, %v5565
        %v5696 = vpop.permute.xlu0 %5695
        %5699 = vset.pattern.permute.xlu0 0
        %5700 = vperm.xlu0 %5699, %v5566
        %v5701 = vpop.permute.xlu0 %5700
        %5704 = vset.pattern.permute.xlu0 0
        %5705 = vperm.xlu0 %5704, %v5567
        %v5706 = vpop.permute.xlu0 %5705
        %5709 = vset.pattern.permute.xlu0 0
        %5710 = vperm.xlu0 %5709, %v5568
        %v5711 = vpop.permute.xlu0 %5710
        %5714 = vset.pattern.permute.xlu0 0
        %5715 = vperm.xlu0 %5714, %v5569
        %v5716 = vpop.permute.xlu0 %5715
        %5719 = vset.pattern.permute.xlu0 0
        %5720 = vperm.xlu0 %5719, %v5570
        %v5721 = vpop.permute.xlu0 %5720
        %5724 = vset.pattern.permute.xlu0 0
        %5725 = vperm.xlu0 %5724, %v5571
        %v5726 = vpop.permute.xlu0 %5725
        %5729 = vset.pattern.permute.xlu0 0
        %5730 = vperm.xlu0 %5729, %v5572
        %v5731 = vpop.permute.xlu0 %5730
        %v5829 = vunpack.c.l.b16 %v5445
        %v5830 = vunpack.c.h.b16 %v5445
        %v5831 = vunpack.c.l.b16 %v5446
        %v5832 = vunpack.c.h.b16 %v5446
        %v5833 = vunpack.c.l.b16 %v5447
        %v5834 = vunpack.c.l.b16 %v5448
        %v5835 = vunpack.c.h.b16 %v5448
        %v5836 = vunpack.c.l.b16 %v5449
        %v5837 = vunpack.c.h.b16 %v5449
        %v5838 = vunpack.c.l.b16 %v5450
        %v5839 = vunpack.c.l.b16 %v5451
        %v5840 = vunpack.c.h.b16 %v5451
        %v5841 = vunpack.c.l.b16 %v5452
        %v5842 = vunpack.c.h.b16 %v5452
        %v5843 = vunpack.c.l.b16 %v5453
        %v5844 = vunpack.c.l.b16 %v5454
        %v5845 = vunpack.c.h.b16 %v5454
        %v5846 = vunpack.c.l.b16 %v5455
        %v5847 = vunpack.c.h.b16 %v5455
        %v5848 = vunpack.c.l.b16 %v5456
        %v5849 = vunpack.c.l.b16 %v5457
        %v5850 = vunpack.c.h.b16 %v5457
        %v5851 = vunpack.c.l.b16 %v5458
        %v5852 = vunpack.c.h.b16 %v5458
        %v5853 = vunpack.c.l.b16 %v5459
        %v5854 = vunpack.c.l.b16 %v5460
        %v5855 = vunpack.c.h.b16 %v5460
        %v5856 = vunpack.c.l.b16 %v5461
        %v5857 = vunpack.c.h.b16 %v5461
        %v5858 = vunpack.c.l.b16 %v5462
        %v5859 = vunpack.c.l.b16 %v5463
        %v5860 = vunpack.c.h.b16 %v5463
        %v5861 = vunpack.c.l.b16 %v5464
        %v5862 = vunpack.c.h.b16 %v5464
        %v5863 = vunpack.c.l.b16 %v5465
        %v5864 = vunpack.c.l.b16 %v5466
        %v5865 = vunpack.c.h.b16 %v5466
        %v5866 = vunpack.c.l.b16 %v5467
        %v5867 = vunpack.c.h.b16 %v5467
        %v5868 = vunpack.c.l.b16 %v5468
        %v5869 = vunpack.c.l.b16 %v5469
        %v5870 = vunpack.c.h.b16 %v5469
        %v5871 = vunpack.c.l.b16 %v5470
        %v5872 = vunpack.c.h.b16 %v5470
        %v5873 = vunpack.c.l.b16 %v5471
        %v5874 = vunpack.c.l.b16 %v5472
        %v5875 = vunpack.c.h.b16 %v5472
        %v5876 = vunpack.c.l.b16 %v5473
        %v5877 = vunpack.c.h.b16 %v5473
        %v5878 = vunpack.c.l.b16 %v5474
        %v5879 = vunpack.c.l.b16 %v5475
        %v5880 = vunpack.c.h.b16 %v5475
        %v5881 = vunpack.c.l.b16 %v5476
        %v5882 = vunpack.c.h.b16 %v5476
        %v5883 = vunpack.c.l.b16 %v5477
        %v5884 = vunpack.c.l.b16 %v5478
        %v5885 = vunpack.c.h.b16 %v5478
        %v5886 = vunpack.c.l.b16 %v5479
        %v5887 = vunpack.c.h.b16 %v5479
        %v5888 = vunpack.c.l.b16 %v5480
        %v5889 = vunpack.c.l.b16 %v5481
        %v5890 = vunpack.c.h.b16 %v5481
        %v5891 = vunpack.c.l.b16 %v5482
        %v5892 = vunpack.c.h.b16 %v5482
        %v5893 = vunpack.c.l.b16 %v5483
        %v5894 = vunpack.c.l.b16 %v5484
        %v5895 = vunpack.c.h.b16 %v5484
        %v5896 = vunpack.c.l.b16 %v5485
        %v5897 = vunpack.c.h.b16 %v5485
        %v5898 = vunpack.c.l.b16 %v5486
        %v5899 = vunpack.c.l.b16 %v5487
        %v5900 = vunpack.c.h.b16 %v5487
        %v5901 = vunpack.c.l.b16 %v5488
        %v5902 = vunpack.c.h.b16 %v5488
        %v5903 = vunpack.c.l.b16 %v5489
        %v5904 = vunpack.c.l.b16 %v5490
        %v5905 = vunpack.c.h.b16 %v5490
        %v5906 = vunpack.c.l.b16 %v5491
        %v5907 = vunpack.c.h.b16 %v5491
        %v5908 = vunpack.c.l.b16 %v5492
        %v5909 = vunpack.c.l.b16 %v5493
        %v5910 = vunpack.c.h.b16 %v5493
        %v5911 = vunpack.c.l.b16 %v5494
        %v5912 = vunpack.c.h.b16 %v5494
        %v5913 = vunpack.c.l.b16 %v5495
        %v5914 = vunpack.c.l.b16 %v5496
        %v5915 = vunpack.c.h.b16 %v5496
        %v5916 = vunpack.c.l.b16 %v5497
        %v5917 = vunpack.c.h.b16 %v5497
        %v5918 = vunpack.c.l.b16 %v5498
        %v5919 = vunpack.c.l.b16 %v5499
        %v5920 = vunpack.c.h.b16 %v5499
        %v5921 = vunpack.c.l.b16 %v5500
        %v5922 = vunpack.c.h.b16 %v5500
        %v5923 = vunpack.c.l.b16 %v5501
        %v5924 = vunpack.c.l.b16 %v5502
        %v5925 = vunpack.c.h.b16 %v5502
        %v5926 = vunpack.c.l.b16 %v5503
        %v5927 = vunpack.c.h.b16 %v5503
        %v5928 = vunpack.c.l.b16 %v5504
        %v5929 = vunpack.c.l.b16 %v5505
        %v5930 = vunpack.c.h.b16 %v5505
        %v5931 = vunpack.c.l.b16 %v5506
        %v5932 = vunpack.c.h.b16 %v5506
        %v5933 = vunpack.c.l.b16 %v5507
        %v5934 = vunpack.c.l.b16 %v5508
        %v5935 = vunpack.c.h.b16 %v5508
        %v5936 = vunpack.c.l.b16 %v5509
        %v5937 = vunpack.c.h.b16 %v5509
        %v5938 = vunpack.c.l.b16 %v5510
        %v5939 = vunpack.c.l.b16 %v5511
        %v5940 = vunpack.c.h.b16 %v5511
        %v5941 = vunpack.c.l.b16 %v5512
        %v5942 = vunpack.c.h.b16 %v5512
        %v5943 = vunpack.c.l.b16 %v5513
        %v5944 = vunpack.c.l.b16 %v5514
        %v5945 = vunpack.c.h.b16 %v5514
        %v5946 = vunpack.c.l.b16 %v5515
        %v5947 = vunpack.c.h.b16 %v5515
        %v5948 = vunpack.c.l.b16 %v5516
        %v5949 = vunpack.c.l.b16 %v5517
        %v5950 = vunpack.c.h.b16 %v5517
        %v5951 = vunpack.c.l.b16 %v5518
        %v5952 = vunpack.c.h.b16 %v5518
        %v5953 = vunpack.c.l.b16 %v5519
        %v5954 = vunpack.c.l.b16 %v5520
        %v5955 = vunpack.c.h.b16 %v5520
        %v5956 = vunpack.c.l.b16 %v5521
        %v5957 = vunpack.c.h.b16 %v5521
        %v5958 = vunpack.c.l.b16 %v5522
        %v5959 = vunpack.c.l.b16 %v5523
        %v5960 = vunpack.c.h.b16 %v5523
        %v5961 = vunpack.c.l.b16 %v5524
        %v5962 = vunpack.c.h.b16 %v5524
        %v5963 = vunpack.c.l.b16 %v5525
        %v5964 = vunpack.c.l.b16 %v5526
        %v5965 = vunpack.c.h.b16 %v5526
        %v5966 = vunpack.c.l.b16 %v5527
        %v5967 = vunpack.c.h.b16 %v5527
        %v5968 = vunpack.c.l.b16 %v5528
        %v5969 = vunpack.c.l.b16 %v5529
        %v5970 = vunpack.c.h.b16 %v5529
        %v5971 = vunpack.c.l.b16 %v5530
        %v5972 = vunpack.c.h.b16 %v5530
        %v5973 = vunpack.c.l.b16 %v5531
        %v5974 = vunpack.c.l.b16 %v5532
        %v5975 = vunpack.c.h.b16 %v5532
        %v5976 = vunpack.c.l.b16 %v5533
        %v5977 = vunpack.c.h.b16 %v5533
        %v5978 = vunpack.c.l.b16 %v5534
        %v5979 = vunpack.c.l.b16 %v5535
        %v5980 = vunpack.c.h.b16 %v5535
        %v5981 = vunpack.c.l.b16 %v5536
        %v5982 = vunpack.c.h.b16 %v5536
        %v5983 = vunpack.c.l.b16 %v5537
        %v5984 = vunpack.c.l.b16 %v5538
        %v5985 = vunpack.c.h.b16 %v5538
        %v5986 = vunpack.c.l.b16 %v5539
        %v5987 = vunpack.c.h.b16 %v5539
        %v5988 = vunpack.c.l.b16 %v5540
        %v5989 = vpack.c.b16 %v5834, %v5829
        %v5990 = vpack.c.b16 %v5835, %v5830
        %v5991 = vpack.c.b16 %v5836, %v5831
        %v5992 = vpack.c.b16 %v5837, %v5832
        %v5993 = vpack.c.b16 %v5838, %v5833
        %v5994 = vpack.c.b16 %v5844, %v5839
        %v5995 = vpack.c.b16 %v5845, %v5840
        %v5996 = vpack.c.b16 %v5846, %v5841
        %v5997 = vpack.c.b16 %v5847, %v5842
        %v5998 = vpack.c.b16 %v5848, %v5843
        %v5999 = vpack.c.b16 %v5854, %v5849
        %v6000 = vpack.c.b16 %v5855, %v5850
        %v6001 = vpack.c.b16 %v5856, %v5851
        %v6002 = vpack.c.b16 %v5857, %v5852
        %v6003 = vpack.c.b16 %v5858, %v5853
        %v6004 = vpack.c.b16 %v5864, %v5859
        %v6005 = vpack.c.b16 %v5865, %v5860
        %v6006 = vpack.c.b16 %v5866, %v5861
        %v6007 = vpack.c.b16 %v5867, %v5862
        %v6008 = vpack.c.b16 %v5868, %v5863
        %v6009 = vpack.c.b16 %v5874, %v5869
        %v6010 = vpack.c.b16 %v5875, %v5870
        %v6011 = vpack.c.b16 %v5876, %v5871
        %v6012 = vpack.c.b16 %v5877, %v5872
        %v6013 = vpack.c.b16 %v5878, %v5873
        %v6014 = vpack.c.b16 %v5884, %v5879
        %v6015 = vpack.c.b16 %v5885, %v5880
        %v6016 = vpack.c.b16 %v5886, %v5881
        %v6017 = vpack.c.b16 %v5887, %v5882
        %v6018 = vpack.c.b16 %v5888, %v5883
        %v6019 = vpack.c.b16 %v5894, %v5889
        %v6020 = vpack.c.b16 %v5895, %v5890
        %v6021 = vpack.c.b16 %v5896, %v5891
        %v6022 = vpack.c.b16 %v5897, %v5892
        %v6023 = vpack.c.b16 %v5898, %v5893
        %v6024 = vpack.c.b16 %v5904, %v5899
        %v6025 = vpack.c.b16 %v5905, %v5900
        %v6026 = vpack.c.b16 %v5906, %v5901
        %v6027 = vpack.c.b16 %v5907, %v5902
        %v6028 = vpack.c.b16 %v5908, %v5903
        %v6029 = vpack.c.b16 %v5914, %v5909
        %v6030 = vpack.c.b16 %v5915, %v5910
        %v6031 = vpack.c.b16 %v5916, %v5911
        %v6032 = vpack.c.b16 %v5917, %v5912
        %v6033 = vpack.c.b16 %v5918, %v5913
        %v6034 = vpack.c.b16 %v5924, %v5919
        %v6035 = vpack.c.b16 %v5925, %v5920
        %v6036 = vpack.c.b16 %v5926, %v5921
        %v6037 = vpack.c.b16 %v5927, %v5922
        %v6038 = vpack.c.b16 %v5928, %v5923
        %v6039 = vpack.c.b16 %v5934, %v5929
        %v6040 = vpack.c.b16 %v5935, %v5930
        %v6041 = vpack.c.b16 %v5936, %v5931
        %v6042 = vpack.c.b16 %v5937, %v5932
        %v6043 = vpack.c.b16 %v5938, %v5933
        %v6044 = vpack.c.b16 %v5944, %v5939
        %v6045 = vpack.c.b16 %v5945, %v5940
        %v6046 = vpack.c.b16 %v5946, %v5941
        %v6047 = vpack.c.b16 %v5947, %v5942
        %v6048 = vpack.c.b16 %v5948, %v5943
        %v6049 = vpack.c.b16 %v5954, %v5949
        %v6050 = vpack.c.b16 %v5955, %v5950
        %v6051 = vpack.c.b16 %v5956, %v5951
        %v6052 = vpack.c.b16 %v5957, %v5952
        %v6053 = vpack.c.b16 %v5958, %v5953
        %v6054 = vpack.c.b16 %v5964, %v5959
        %v6055 = vpack.c.b16 %v5965, %v5960
        %v6056 = vpack.c.b16 %v5966, %v5961
        %v6057 = vpack.c.b16 %v5967, %v5962
        %v6058 = vpack.c.b16 %v5968, %v5963
        %v6059 = vpack.c.b16 %v5974, %v5969
        %v6060 = vpack.c.b16 %v5975, %v5970
        %v6061 = vpack.c.b16 %v5976, %v5971
        %v6062 = vpack.c.b16 %v5977, %v5972
        %v6063 = vpack.c.b16 %v5978, %v5973
        %v6064 = vpack.c.b16 %v5984, %v5979
        %v6065 = vpack.c.b16 %v5985, %v5980
        %v6066 = vpack.c.b16 %v5986, %v5981
        %v6067 = vpack.c.b16 %v5987, %v5982
        %v6068 = vpack.c.b16 %v5988, %v5983
        %6149 = vmatprep.subr.bf16.mxu0 0
        %6150 = vmatpush1.bf16.msra.mxu0 %v5412
        %6151 = vmatprep.subr.bf16.mxu0 0
        %6152 = vmatpush1.bf16.msra.mxu0 %v5411
        %6153 = vmatprep.subr.bf16.mxu0 0
        %6154 = vmatpush1.bf16.msra.mxu0 %v5410
        %6155 = vmatprep.subr.bf16.mxu0 0
        %6156 = vmatpush1.bf16.msra.mxu0 %v5409
        %6157 = vmatprep.subr.bf16.mxu0 0
        %6158 = vmatpush1.bf16.msra.mxu0 %v5408
        %6159 = vmatprep.subr.bf16.mxu0 0
        %6160 = vmatpush1.bf16.msra.mxu0 %v5407
        %6161 = vmatprep.subr.bf16.mxu0 0
        %6162 = vmatpush1.bf16.msra.mxu0 %v5406
        %6163 = vmatprep.subr.bf16.mxu0 0
        %6164 = vmatpush1.bf16.msra.mxu0 %v5405
        %6165 = vmatprep.subr.bf16.mxu0 0
        %6166 = vmatpush2.bf16.msra.mxu0 %v5420
        %6167 = vmatprep.subr.bf16.mxu0 0
        %6168 = vmatpush2.bf16.msra.mxu0 %v5419
        %6169 = vmatprep.subr.bf16.mxu0 0
        %6170 = vmatpush2.bf16.msra.mxu0 %v5418
        %6171 = vmatprep.subr.bf16.mxu0 0
        %6172 = vmatpush2.bf16.msra.mxu0 %v5417
        %6173 = vmatprep.subr.bf16.mxu0 0
        %6174 = vmatpush2.bf16.msra.mxu0 %v5416
        %6175 = vmatprep.subr.bf16.mxu0 0
        %6176 = vmatpush2.bf16.msra.mxu0 %v5415
        %6177 = vmatprep.subr.bf16.mxu0 0
        %6178 = vmatpush2.bf16.msra.mxu0 %v5414
        %6179 = vmatprep.subr.bf16.mxu0 0
        %6180 = vmatpush2.bf16.msra.mxu0 %v5413
        %6181 = vmatprep.mubr.bf16.mxu0 %v5990
        %6182 = vmatmul.mubr.bf16.gmra.mxu0 %v5989
        %v6183 = vpop.f32.mrf.mxu0
        %v6184 = vadd.f32 %v5576, %v6183
        %v6185 = vpop.f32.mrf.mxu0
        %v6186 = vpop.f32.mrf.mxu0
        %v6187 = vadd.f32 %v5581, %v6186
        %v6188 = vpop.f32.mrf.mxu0
        %6189 = vmatprep.mubr.bf16.mxu0 %v5995
        %6190 = vmatmul.mubr.bf16.gmra.mxu0 %v5994
        %v6191 = vpop.f32.mrf.mxu0
        %v6192 = vadd.f32 %v5586, %v6191
        %v6193 = vpop.f32.mrf.mxu0
        %v6194 = vpop.f32.mrf.mxu0
        %v6195 = vadd.f32 %v5591, %v6194
        %v6196 = vpop.f32.mrf.mxu0
        %6197 = vmatprep.mubr.bf16.mxu0 %v6000
        %6198 = vmatmul.mubr.bf16.gmra.mxu0 %v5999
        %v6199 = vpop.f32.mrf.mxu0
        %v6200 = vadd.f32 %v5596, %v6199
        %v6201 = vpop.f32.mrf.mxu0
        %v6202 = vpop.f32.mrf.mxu0
        %v6203 = vadd.f32 %v5601, %v6202
        %v6204 = vpop.f32.mrf.mxu0
        %6205 = vmatprep.mubr.bf16.mxu0 %v6005
        %6206 = vmatmul.mubr.bf16.gmra.mxu0 %v6004
        %v6207 = vpop.f32.mrf.mxu0
        %v6208 = vadd.f32 %v5606, %v6207
        %v6209 = vpop.f32.mrf.mxu0
        %v6210 = vpop.f32.mrf.mxu0
        %v6211 = vadd.f32 %v5611, %v6210
        %v6212 = vpop.f32.mrf.mxu0
        %6213 = vmatprep.mubr.bf16.mxu0 %v6010
        %6214 = vmatmul.mubr.bf16.gmra.mxu0 %v6009
        %v6215 = vpop.f32.mrf.mxu0
        %v6216 = vadd.f32 %v5616, %v6215
        %v6217 = vpop.f32.mrf.mxu0
        %v6218 = vpop.f32.mrf.mxu0
        %v6219 = vadd.f32 %v5621, %v6218
        %v6220 = vpop.f32.mrf.mxu0
        %6221 = vmatprep.mubr.bf16.mxu0 %v6015
        %6222 = vmatmul.mubr.bf16.gmra.mxu0 %v6014
        %v6223 = vpop.f32.mrf.mxu0
        %v6224 = vadd.f32 %v5626, %v6223
        %v6225 = vpop.f32.mrf.mxu0
        %v6226 = vpop.f32.mrf.mxu0
        %v6227 = vadd.f32 %v5631, %v6226
        %v6228 = vpop.f32.mrf.mxu0
        %6229 = vmatprep.mubr.bf16.mxu0 %v6020
        %6230 = vmatmul.mubr.bf16.gmra.mxu0 %v6019
        %v6231 = vpop.f32.mrf.mxu0
        %v6232 = vadd.f32 %v5636, %v6231
        %v6233 = vpop.f32.mrf.mxu0
        %v6234 = vpop.f32.mrf.mxu0
        %v6235 = vadd.f32 %v5641, %v6234
        %v6236 = vpop.f32.mrf.mxu0
        %6237 = vmatprep.mubr.bf16.mxu0 %v6025
        %6238 = vmatmul.mubr.bf16.gmra.mxu0 %v6024
        %v6239 = vpop.f32.mrf.mxu0
        %v6240 = vadd.f32 %v5646, %v6239
        %v6241 = vpop.f32.mrf.mxu0
        %v6242 = vpop.f32.mrf.mxu0
        %v6243 = vadd.f32 %v5651, %v6242
        %v6244 = vpop.f32.mrf.mxu0
        %6245 = vmatprep.mubr.bf16.mxu0 %v6030
        %6246 = vmatmul.mubr.bf16.gmra.mxu0 %v6029
        %v6247 = vpop.f32.mrf.mxu0
        %v6248 = vadd.f32 %v5656, %v6247
        %v6249 = vpop.f32.mrf.mxu0
        %v6250 = vpop.f32.mrf.mxu0
        %v6251 = vadd.f32 %v5661, %v6250
        %v6252 = vpop.f32.mrf.mxu0
        %6253 = vmatprep.mubr.bf16.mxu0 %v6035
        %6254 = vmatmul.mubr.bf16.gmra.mxu0 %v6034
        %v6255 = vpop.f32.mrf.mxu0
        %v6256 = vadd.f32 %v5666, %v6255
        %v6257 = vpop.f32.mrf.mxu0
        %v6258 = vpop.f32.mrf.mxu0
        %v6259 = vadd.f32 %v5671, %v6258
        %v6260 = vpop.f32.mrf.mxu0
        %6261 = vmatprep.mubr.bf16.mxu0 %v6040
        %6262 = vmatmul.mubr.bf16.gmra.mxu0 %v6039
        %v6263 = vpop.f32.mrf.mxu0
        %v6264 = vadd.f32 %v5676, %v6263
        %v6265 = vpop.f32.mrf.mxu0
        %v6266 = vpop.f32.mrf.mxu0
        %v6267 = vadd.f32 %v5681, %v6266
        %v6268 = vpop.f32.mrf.mxu0
        %6269 = vmatprep.mubr.bf16.mxu0 %v6045
        %6270 = vmatmul.mubr.bf16.gmra.mxu0 %v6044
        %v6271 = vpop.f32.mrf.mxu0
        %v6272 = vadd.f32 %v5686, %v6271
        %v6273 = vpop.f32.mrf.mxu0
        %v6274 = vpop.f32.mrf.mxu0
        %v6275 = vadd.f32 %v5691, %v6274
        %v6276 = vpop.f32.mrf.mxu0
        %6277 = vmatprep.mubr.bf16.mxu0 %v6050
        %6278 = vmatmul.mubr.bf16.gmra.mxu0 %v6049
        %v6279 = vpop.f32.mrf.mxu0
        %v6280 = vadd.f32 %v5696, %v6279
        %v6281 = vpop.f32.mrf.mxu0
        %v6282 = vpop.f32.mrf.mxu0
        %v6283 = vadd.f32 %v5701, %v6282
        %v6284 = vpop.f32.mrf.mxu0
        %6285 = vmatprep.mubr.bf16.mxu0 %v6055
        %6286 = vmatmul.mubr.bf16.gmra.mxu0 %v6054
        %v6287 = vpop.f32.mrf.mxu0
        %v6288 = vadd.f32 %v5706, %v6287
        %v6289 = vpop.f32.mrf.mxu0
        %v6290 = vpop.f32.mrf.mxu0
        %v6291 = vadd.f32 %v5711, %v6290
        %v6292 = vpop.f32.mrf.mxu0
        %6293 = vmatprep.mubr.bf16.mxu0 %v6060
        %6294 = vmatmul.mubr.bf16.gmra.mxu0 %v6059
        %v6295 = vpop.f32.mrf.mxu0
        %v6296 = vadd.f32 %v5716, %v6295
        %v6297 = vpop.f32.mrf.mxu0
        %v6298 = vpop.f32.mrf.mxu0
        %v6299 = vadd.f32 %v5721, %v6298
        %v6300 = vpop.f32.mrf.mxu0
        %6301 = vmatprep.mubr.bf16.mxu0 %v6065
        %6302 = vmatmul.mubr.bf16.gmra.mxu0 %v6064
        %v6303 = vpop.f32.mrf.mxu0
        %v6304 = vadd.f32 %v5726, %v6303
        %v6305 = vpop.f32.mrf.mxu0
        %v6306 = vpop.f32.mrf.mxu0
        %v6307 = vadd.f32 %v5731, %v6306
        %v6308 = vpop.f32.mrf.mxu0
        %6309 = vdwg.mxu0
        %6310 = vmatprep.subr.bf16.mxu0 0
        %6311 = vmatpush1.bf16.msra.mxu0 %v5428
        %6312 = vmatprep.subr.bf16.mxu0 0
        %6313 = vmatpush1.bf16.msra.mxu0 %v5427
        %6314 = vmatprep.subr.bf16.mxu0 0
        %6315 = vmatpush1.bf16.msra.mxu0 %v5426
        %6316 = vmatprep.subr.bf16.mxu0 0
        %6317 = vmatpush1.bf16.msra.mxu0 %v5425
        %6318 = vmatprep.subr.bf16.mxu0 0
        %6319 = vmatpush1.bf16.msra.mxu0 %v5424
        %6320 = vmatprep.subr.bf16.mxu0 0
        %6321 = vmatpush1.bf16.msra.mxu0 %v5423
        %6322 = vmatprep.subr.bf16.mxu0 0
        %6323 = vmatpush1.bf16.msra.mxu0 %v5422
        %6324 = vmatprep.subr.bf16.mxu0 0
        %6325 = vmatpush1.bf16.msra.mxu0 %v5421
        %6326 = vmatprep.subr.bf16.mxu0 0
        %6327 = vmatpush2.bf16.msra.mxu0 %v5436
        %6328 = vmatprep.subr.bf16.mxu0 0
        %6329 = vmatpush2.bf16.msra.mxu0 %v5435
        %6330 = vmatprep.subr.bf16.mxu0 0
        %6331 = vmatpush2.bf16.msra.mxu0 %v5434
        %6332 = vmatprep.subr.bf16.mxu0 0
        %6333 = vmatpush2.bf16.msra.mxu0 %v5433
        %6334 = vmatprep.subr.bf16.mxu0 0
        %6335 = vmatpush2.bf16.msra.mxu0 %v5432
        %6336 = vmatprep.subr.bf16.mxu0 0
        %6337 = vmatpush2.bf16.msra.mxu0 %v5431
        %6338 = vmatprep.subr.bf16.mxu0 0
        %6339 = vmatpush2.bf16.msra.mxu0 %v5430
        %6340 = vmatprep.subr.bf16.mxu0 0
        %6341 = vmatpush2.bf16.msra.mxu0 %v5429
        %6342 = vmatprep.mubr.bf16.mxu0 %v5992
        %6343 = vmatmul.mubr.bf16.gmra.mxu0 %v5991
        %v6344 = vpop.f32.mrf.mxu0
        %v6345 = vadd.f32 %v6184, %v6344
        %v6346 = vpop.f32.mrf.mxu0
        %v6347 = vpop.f32.mrf.mxu0
        %v6348 = vadd.f32 %v6187, %v6347
        %v6349 = vpop.f32.mrf.mxu0
        %6350 = vmatprep.mubr.bf16.mxu0 %v5997
        %6351 = vmatmul.mubr.bf16.gmra.mxu0 %v5996
        %v6352 = vpop.f32.mrf.mxu0
        %v6353 = vadd.f32 %v6192, %v6352
        %v6354 = vpop.f32.mrf.mxu0
        %v6355 = vpop.f32.mrf.mxu0
        %v6356 = vadd.f32 %v6195, %v6355
        %v6357 = vpop.f32.mrf.mxu0
        %6358 = vmatprep.mubr.bf16.mxu0 %v6002
        %6359 = vmatmul.mubr.bf16.gmra.mxu0 %v6001
        %v6360 = vpop.f32.mrf.mxu0
        %v6361 = vadd.f32 %v6200, %v6360
        %v6362 = vpop.f32.mrf.mxu0
        %v6363 = vpop.f32.mrf.mxu0
        %v6364 = vadd.f32 %v6203, %v6363
        %v6365 = vpop.f32.mrf.mxu0
        %6366 = vmatprep.mubr.bf16.mxu0 %v6007
        %6367 = vmatmul.mubr.bf16.gmra.mxu0 %v6006
        %v6368 = vpop.f32.mrf.mxu0
        %v6369 = vadd.f32 %v6208, %v6368
        %v6370 = vpop.f32.mrf.mxu0
        %v6371 = vpop.f32.mrf.mxu0
        %v6372 = vadd.f32 %v6211, %v6371
        %v6373 = vpop.f32.mrf.mxu0
        %6374 = vmatprep.mubr.bf16.mxu0 %v6012
        %6375 = vmatmul.mubr.bf16.gmra.mxu0 %v6011
        %v6376 = vpop.f32.mrf.mxu0
        %v6377 = vadd.f32 %v6216, %v6376
        %v6378 = vpop.f32.mrf.mxu0
        %v6379 = vpop.f32.mrf.mxu0
        %v6380 = vadd.f32 %v6219, %v6379
        %v6381 = vpop.f32.mrf.mxu0
        %6382 = vmatprep.mubr.bf16.mxu0 %v6017
        %6383 = vmatmul.mubr.bf16.gmra.mxu0 %v6016
        %v6384 = vpop.f32.mrf.mxu0
        %v6385 = vadd.f32 %v6224, %v6384
        %v6386 = vpop.f32.mrf.mxu0
        %v6387 = vpop.f32.mrf.mxu0
        %v6388 = vadd.f32 %v6227, %v6387
        %v6389 = vpop.f32.mrf.mxu0
        %6390 = vmatprep.mubr.bf16.mxu0 %v6022
        %6391 = vmatmul.mubr.bf16.gmra.mxu0 %v6021
        %v6392 = vpop.f32.mrf.mxu0
        %v6393 = vadd.f32 %v6232, %v6392
        %v6394 = vpop.f32.mrf.mxu0
        %v6395 = vpop.f32.mrf.mxu0
        %v6396 = vadd.f32 %v6235, %v6395
        %v6397 = vpop.f32.mrf.mxu0
        %6398 = vmatprep.mubr.bf16.mxu0 %v6027
        %6399 = vmatmul.mubr.bf16.gmra.mxu0 %v6026
        %v6400 = vpop.f32.mrf.mxu0
        %v6401 = vadd.f32 %v6240, %v6400
        %v6402 = vpop.f32.mrf.mxu0
        %v6403 = vpop.f32.mrf.mxu0
        %v6404 = vadd.f32 %v6243, %v6403
        %v6405 = vpop.f32.mrf.mxu0
        %6406 = vmatprep.mubr.bf16.mxu0 %v6032
        %6407 = vmatmul.mubr.bf16.gmra.mxu0 %v6031
        %v6408 = vpop.f32.mrf.mxu0
        %v6409 = vadd.f32 %v6248, %v6408
        %v6410 = vpop.f32.mrf.mxu0
        %v6411 = vpop.f32.mrf.mxu0
        %v6412 = vadd.f32 %v6251, %v6411
        %v6413 = vpop.f32.mrf.mxu0
        %6414 = vmatprep.mubr.bf16.mxu0 %v6037
        %6415 = vmatmul.mubr.bf16.gmra.mxu0 %v6036
        %v6416 = vpop.f32.mrf.mxu0
        %v6417 = vadd.f32 %v6256, %v6416
        %v6418 = vpop.f32.mrf.mxu0
        %v6419 = vpop.f32.mrf.mxu0
        %v6420 = vadd.f32 %v6259, %v6419
        %v6421 = vpop.f32.mrf.mxu0
        %6422 = vmatprep.mubr.bf16.mxu0 %v6042
        %6423 = vmatmul.mubr.bf16.gmra.mxu0 %v6041
        %v6424 = vpop.f32.mrf.mxu0
        %v6425 = vadd.f32 %v6264, %v6424
        %v6426 = vpop.f32.mrf.mxu0
        %v6427 = vpop.f32.mrf.mxu0
        %v6428 = vadd.f32 %v6267, %v6427
        %v6429 = vpop.f32.mrf.mxu0
        %6430 = vmatprep.mubr.bf16.mxu0 %v6047
        %6431 = vmatmul.mubr.bf16.gmra.mxu0 %v6046
        %v6432 = vpop.f32.mrf.mxu0
        %v6433 = vadd.f32 %v6272, %v6432
        %v6434 = vpop.f32.mrf.mxu0
        %v6435 = vpop.f32.mrf.mxu0
        %v6436 = vadd.f32 %v6275, %v6435
        %v6437 = vpop.f32.mrf.mxu0
        %6438 = vmatprep.mubr.bf16.mxu0 %v6052
        %6439 = vmatmul.mubr.bf16.gmra.mxu0 %v6051
        %v6440 = vpop.f32.mrf.mxu0
        %v6441 = vadd.f32 %v6280, %v6440
        %v6442 = vpop.f32.mrf.mxu0
        %v6443 = vpop.f32.mrf.mxu0
        %v6444 = vadd.f32 %v6283, %v6443
        %v6445 = vpop.f32.mrf.mxu0
        %6446 = vmatprep.mubr.bf16.mxu0 %v6057
        %6447 = vmatmul.mubr.bf16.gmra.mxu0 %v6056
        %v6448 = vpop.f32.mrf.mxu0
        %v6449 = vadd.f32 %v6288, %v6448
        %v6450 = vpop.f32.mrf.mxu0
        %v6451 = vpop.f32.mrf.mxu0
        %v6452 = vadd.f32 %v6291, %v6451
        %v6453 = vpop.f32.mrf.mxu0
        %6454 = vmatprep.mubr.bf16.mxu0 %v6062
        %6455 = vmatmul.mubr.bf16.gmra.mxu0 %v6061
        %v6456 = vpop.f32.mrf.mxu0
        %v6457 = vadd.f32 %v6296, %v6456
        %v6458 = vpop.f32.mrf.mxu0
        %v6459 = vpop.f32.mrf.mxu0
        %v6460 = vadd.f32 %v6299, %v6459
        %v6461 = vpop.f32.mrf.mxu0
        %6462 = vmatprep.mubr.bf16.mxu0 %v6067
        %6463 = vmatmul.mubr.bf16.gmra.mxu0 %v6066
        %v6464 = vpop.f32.mrf.mxu0
        %v6465 = vadd.f32 %v6304, %v6464
        %v6466 = vpop.f32.mrf.mxu0
        %v6467 = vpop.f32.mrf.mxu0
        %v6468 = vadd.f32 %v6307, %v6467
        %v6469 = vpop.f32.mrf.mxu0
        %6470 = vdwg.mxu0
        %6471 = vmatprep.subr.bf16.mxu0 0
        %6472 = vmatpush1.bf16.msra.mxu0 %v5444
        %6473 = vmatprep.subr.bf16.mxu0 0
        %6474 = vmatpush1.bf16.msra.mxu0 %v5443
        %6475 = vmatprep.subr.bf16.mxu0 0
        %6476 = vmatpush1.bf16.msra.mxu0 %v5442
        %6477 = vmatprep.subr.bf16.mxu0 0
        %6478 = vmatpush1.bf16.msra.mxu0 %v5441
        %6479 = vmatprep.subr.bf16.mxu0 0
        %6480 = vmatpush1.bf16.msra.mxu0 %v5440
        %6481 = vmatprep.subr.bf16.mxu0 0
        %6482 = vmatpush1.bf16.msra.mxu0 %v5439
        %6483 = vmatprep.subr.bf16.mxu0 0
        %6484 = vmatpush1.bf16.msra.mxu0 %v5438
        %6485 = vmatprep.subr.bf16.mxu0 0
        %6486 = vmatpush1.bf16.msra.mxu0 %v5437
        %6487 = vmatprep.subr.bf16.mxu0 0
        %6488 = vmatpush2.bf16.msra.mxu0 0
        %6489 = vmatprep.subr.bf16.mxu0 0
        %6490 = vmatpush2.bf16.msra.mxu0 0
        %6491 = vmatprep.subr.bf16.mxu0 0
        %6492 = vmatpush2.bf16.msra.mxu0 0
        %6493 = vmatprep.subr.bf16.mxu0 0
        %6494 = vmatpush2.bf16.msra.mxu0 0
        %6495 = vmatprep.subr.bf16.mxu0 0
        %6496 = vmatpush2.bf16.msra.mxu0 0
        %6497 = vmatprep.subr.bf16.mxu0 0
        %6498 = vmatpush2.bf16.msra.mxu0 0
        %6499 = vmatprep.subr.bf16.mxu0 0
        %6500 = vmatpush2.bf16.msra.mxu0 0
        %6501 = vmatprep.subr.bf16.mxu0 0
        %6502 = vmatpush2.bf16.msra.mxu0 0
        %6503 = vmatprep.mubr.bf16.mxu0 0
        %6504 = vmatmul.mubr.bf16.gmra.mxu0 %v5993
        %v6505 = vpop.f32.mrf.mxu0
        %v6506 = vadd.f32 %v6345, %v6505
        %v6507 = vpop.f32.mrf.mxu0
        %v6508 = vpop.f32.mrf.mxu0
        %v6509 = vadd.f32 %v6348, %v6508
        %v6510 = vpop.f32.mrf.mxu0
        %6511 = vmatprep.mubr.bf16.mxu0 0
        %6512 = vmatmul.mubr.bf16.gmra.mxu0 %v5998
        %v6513 = vpop.f32.mrf.mxu0
        %v6514 = vadd.f32 %v6353, %v6513
        %v6515 = vpop.f32.mrf.mxu0
        %v6516 = vpop.f32.mrf.mxu0
        %v6517 = vadd.f32 %v6356, %v6516
        %v6518 = vpop.f32.mrf.mxu0
        %6519 = vmatprep.mubr.bf16.mxu0 0
        %6520 = vmatmul.mubr.bf16.gmra.mxu0 %v6003
        %v6521 = vpop.f32.mrf.mxu0
        %v6522 = vadd.f32 %v6361, %v6521
        %v6523 = vpop.f32.mrf.mxu0
        %v6524 = vpop.f32.mrf.mxu0
        %v6525 = vadd.f32 %v6364, %v6524
        %v6526 = vpop.f32.mrf.mxu0
        %6527 = vmatprep.mubr.bf16.mxu0 0
        %6528 = vmatmul.mubr.bf16.gmra.mxu0 %v6008
        %v6529 = vpop.f32.mrf.mxu0
        %v6530 = vadd.f32 %v6369, %v6529
        %v6531 = vpop.f32.mrf.mxu0
        %v6532 = vpop.f32.mrf.mxu0
        %v6533 = vadd.f32 %v6372, %v6532
        %v6534 = vpop.f32.mrf.mxu0
        %6535 = vmatprep.mubr.bf16.mxu0 0
        %6536 = vmatmul.mubr.bf16.gmra.mxu0 %v6013
        %v6537 = vpop.f32.mrf.mxu0
        %v6538 = vadd.f32 %v6377, %v6537
        %v6539 = vpop.f32.mrf.mxu0
        %v6540 = vpop.f32.mrf.mxu0
        %v6541 = vadd.f32 %v6380, %v6540
        %v6542 = vpop.f32.mrf.mxu0
        %6543 = vmatprep.mubr.bf16.mxu0 0
        %6544 = vmatmul.mubr.bf16.gmra.mxu0 %v6018
        %v6545 = vpop.f32.mrf.mxu0
        %v6546 = vadd.f32 %v6385, %v6545
        %v6547 = vpop.f32.mrf.mxu0
        %v6548 = vpop.f32.mrf.mxu0
        %v6549 = vadd.f32 %v6388, %v6548
        %v6550 = vpop.f32.mrf.mxu0
        %6551 = vmatprep.mubr.bf16.mxu0 0
        %6552 = vmatmul.mubr.bf16.gmra.mxu0 %v6023
        %v6553 = vpop.f32.mrf.mxu0
        %v6554 = vadd.f32 %v6393, %v6553
        %v6555 = vpop.f32.mrf.mxu0
        %v6556 = vpop.f32.mrf.mxu0
        %v6557 = vadd.f32 %v6396, %v6556
        %v6558 = vpop.f32.mrf.mxu0
        %6559 = vmatprep.mubr.bf16.mxu0 0
        %6560 = vmatmul.mubr.bf16.gmra.mxu0 %v6028
        %v6561 = vpop.f32.mrf.mxu0
        %v6562 = vadd.f32 %v6401, %v6561
        %v6563 = vpop.f32.mrf.mxu0
        %v6564 = vpop.f32.mrf.mxu0
        %v6565 = vadd.f32 %v6404, %v6564
        %v6566 = vpop.f32.mrf.mxu0
        %6567 = vmatprep.mubr.bf16.mxu0 0
        %6568 = vmatmul.mubr.bf16.gmra.mxu0 %v6033
        %v6569 = vpop.f32.mrf.mxu0
        %v6570 = vadd.f32 %v6409, %v6569
        %v6571 = vpop.f32.mrf.mxu0
        %v6572 = vpop.f32.mrf.mxu0
        %v6573 = vadd.f32 %v6412, %v6572
        %v6574 = vpop.f32.mrf.mxu0
        %6575 = vmatprep.mubr.bf16.mxu0 0
        %6576 = vmatmul.mubr.bf16.gmra.mxu0 %v6038
        %v6577 = vpop.f32.mrf.mxu0
        %v6578 = vadd.f32 %v6417, %v6577
        %v6579 = vpop.f32.mrf.mxu0
        %v6580 = vpop.f32.mrf.mxu0
        %v6581 = vadd.f32 %v6420, %v6580
        %v6582 = vpop.f32.mrf.mxu0
        %6583 = vmatprep.mubr.bf16.mxu0 0
        %6584 = vmatmul.mubr.bf16.gmra.mxu0 %v6043
        %v6585 = vpop.f32.mrf.mxu0
        %v6586 = vadd.f32 %v6425, %v6585
        %v6587 = vpop.f32.mrf.mxu0
        %v6588 = vpop.f32.mrf.mxu0
        %v6589 = vadd.f32 %v6428, %v6588
        %v6590 = vpop.f32.mrf.mxu0
        %6591 = vmatprep.mubr.bf16.mxu0 0
        %6592 = vmatmul.mubr.bf16.gmra.mxu0 %v6048
        %v6593 = vpop.f32.mrf.mxu0
        %v6594 = vadd.f32 %v6433, %v6593
        %v6595 = vpop.f32.mrf.mxu0
        %v6596 = vpop.f32.mrf.mxu0
        %v6597 = vadd.f32 %v6436, %v6596
        %v6598 = vpop.f32.mrf.mxu0
        %6599 = vmatprep.mubr.bf16.mxu0 0
        %6600 = vmatmul.mubr.bf16.gmra.mxu0 %v6053
        %v6601 = vpop.f32.mrf.mxu0
        %v6602 = vadd.f32 %v6441, %v6601
        %v6603 = vpop.f32.mrf.mxu0
        %v6604 = vpop.f32.mrf.mxu0
        %v6605 = vadd.f32 %v6444, %v6604
        %v6606 = vpop.f32.mrf.mxu0
        %6607 = vmatprep.mubr.bf16.mxu0 0
        %6608 = vmatmul.mubr.bf16.gmra.mxu0 %v6058
        %v6609 = vpop.f32.mrf.mxu0
        %v6610 = vadd.f32 %v6449, %v6609
        %v6611 = vpop.f32.mrf.mxu0
        %v6612 = vpop.f32.mrf.mxu0
        %v6613 = vadd.f32 %v6452, %v6612
        %v6614 = vpop.f32.mrf.mxu0
        %6615 = vmatprep.mubr.bf16.mxu0 0
        %6616 = vmatmul.mubr.bf16.gmra.mxu0 %v6063
        %v6617 = vpop.f32.mrf.mxu0
        %v6618 = vadd.f32 %v6457, %v6617
        %v6619 = vpop.f32.mrf.mxu0
        %v6620 = vpop.f32.mrf.mxu0
        %v6621 = vadd.f32 %v6460, %v6620
        %v6622 = vpop.f32.mrf.mxu0
        %6623 = vmatprep.mubr.bf16.mxu0 0
        %6624 = vmatmul.mubr.bf16.gmra.mxu0 %v6068
        %v6625 = vpop.f32.mrf.mxu0
        %v6626 = vadd.f32 %v6465, %v6625
        %v6627 = vpop.f32.mrf.mxu0
        %v6628 = vpop.f32.mrf.mxu0
        %v6629 = vadd.f32 %v6468, %v6628
        %v6630 = vpop.f32.mrf.mxu0
        %6631 = vdwg.mxu0
        %v6632 = vmul.f32 %v4142, %v6506
        %v6633 = vmul.f32 %v4144, %v6509
        %v6634 = vmul.f32 %v4146, %v6514
        %v6635 = vmul.f32 %v4148, %v6517
        %v6636 = vmul.f32 %v4150, %v6522
        %v6637 = vmul.f32 %v4152, %v6525
        %v6638 = vmul.f32 %v4154, %v6530
        %v6639 = vmul.f32 %v4156, %v6533
        %v6640 = vmul.f32 %v4158, %v6538
        %v6641 = vmul.f32 %v4160, %v6541
        %v6642 = vmul.f32 %v4162, %v6546
        %v6643 = vmul.f32 %v4164, %v6549
        %v6644 = vmul.f32 %v4166, %v6554
        %v6645 = vmul.f32 %v4168, %v6557
        %v6646 = vmul.f32 %v4170, %v6562
        %v6647 = vmul.f32 %v4172, %v6565
        %v6648 = vmul.f32 %v4174, %v6570
        %v6649 = vmul.f32 %v4176, %v6573
        %v6650 = vmul.f32 %v4178, %v6578
        %v6651 = vmul.f32 %v4180, %v6581
        %v6652 = vmul.f32 %v4182, %v6586
        %v6653 = vmul.f32 %v4184, %v6589
        %v6654 = vmul.f32 %v4186, %v6594
        %v6655 = vmul.f32 %v4188, %v6597
        %v6656 = vmul.f32 %v4190, %v6602
        %v6657 = vmul.f32 %v4192, %v6605
        %v6658 = vmul.f32 %v4194, %v6610
        %v6659 = vmul.f32 %v4196, %v6613
        %v6660 = vmul.f32 %v4198, %v6618
        %v6661 = vmul.f32 %v4200, %v6621
        %v6662 = vmul.f32 %v4202, %v6626
        %v6663 = vmul.f32 %v4204, %v6629
        %6664 = vst [vmem:[%s455] sm:$0xff] %v6632
        %6665 = vst [vmem:[%s455 + $0x8] sm:$0xff] %v6633
        %6666 = vst [vmem:[%s455 + $0x10] sm:$0xff] %v6634
        %6667 = vst [vmem:[%s455 + $0x18] sm:$0xff] %v6635
        %6668 = vst [vmem:[%s455 + $0x20] sm:$0xff] %v6636
        %6669 = vst [vmem:[%s455 + $0x28] sm:$0xff] %v6637
        %6670 = vst [vmem:[%s455 + $0x30] sm:$0xff] %v6638
        %6671 = vst [vmem:[%s455 + $0x38] sm:$0xff] %v6639
        %6672 = vst [vmem:[%s455 + $0x40] sm:$0xff] %v6640
        %6673 = vst [vmem:[%s455 + $0x48] sm:$0xff] %v6641
        %6674 = vst [vmem:[%s455 + $0x50] sm:$0xff] %v6642
        %6675 = vst [vmem:[%s455 + $0x58] sm:$0xff] %v6643
        %6676 = vst [vmem:[%s455 + $0x60] sm:$0xff] %v6644
        %6677 = vst [vmem:[%s455 + $0x68] sm:$0xff] %v6645
        %6678 = vst [vmem:[%s455 + $0x70] sm:$0xff] %v6646
        %6679 = vst [vmem:[%s455 + $0x78] sm:$0xff] %v6647
        %6680 = vst [vmem:[%s455 + $0x80] sm:$0xff] %v6648
        %6681 = vst [vmem:[%s455 + $0x88] sm:$0xff] %v6649
        %6682 = vst [vmem:[%s455 + $0x90] sm:$0xff] %v6650
        %6683 = vst [vmem:[%s455 + $0x98] sm:$0xff] %v6651
        %6684 = vst [vmem:[%s455 + $0xa0] sm:$0xff] %v6652
        %6685 = vst [vmem:[%s455 + $0xa8] sm:$0xff] %v6653
        %6686 = vst [vmem:[%s455 + $0xb0] sm:$0xff] %v6654
        %6687 = vst [vmem:[%s455 + $0xb8] sm:$0xff] %v6655
        %6688 = vst [vmem:[%s455 + $0xc0] sm:$0xff] %v6656
        %6689 = vst [vmem:[%s455 + $0xc8] sm:$0xff] %v6657
        %6690 = vst [vmem:[%s455 + $0xd0] sm:$0xff] %v6658
        %6691 = vst [vmem:[%s455 + $0xd8] sm:$0xff] %v6659
        %6692 = vst [vmem:[%s455 + $0xe0] sm:$0xff] %v6660
        %6693 = vst [vmem:[%s455 + $0xe8] sm:$0xff] %v6661
        %6694 = vst [vmem:[%s455 + $0xf0] sm:$0xff] %v6662
        %6695 = vst [vmem:[%s455 + $0xf8] sm:$0xff] %v6663
        %s6696 = sand.u32 %s329, 1
        %s6697 = scalar_lea.sflag [#allocation3], %s6696
        %s6698 = sand.u32 %s329, 1
        %s6699 = smul.addr %s6698, 256
        %s6700 = scalar_lea.vmem [#allocation2], %s6699
        // Predicated region
        $region73: #{tpu_custom_call.1} parent=71 // pred_check
          %p6701 = pneg %p339
        $region74: #{tpu_custom_call.1} parent=71 // pred_check_branch
          %6703 = sbr.rel (%p6701) target = $region76
        $region75: #{tpu_custom_call.1} parent=71 // pred_region
          %s6705 = ssub.s32 4096, 4096
          %6706 = vsyncadd %s6697, %s6705
          %s6707 = smul.addr %s31, 32
          %s6708 = sadd.s32 %s32, %s6707
          %s6709 = smul.addr %s6708, 128
          %s6710 = scalar_lea.hbm %s13, %s6709
          %s6711 = sshll.u32 %s6700, 4
          %s6712 = int_to_ptr.vmem [resolvable:$true] %s6711
          %6717 = dma.vmem_to_hbm [thread:$0]  %s6712, 4096, %s6710, %s6697, 128, 128, 8
        $region76: #{tpu_custom_call.1} parent=71 // pred_fallthru
          _
      $region72: #{tpu_custom_call.1} parent=5 // pred_fallthru
        _
      %p6718 = scmp.le.s32.totalorder 2, %s22
      // Predicated region
      $region77: #{tpu_custom_call.1} parent=5 // pred_check
        %p6719 = pneg %p6718
      $region78: #{tpu_custom_call.1} parent=5 // pred_check_branch
        %6721 = sbr.rel (%p6719) target = $region80
      $region79: #{tpu_custom_call.1} parent=5 // pred_region
        %s6722 = ssub.s32 %s22, 2
        // Predicated region
        $region81: #{tpu_custom_call.1} parent=79 // pred_check
          %p6723 = pneg %p345
        $region82: #{tpu_custom_call.1} parent=79 // pred_check_branch
          %6725 = sbr.rel (%p6723) target = $region84
        $region83: #{tpu_custom_call.1} parent=79 // pred_region
          %s6726 = sand.u32 %s330, 1
          %s6727 = scalar_lea.sflag [#allocation3], %s6726
          %s6728 = sand.u32 %s330, 1
          %s6729 = smul.addr %s6728, 256
          %s6730 = scalar_lea.vmem [#allocation2], %s6729
          %6731 = dma.done %s6727, 4096
        $region84: #{tpu_custom_call.1} parent=79 // pred_fallthru
          _
      $region80: #{tpu_custom_call.1} parent=5 // pred_fallthru
        _
    $region6: #{tpu_custom_call.1} parent=1 // loop_footer
      %s26 = sadd.s32 1, %s22
    $region7: #{tpu_custom_call.1} parent=1 // loop_footer_branch
      %21 = sbr.rel target = $region3
    $region8: #{tpu_custom_call.1} parent=1 // loop_exit
      _
    %6732 = vsyncpa [#allocation3], 1
    %s6733 = scalar_lea.sflag [#allocation3], 1
    %6734 = vsyncpa %s6733, 1

</llo_original>
